<compile_context>
chip_gen: v7x
topology: tpu7x:2x2x1
jax: 0.10.0
libtpu: 0.0.40
codegen_flags: <defaults>
</compile_context>

<pallas_src>
import functools

import jax
import jax.numpy as jnp
import numpy as np
from jax.experimental import pallas as pl
from jax.experimental.pallas import tpu as pltpu


def _self_attention_kernel(x_ref, wq_ref, wk_ref, wv_ref, wproj_ref, bproj_ref,
                           o_ref, *, num_heads, tb, seq, scale):
    """One grid step: TB batch elements flattened to (TB*N, C) rows."""
    m, c = x_ref.shape
    hd = c // num_heads

    x = x_ref[...]   # keep input dtype for the MXU operands (bf16-friendly)

    # QKV projections: three lane-aligned (M, C) @ (C, C) MXU matmuls with f32
    # accumulation.  Scale is folded into q (touches M*C elems, not G*N*N).
    q = jnp.dot(x, wq_ref[...], preferred_element_type=jnp.float32) * scale
    k = jnp.dot(x, wk_ref[...], preferred_element_type=jnp.float32)
    v = jnp.dot(x, wv_ref[...], preferred_element_type=jnp.float32)

    # Head split: static lane slices stacked onto a leading head axis; the row
    # dim (TB*N) is then split into (TB, N) (layout-trivial when N % 8 == 0)
    # and merged with heads into one batch axis G = H*TB.
    def to_heads(t):
        t = jnp.stack([t[:, h * hd:(h + 1) * hd] for h in range(num_heads)],
                      axis=0)                       # (H, TB*N, hd)
        return t.reshape(num_heads * tb, seq, hd)   # (H*TB, N, hd)

    qh = to_heads(q)
    kh = to_heads(k)
    vh = to_heads(v)

    # Batched attention over G heads: one scores matmul (contracting hd
    # directly, no explicit k.T), one softmax, one context matmul.
    s = jnp.einsum('gnd,gmd->gnm', qh, kh,
                   preferred_element_type=jnp.float32)        # (G, N, N)
    s = s - jnp.max(s, axis=-1, keepdims=True)                # stable softmax
    p = jnp.exp(s)
    denom = jnp.sum(p, axis=-1, keepdims=True)
    p = p * pl.reciprocal(denom, approx=True)                 # EUP reciprocal
    # attn_drop: dropout_rate == 0.0 -> identity.
    ctx = jnp.einsum('gnm,gmd->gnd', p.astype(vh.dtype), vh,
                     preferred_element_type=jnp.float32)      # (G, N, hd)

    # Head merge (inverse of to_heads): (H*TB, N, hd) -> (TB*N, C).
    ctx = ctx.reshape(num_heads, tb * seq, hd)
    ctx = jnp.concatenate([ctx[h] for h in range(num_heads)], axis=-1)

    # Output projection + bias.
    out = jnp.dot(ctx, wproj_ref[...], preferred_element_type=jnp.float32)
    out = out + bproj_ref[...].astype(jnp.float32)
    # proj_drop: dropout_rate == 0.0 -> identity.

    # NOTE: for production channel counts (C a multiple of 128) this store is
    # lane-dense / unmasked; at the toy C=32 it is a masked vst.
    o_ref[...] = out.astype(o_ref.dtype)


def _pick_tb(b, n, target_rows=256):
    """Batch elements per grid step: aim for ~target_rows MXU rows per step."""
    tb = max(1, min(b, max(1, target_rows // max(n, 1))))
    while b % tb:
        tb -= 1
    # Prefer >=2 grid steps (v7x megacore) when tiles would stay >=128 rows.
    half = tb // 2
    if b // tb < 2 and half >= 1 and half * n >= 128 and b % half == 0:
        tb = half
    return tb


def self_attention(x, wqkv, wproj, bproj, *, num_heads):
    """x: (B, N, C); wqkv: (C, 3C) (i.e. torch weight.T); wproj: (C, C); bproj: (1, C)."""
    b, n, c = x.shape
    hd = c // num_heads
    scale = hd ** (-0.5)
    tb = _pick_tb(b, n)
    grid = (b // tb,)

    # Pre-split the packed qkv weight (column order matches the torch
    # reshape (3, H, hd)): avoids sub-128-lane slices of a (.., 3C) result.
    wq = wqkv[:, 0 * c:1 * c]
    wk = wqkv[:, 1 * c:2 * c]
    wv = wqkv[:, 2 * c:3 * c]

    x2 = x.reshape(b * n, c)   # rows are batch-major: row = batch*N + n

    kernel = functools.partial(_self_attention_kernel, num_heads=num_heads,
                               tb=tb, seq=n, scale=scale)

    itemsize = x.dtype.itemsize
    flops = (2 * b * n * c * (3 * c)                 # qkv projections
             + 2 * b * num_heads * n * n * hd * 2    # scores + context
             + 2 * b * n * c * c)                    # output projection
    cost = pl.CostEstimate(
        flops=flops,
        transcendentals=b * num_heads * n * n,       # exp in softmax
        bytes_accessed=(2 * b * n * c + 4 * c * c + c) * itemsize)

    out2 = pl.pallas_call(
        kernel,
        out_shape=jax.ShapeDtypeStruct((b * n, c), x.dtype),
        grid_spec=pltpu.PrefetchScalarGridSpec(
            num_scalar_prefetch=0,
            grid=grid,
            in_specs=[
                pl.BlockSpec((tb * n, c), lambda i: (i, 0)),   # x row slab
                pl.BlockSpec((c, c), lambda i: (0, 0)),        # wq (full)
                pl.BlockSpec((c, c), lambda i: (0, 0)),        # wk (full)
                pl.BlockSpec((c, c), lambda i: (0, 0)),        # wv (full)
                pl.BlockSpec((c, c), lambda i: (0, 0)),        # wproj (full)
                pl.BlockSpec((1, c), lambda i: (0, 0)),        # bproj (full)
            ],
            out_specs=pl.BlockSpec((tb * n, c), lambda i: (i, 0)),
        ),
        compiler_params=pltpu.CompilerParams(
            dimension_semantics=("parallel",)),
        cost_estimate=cost,
    )(x2, wq, wk, wv, wproj, bproj)

    return out2.reshape(b, n, c)


def reference_self_attention(x, wqkv, wproj, bproj, *, num_heads):
    """Pure-JAX mirror of the PyTorch forward, for verification."""
    b, n, c = x.shape
    hd = c // num_heads
    scale = hd ** (-0.5)
    qkv = x @ wqkv                                            # (B, N, 3C)
    qkv = qkv.reshape(b, n, 3, num_heads, hd).transpose(2, 0, 3, 1, 4)
    q, k, v = qkv[0], qkv[1], qkv[2]                          # (B, H, N, hd)
    attn = (q @ jnp.swapaxes(k, -2, -1)) * scale              # (B, H, N, N)
    attn = jax.nn.softmax(attn, axis=-1)
    out = (attn @ v).transpose(0, 2, 1, 3).reshape(b, n, c)   # (B, N, C)
    return out @ wproj + bproj


if __name__ == "__main__":
    # Small shapes consistent with the module: dim=32, heads=8, seq=8, batch=2.
    B, N, C, HEADS = 2, 8, 32, 8

    key = jax.random.PRNGKey(0)
    kx, kq, kp, kb = jax.random.split(key, 4)

    x = jax.random.normal(kx, (B, N, C), dtype=jnp.float32)

    # Deterministic xavier-uniform-style init (stored as (in, out), i.e. W.T of
    # the PyTorch nn.Linear weight).
    lim_qkv = float(np.sqrt(6.0 / (C + 3 * C)))
    wqkv = jax.random.uniform(kq, (C, 3 * C), jnp.float32, -lim_qkv, lim_qkv)

    lim_proj = float(np.sqrt(6.0 / (C + C)))
    wproj = jax.random.uniform(kp, (C, C), jnp.float32, -lim_proj, lim_proj)

    lim_b = float(1.0 / np.sqrt(C))
    bproj = jax.random.uniform(kb, (1, C), jnp.float32, -lim_b, lim_b)

    out = self_attention(x, wqkv, wproj, bproj, num_heads=HEADS)
    out = jax.block_until_ready(out)

    ref = reference_self_attention(x, wqkv, wproj, bproj, num_heads=HEADS)
    # Tolerance accounts for the approximate EUP reciprocal in the softmax.
    np.testing.assert_allclose(np.asarray(out), np.asarray(ref),
                               rtol=2e-3, atol=2e-3)

    print("KERNEL_OK")
</pallas_src>

<mosaic_0001>
module attributes {stable_mosaic.version = 11 : i64} {
  func.func @_self_attention_kernel(%arg0: i32, %arg1: memref<16x32xf32, #tpu.memory_space<vmem>>, %arg2: memref<32x32xf32, #tpu.memory_space<vmem>>, %arg3: memref<32x32xf32, #tpu.memory_space<vmem>>, %arg4: memref<32x32xf32, #tpu.memory_space<vmem>>, %arg5: memref<32x32xf32, #tpu.memory_space<vmem>>, %arg6: memref<1x32xf32, #tpu.memory_space<vmem>>, %arg7: memref<16x32xf32, #tpu.memory_space<vmem>>) attributes {dimension_semantics = [#tpu.dimension_semantics<parallel>], iteration_bounds = array<i64: 1>, scalar_prefetch = 0 : i64, scratch_operands = 0 : i64, tpu.core_type = #tpu.core_type<tc>, window_params = [{transform_indices = @transform_0, window_bounds = array<i64: 16, 32>}, {pipeline_mode = #tpu.pipeline_mode<synchronous>, transform_indices = @transform_1, window_bounds = array<i64: 32, 32>}, {pipeline_mode = #tpu.pipeline_mode<synchronous>, transform_indices = @transform_2, window_bounds = array<i64: 32, 32>}, {pipeline_mode = #tpu.pipeline_mode<synchronous>, transform_indices = @transform_3, window_bounds = array<i64: 32, 32>}, {pipeline_mode = #tpu.pipeline_mode<synchronous>, transform_indices = @transform_4, window_bounds = array<i64: 32, 32>}, {pipeline_mode = #tpu.pipeline_mode<synchronous>, transform_indices = @transform_5, window_bounds = array<i64: 1, 32>}, {transform_indices = @transform_6, window_bounds = array<i64: 16, 32>}]} {
    %c0 = arith.constant 0 : index
    %c0_0 = arith.constant 0 : index
    %0 = vector.load %arg1[%c0, %c0_0] : memref<16x32xf32, #tpu.memory_space<vmem>>, vector<16x32xf32>
    %c0_1 = arith.constant 0 : index
    %c0_2 = arith.constant 0 : index
    %1 = vector.load %arg2[%c0_1, %c0_2] : memref<32x32xf32, #tpu.memory_space<vmem>>, vector<32x32xf32>
    %cst = arith.constant dense<0.000000e+00> : vector<16x32xf32>
    %2 = tpu.matmul %0, %1, %cst {dimension_numbers = #tpu.dot_dimension_numbers<[1], [0], [0], [1], [0, 0, 1, 1], [], []>} : vector<16x32xf32>, vector<32x32xf32>, vector<16x32xf32> -> vector<16x32xf32>
    %cst_3 = arith.constant 5.000000e-01 : f32
    %3 = vector.broadcast %cst_3 : f32 to vector<16x32xf32>
    %4 = arith.mulf %2, %3 : vector<16x32xf32>
    %c0_4 = arith.constant 0 : index
    %c0_5 = arith.constant 0 : index
    %5 = vector.load %arg3[%c0_4, %c0_5] : memref<32x32xf32, #tpu.memory_space<vmem>>, vector<32x32xf32>
    %cst_6 = arith.constant dense<0.000000e+00> : vector<16x32xf32>
    %6 = tpu.matmul %0, %5, %cst_6 {dimension_numbers = #tpu.dot_dimension_numbers<[1], [0], [0], [1], [0, 0, 1, 1], [], []>} : vector<16x32xf32>, vector<32x32xf32>, vector<16x32xf32> -> vector<16x32xf32>
    %c0_7 = arith.constant 0 : index
    %c0_8 = arith.constant 0 : index
    %7 = vector.load %arg4[%c0_7, %c0_8] : memref<32x32xf32, #tpu.memory_space<vmem>>, vector<32x32xf32>
    %cst_9 = arith.constant dense<0.000000e+00> : vector<16x32xf32>
    %8 = tpu.matmul %0, %7, %cst_9 {dimension_numbers = #tpu.dot_dimension_numbers<[1], [0], [0], [1], [0, 0, 1, 1], [], []>} : vector<16x32xf32>, vector<32x32xf32>, vector<16x32xf32> -> vector<16x32xf32>
    %9 = vector.extract_strided_slice %4 {offsets = [0, 0], sizes = [16, 4], strides = [1, 1]} : vector<16x32xf32> to vector<16x4xf32>
    %10 = vector.extract_strided_slice %4 {offsets = [0, 4], sizes = [16, 4], strides = [1, 1]} : vector<16x32xf32> to vector<16x4xf32>
    %11 = vector.extract_strided_slice %4 {offsets = [0, 8], sizes = [16, 4], strides = [1, 1]} : vector<16x32xf32> to vector<16x4xf32>
    %12 = vector.extract_strided_slice %4 {offsets = [0, 12], sizes = [16, 4], strides = [1, 1]} : vector<16x32xf32> to vector<16x4xf32>
    %13 = vector.extract_strided_slice %4 {offsets = [0, 16], sizes = [16, 4], strides = [1, 1]} : vector<16x32xf32> to vector<16x4xf32>
    %14 = vector.extract_strided_slice %4 {offsets = [0, 20], sizes = [16, 4], strides = [1, 1]} : vector<16x32xf32> to vector<16x4xf32>
    %15 = vector.extract_strided_slice %4 {offsets = [0, 24], sizes = [16, 4], strides = [1, 1]} : vector<16x32xf32> to vector<16x4xf32>
    %16 = vector.extract_strided_slice %4 {offsets = [0, 28], sizes = [16, 4], strides = [1, 1]} : vector<16x32xf32> to vector<16x4xf32>
    %17 = vector.shape_cast %9 : vector<16x4xf32> to vector<1x16x4xf32>
    %18 = vector.shape_cast %10 : vector<16x4xf32> to vector<1x16x4xf32>
    %19 = vector.shape_cast %11 : vector<16x4xf32> to vector<1x16x4xf32>
    %20 = vector.shape_cast %12 : vector<16x4xf32> to vector<1x16x4xf32>
    %21 = vector.shape_cast %13 : vector<16x4xf32> to vector<1x16x4xf32>
    %22 = vector.shape_cast %14 : vector<16x4xf32> to vector<1x16x4xf32>
    %23 = vector.shape_cast %15 : vector<16x4xf32> to vector<1x16x4xf32>
    %24 = vector.shape_cast %16 : vector<16x4xf32> to vector<1x16x4xf32>
    %25 = tpu.concatenate %17, %18, %19, %20, %21, %22, %23, %24 in 0 : vector<1x16x4xf32>, vector<1x16x4xf32>, vector<1x16x4xf32>, vector<1x16x4xf32>, vector<1x16x4xf32>, vector<1x16x4xf32>, vector<1x16x4xf32>, vector<1x16x4xf32> -> vector<8x16x4xf32>
    %26 = vector.shape_cast %25 : vector<8x16x4xf32> to vector<16x8x4xf32>
    %27 = vector.extract_strided_slice %6 {offsets = [0, 0], sizes = [16, 4], strides = [1, 1]} : vector<16x32xf32> to vector<16x4xf32>
    %28 = vector.extract_strided_slice %6 {offsets = [0, 4], sizes = [16, 4], strides = [1, 1]} : vector<16x32xf32> to vector<16x4xf32>
    %29 = vector.extract_strided_slice %6 {offsets = [0, 8], sizes = [16, 4], strides = [1, 1]} : vector<16x32xf32> to vector<16x4xf32>
    %30 = vector.extract_strided_slice %6 {offsets = [0, 12], sizes = [16, 4], strides = [1, 1]} : vector<16x32xf32> to vector<16x4xf32>
    %31 = vector.extract_strided_slice %6 {offsets = [0, 16], sizes = [16, 4], strides = [1, 1]} : vector<16x32xf32> to vector<16x4xf32>
    %32 = vector.extract_strided_slice %6 {offsets = [0, 20], sizes = [16, 4], strides = [1, 1]} : vector<16x32xf32> to vector<16x4xf32>
    %33 = vector.extract_strided_slice %6 {offsets = [0, 24], sizes = [16, 4], strides = [1, 1]} : vector<16x32xf32> to vector<16x4xf32>
    %34 = vector.extract_strided_slice %6 {offsets = [0, 28], sizes = [16, 4], strides = [1, 1]} : vector<16x32xf32> to vector<16x4xf32>
    %35 = vector.shape_cast %27 : vector<16x4xf32> to vector<1x16x4xf32>
    %36 = vector.shape_cast %28 : vector<16x4xf32> to vector<1x16x4xf32>
    %37 = vector.shape_cast %29 : vector<16x4xf32> to vector<1x16x4xf32>
    %38 = vector.shape_cast %30 : vector<16x4xf32> to vector<1x16x4xf32>
    %39 = vector.shape_cast %31 : vector<16x4xf32> to vector<1x16x4xf32>
    %40 = vector.shape_cast %32 : vector<16x4xf32> to vector<1x16x4xf32>
    %41 = vector.shape_cast %33 : vector<16x4xf32> to vector<1x16x4xf32>
    %42 = vector.shape_cast %34 : vector<16x4xf32> to vector<1x16x4xf32>
    %43 = tpu.concatenate %35, %36, %37, %38, %39, %40, %41, %42 in 0 : vector<1x16x4xf32>, vector<1x16x4xf32>, vector<1x16x4xf32>, vector<1x16x4xf32>, vector<1x16x4xf32>, vector<1x16x4xf32>, vector<1x16x4xf32>, vector<1x16x4xf32> -> vector<8x16x4xf32>
    %44 = vector.shape_cast %43 : vector<8x16x4xf32> to vector<16x8x4xf32>
    %45 = vector.extract_strided_slice %8 {offsets = [0, 0], sizes = [16, 4], strides = [1, 1]} : vector<16x32xf32> to vector<16x4xf32>
    %46 = vector.extract_strided_slice %8 {offsets = [0, 4], sizes = [16, 4], strides = [1, 1]} : vector<16x32xf32> to vector<16x4xf32>
    %47 = vector.extract_strided_slice %8 {offsets = [0, 8], sizes = [16, 4], strides = [1, 1]} : vector<16x32xf32> to vector<16x4xf32>
    %48 = vector.extract_strided_slice %8 {offsets = [0, 12], sizes = [16, 4], strides = [1, 1]} : vector<16x32xf32> to vector<16x4xf32>
    %49 = vector.extract_strided_slice %8 {offsets = [0, 16], sizes = [16, 4], strides = [1, 1]} : vector<16x32xf32> to vector<16x4xf32>
    %50 = vector.extract_strided_slice %8 {offsets = [0, 20], sizes = [16, 4], strides = [1, 1]} : vector<16x32xf32> to vector<16x4xf32>
    %51 = vector.extract_strided_slice %8 {offsets = [0, 24], sizes = [16, 4], strides = [1, 1]} : vector<16x32xf32> to vector<16x4xf32>
    %52 = vector.extract_strided_slice %8 {offsets = [0, 28], sizes = [16, 4], strides = [1, 1]} : vector<16x32xf32> to vector<16x4xf32>
    %53 = vector.shape_cast %45 : vector<16x4xf32> to vector<1x16x4xf32>
    %54 = vector.shape_cast %46 : vector<16x4xf32> to vector<1x16x4xf32>
    %55 = vector.shape_cast %47 : vector<16x4xf32> to vector<1x16x4xf32>
    %56 = vector.shape_cast %48 : vector<16x4xf32> to vector<1x16x4xf32>
    %57 = vector.shape_cast %49 : vector<16x4xf32> to vector<1x16x4xf32>
    %58 = vector.shape_cast %50 : vector<16x4xf32> to vector<1x16x4xf32>
    %59 = vector.shape_cast %51 : vector<16x4xf32> to vector<1x16x4xf32>
    %60 = vector.shape_cast %52 : vector<16x4xf32> to vector<1x16x4xf32>
    %61 = tpu.concatenate %53, %54, %55, %56, %57, %58, %59, %60 in 0 : vector<1x16x4xf32>, vector<1x16x4xf32>, vector<1x16x4xf32>, vector<1x16x4xf32>, vector<1x16x4xf32>, vector<1x16x4xf32>, vector<1x16x4xf32>, vector<1x16x4xf32> -> vector<8x16x4xf32>
    %62 = vector.shape_cast %61 : vector<8x16x4xf32> to vector<16x8x4xf32>
    "tpu.trace_start"() <{level = 10 : i32, message = "gnd,gmd->gnm"}> : () -> ()
    %cst_10 = arith.constant dense<0.000000e+00> : vector<16x8x8xf32>
    %63 = tpu.matmul %26, %44, %cst_10 {dimension_numbers = #tpu.dot_dimension_numbers<[2], [2], [1], [1], [0, 0, 0, 1, 1, 1], [0], [0]>} : vector<16x8x4xf32>, vector<16x8x4xf32>, vector<16x8x8xf32> -> vector<16x8x8xf32>
    "tpu.trace_stop"() : () -> ()
    %cst_11 = arith.constant dense<0xFF800000> : vector<16x8xf32>
    %64 = vector.multi_reduction <maximumf>, %63, %cst_11 [2] : vector<16x8x8xf32> to vector<16x8xf32>
    %65 = vector.shape_cast %64 : vector<16x8xf32> to vector<16x8x1xf32>
    %66 = vector.broadcast %65 : vector<16x8x1xf32> to vector<16x8x8xf32>
    %67 = arith.subf %63, %66 : vector<16x8x8xf32>
    %68 = math.exp %67 : vector<16x8x8xf32>
    %cst_12 = arith.constant dense<0.000000e+00> : vector<16x8xf32>
    %69 = vector.multi_reduction <add>, %68, %cst_12 [2] : vector<16x8x8xf32> to vector<16x8xf32>
    %70 = vector.shape_cast %69 : vector<16x8xf32> to vector<16x8x1xf32>
    %71 = tpu.reciprocal %70 {approx = true} : vector<16x8x1xf32> -> vector<16x8x1xf32>
    %72 = vector.broadcast %71 : vector<16x8x1xf32> to vector<16x8x8xf32>
    %73 = arith.mulf %68, %72 : vector<16x8x8xf32>
    "tpu.trace_start"() <{level = 10 : i32, message = "gnm,gmd->gnd"}> : () -> ()
    %cst_13 = arith.constant dense<0.000000e+00> : vector<16x8x4xf32>
    %74 = tpu.matmul %73, %62, %cst_13 {dimension_numbers = #tpu.dot_dimension_numbers<[2], [1], [1], [2], [0, 0, 0, 1, 1, 2], [0], [0]>} : vector<16x8x8xf32>, vector<16x8x4xf32>, vector<16x8x4xf32> -> vector<16x8x4xf32>
    "tpu.trace_stop"() : () -> ()
    %75 = vector.shape_cast %74 : vector<16x8x4xf32> to vector<8x16x4xf32>
    %76 = vector.extract_strided_slice %75 {offsets = [0, 0, 0], sizes = [1, 16, 4], strides = [1, 1, 1]} : vector<8x16x4xf32> to vector<1x16x4xf32>
    %77 = vector.shape_cast %76 : vector<1x16x4xf32> to vector<16x4xf32>
    %78 = vector.extract_strided_slice %75 {offsets = [1, 0, 0], sizes = [1, 16, 4], strides = [1, 1, 1]} : vector<8x16x4xf32> to vector<1x16x4xf32>
    %79 = vector.shape_cast %78 : vector<1x16x4xf32> to vector<16x4xf32>
    %80 = vector.extract_strided_slice %75 {offsets = [2, 0, 0], sizes = [1, 16, 4], strides = [1, 1, 1]} : vector<8x16x4xf32> to vector<1x16x4xf32>
    %81 = vector.shape_cast %80 : vector<1x16x4xf32> to vector<16x4xf32>
    %82 = vector.extract_strided_slice %75 {offsets = [3, 0, 0], sizes = [1, 16, 4], strides = [1, 1, 1]} : vector<8x16x4xf32> to vector<1x16x4xf32>
    %83 = vector.shape_cast %82 : vector<1x16x4xf32> to vector<16x4xf32>
    %84 = vector.extract_strided_slice %75 {offsets = [4, 0, 0], sizes = [1, 16, 4], strides = [1, 1, 1]} : vector<8x16x4xf32> to vector<1x16x4xf32>
    %85 = vector.shape_cast %84 : vector<1x16x4xf32> to vector<16x4xf32>
    %86 = vector.extract_strided_slice %75 {offsets = [5, 0, 0], sizes = [1, 16, 4], strides = [1, 1, 1]} : vector<8x16x4xf32> to vector<1x16x4xf32>
    %87 = vector.shape_cast %86 : vector<1x16x4xf32> to vector<16x4xf32>
    %88 = vector.extract_strided_slice %75 {offsets = [6, 0, 0], sizes = [1, 16, 4], strides = [1, 1, 1]} : vector<8x16x4xf32> to vector<1x16x4xf32>
    %89 = vector.shape_cast %88 : vector<1x16x4xf32> to vector<16x4xf32>
    %90 = vector.extract_strided_slice %75 {offsets = [7, 0, 0], sizes = [1, 16, 4], strides = [1, 1, 1]} : vector<8x16x4xf32> to vector<1x16x4xf32>
    %91 = vector.shape_cast %90 : vector<1x16x4xf32> to vector<16x4xf32>
    %92 = tpu.concatenate %77, %79, %81, %83, %85, %87, %89, %91 in 1 : vector<16x4xf32>, vector<16x4xf32>, vector<16x4xf32>, vector<16x4xf32>, vector<16x4xf32>, vector<16x4xf32>, vector<16x4xf32>, vector<16x4xf32> -> vector<16x32xf32>
    %c0_14 = arith.constant 0 : index
    %c0_15 = arith.constant 0 : index
    %93 = vector.load %arg5[%c0_14, %c0_15] : memref<32x32xf32, #tpu.memory_space<vmem>>, vector<32x32xf32>
    %cst_16 = arith.constant dense<0.000000e+00> : vector<16x32xf32>
    %94 = tpu.matmul %92, %93, %cst_16 {dimension_numbers = #tpu.dot_dimension_numbers<[1], [0], [0], [1], [0, 0, 1, 1], [], []>} : vector<16x32xf32>, vector<32x32xf32>, vector<16x32xf32> -> vector<16x32xf32>
    %c0_17 = arith.constant 0 : index
    %c0_18 = arith.constant 0 : index
    %95 = vector.load %arg6[%c0_17, %c0_18] : memref<1x32xf32, #tpu.memory_space<vmem>>, vector<1x32xf32>
    %96 = vector.broadcast %95 : vector<1x32xf32> to vector<16x32xf32>
    %97 = arith.addf %94, %96 : vector<16x32xf32>
    %c0_19 = arith.constant 0 : index
    %c0_20 = arith.constant 0 : index
    %98 = vector.load %arg7[%c0_19, %c0_20] : memref<16x32xf32, #tpu.memory_space<vmem>>, vector<16x32xf32>
    tpu.vector_store %arg7[%c0_19, %c0_20], %97 {strides = array<i32>} : memref<16x32xf32, #tpu.memory_space<vmem>>, vector<16x32xf32>,
    return
  }
  func.func @transform_0(%arg0: i32) -> (i32, i32) {
    %c0_i32 = arith.constant 0 : i32
    %c0_i32_0 = arith.constant 0 : i32
    return %arg0, %c0_i32 : i32, i32
  }
  func.func @transform_1(%arg0: i32) -> (i32, i32) {
    %c0_i32 = arith.constant 0 : i32
    %c0_i32_0 = arith.constant 0 : i32
    %c0_i32_1 = arith.constant 0 : i32
    return %c0_i32, %c0_i32_0 : i32, i32
  }
  func.func @transform_2(%arg0: i32) -> (i32, i32) {
    %c0_i32 = arith.constant 0 : i32
    %c0_i32_0 = arith.constant 0 : i32
    %c0_i32_1 = arith.constant 0 : i32
    return %c0_i32, %c0_i32_0 : i32, i32
  }
  func.func @transform_3(%arg0: i32) -> (i32, i32) {
    %c0_i32 = arith.constant 0 : i32
    %c0_i32_0 = arith.constant 0 : i32
    %c0_i32_1 = arith.constant 0 : i32
    return %c0_i32, %c0_i32_0 : i32, i32
  }
  func.func @transform_4(%arg0: i32) -> (i32, i32) {
    %c0_i32 = arith.constant 0 : i32
    %c0_i32_0 = arith.constant 0 : i32
    %c0_i32_1 = arith.constant 0 : i32
    return %c0_i32, %c0_i32_0 : i32, i32
  }
  func.func @transform_5(%arg0: i32) -> (i32, i32) {
    %c0_i32 = arith.constant 0 : i32
    %c0_i32_0 = arith.constant 0 : i32
    %c0_i32_1 = arith.constant 0 : i32
    return %c0_i32, %c0_i32_0 : i32, i32
  }
  func.func @transform_6(%arg0: i32) -> (i32, i32) {
    %c0_i32 = arith.constant 0 : i32
    %c0_i32_0 = arith.constant 0 : i32
    return %arg0, %c0_i32 : i32, i32
  }
}

</mosaic_0001>

<llo_original>
// kernel: tpu_custom_call.1
$region0: #{tpu_custom_call.1}
  #allocation0 [shape = 'u32[]', space=smem, size = 0x4, offset = 0x4, fixed_abs, tag = 'smem constant byte address 0x4 - core index']
  #allocation1 [shape = 'u32[144,128]{1,0:T(1,128)}', space=vmem, size = 0x12000, scoped, tag = 'internal scratch']
  %s0 = inlined_call_operand.hbm [shape: f32[16,32], index: 0, kind: input, shape index: {}]
  %s1 = inlined_call_operand.hbm [shape: f32[32,32], index: 1, kind: input, shape index: {}]
  %s2 = inlined_call_operand.hbm [shape: f32[32,32], index: 2, kind: input, shape index: {}]
  %s3 = inlined_call_operand.hbm [shape: f32[32,32], index: 3, kind: input, shape index: {}]
  %s4 = inlined_call_operand.hbm [shape: f32[32,32], index: 4, kind: input, shape index: {}]
  %s5 = inlined_call_operand.vmem [shape: f32[1,32], index: 5, kind: input, shape index: {}]
  %s6 = inlined_call_operand.hbm [shape: f32[16,32], index: 6, kind: output, shape index: {}]
  %s7 = sld [smem:[#allocation0]]
  $region54: #{tpu_custom_call.1} parent=0
    _
  %s9 = ssub.s32 1, %s7
  %s10 = scalar_select 0, %s9, %s7
  $region1: #{tpu_custom_call.1} parent=0
    #allocation2 [shape = 'u8[8192]{0}', space=vmem, size = 0x2000, scoped, tag = 'input window, operand 0, single buffered']
    #allocation3 [shape = 's32[1]{0}', space=sflag, size = 0x4, scoped, tag = 'scoped memory for tpu_custom_call.1']
    #allocation4 [shape = 's32[1]{0}', space=sflag, size = 0x4, scoped, tag = 'scoped memory for tpu_custom_call.1']
    #allocation5 [shape = 'u8[16384]{0}', space=vmem, size = 0x4000, scoped, tag = 'input window, operand 1, single buffered']
    #allocation6 [shape = 's32[1]{0}', space=sflag, size = 0x4, scoped, tag = 'scoped memory for tpu_custom_call.1']
    #allocation7 [shape = 'u8[16384]{0}', space=vmem, size = 0x4000, scoped, tag = 'input window, operand 2, single buffered']
    #allocation8 [shape = 'u8[16384]{0}', space=vmem, size = 0x4000, scoped, tag = 'input window, operand 3, single buffered']
    #allocation9 [shape = 's32[1]{0}', space=sflag, size = 0x4, scoped, tag = 'scoped memory for tpu_custom_call.1']
    #allocation10 [shape = 'u8[16384]{0}', space=vmem, size = 0x4000, scoped, tag = 'input window, operand 4, single buffered']
    #allocation11 [shape = 'u8[8192]{0}', space=vmem, size = 0x2000, scoped, tag = 'output window, operand 0, single buffered']
    %11 = vsyncpa [#allocation3], 0
    %12 = vsyncpa [#allocation6], 0
    %13 = vsyncpa [#allocation9], 0
    %14 = vsyncpa [#allocation4], 0
    // Predicated region
    $region2: #{tpu_custom_call.1} parent=1 // pred_check
      _
    $region3: #{tpu_custom_call.1} parent=1 // pred_check_branch
      %16 = sbr.rel (0) target = $region5
    $region4: #{tpu_custom_call.1} parent=1 // pred_region
      %s18 = ssub.s32 256, 256
      %19 = vsyncadd [#allocation3], %s18
      %s20 = sshll.u32 [#allocation2], 4
      %s21 = int_to_ptr.vmem [resolvable:$true] %s20
      %26 = dma.hbm_to_vmem [thread:$0]  %s0, 256, %s21, [#allocation3], 128, 128, 8
    $region5: #{tpu_custom_call.1} parent=1 // pred_fallthru
      _
    // Predicated region
    $region6: #{tpu_custom_call.1} parent=1 // pred_check
      _
    $region7: #{tpu_custom_call.1} parent=1 // pred_check_branch
      %28 = sbr.rel (0) target = $region9
    $region8: #{tpu_custom_call.1} parent=1 // pred_region
      %s30 = ssub.s32 512, 512
      %31 = vsyncadd [#allocation6], %s30
      %s32 = sshll.u32 [#allocation5], 4
      %s33 = int_to_ptr.vmem [resolvable:$true] %s32
      %38 = dma.hbm_to_vmem [thread:$0]  %s1, 512, %s33, [#allocation6], 128, 128, 8
    $region9: #{tpu_custom_call.1} parent=1 // pred_fallthru
      _
    // Predicated region
    $region10: #{tpu_custom_call.1} parent=1 // pred_check
      _
    $region11: #{tpu_custom_call.1} parent=1 // pred_check_branch
      %40 = sbr.rel (0) target = $region13
    $region12: #{tpu_custom_call.1} parent=1 // pred_region
      %s42 = ssub.s32 512, 512
      %43 = vsyncadd [#allocation6], %s42
      %s44 = sshll.u32 [#allocation7], 4
      %s45 = int_to_ptr.vmem [resolvable:$true] %s44
      %50 = dma.hbm_to_vmem [thread:$0]  %s2, 512, %s45, [#allocation6], 128, 128, 8
    $region13: #{tpu_custom_call.1} parent=1 // pred_fallthru
      _
    // Predicated region
    $region14: #{tpu_custom_call.1} parent=1 // pred_check
      _
    $region15: #{tpu_custom_call.1} parent=1 // pred_check_branch
      %52 = sbr.rel (0) target = $region17
    $region16: #{tpu_custom_call.1} parent=1 // pred_region
      %s54 = ssub.s32 512, 512
      %55 = vsyncadd [#allocation9], %s54
      %s56 = sshll.u32 [#allocation8], 4
      %s57 = int_to_ptr.vmem [resolvable:$true] %s56
      %62 = dma.hbm_to_vmem [thread:$0]  %s3, 512, %s57, [#allocation9], 128, 128, 8
    $region17: #{tpu_custom_call.1} parent=1 // pred_fallthru
      _
    // Predicated region
    $region18: #{tpu_custom_call.1} parent=1 // pred_check
      _
    $region19: #{tpu_custom_call.1} parent=1 // pred_check_branch
      %64 = sbr.rel (0) target = $region21
    $region20: #{tpu_custom_call.1} parent=1 // pred_region
      %s66 = ssub.s32 512, 512
      %67 = vsyncadd [#allocation9], %s66
      %s68 = sshll.u32 [#allocation10], 4
      %s69 = int_to_ptr.vmem [resolvable:$true] %s68
      %74 = dma.hbm_to_vmem [thread:$0]  %s4, 512, %s69, [#allocation9], 128, 128, 8
    $region21: #{tpu_custom_call.1} parent=1 // pred_fallthru
      _
    // Predicated region
    $region22: #{tpu_custom_call.1} parent=1 // pred_check
      _
    $region23: #{tpu_custom_call.1} parent=1 // pred_check_branch
      %76 = sbr.rel (0) target = $region25
    $region24: #{tpu_custom_call.1} parent=1 // pred_region
      _
    $region25: #{tpu_custom_call.1} parent=1 // pred_fallthru
      _
    // Predicated region
    $region26: #{tpu_custom_call.1} parent=1 // pred_check
      _
    $region27: #{tpu_custom_call.1} parent=1 // pred_check_branch
      %78 = sbr.rel (0) target = $region29
    $region28: #{tpu_custom_call.1} parent=1 // pred_region
      %79 = dma.done [#allocation3], 256
    $region29: #{tpu_custom_call.1} parent=1 // pred_fallthru
      _
    // Predicated region
    $region30: #{tpu_custom_call.1} parent=1 // pred_check
      _
    $region31: #{tpu_custom_call.1} parent=1 // pred_check_branch
      %81 = sbr.rel (0) target = $region33
    $region32: #{tpu_custom_call.1} parent=1 // pred_region
      %82 = dma.done [#allocation6], 512
    $region33: #{tpu_custom_call.1} parent=1 // pred_fallthru
      _
    // Predicated region
    $region34: #{tpu_custom_call.1} parent=1 // pred_check
      _
    $region35: #{tpu_custom_call.1} parent=1 // pred_check_branch
      %84 = sbr.rel (0) target = $region37
    $region36: #{tpu_custom_call.1} parent=1 // pred_region
      %85 = dma.done [#allocation6], 512
    $region37: #{tpu_custom_call.1} parent=1 // pred_fallthru
      _
    // Predicated region
    $region38: #{tpu_custom_call.1} parent=1 // pred_check
      _
    $region39: #{tpu_custom_call.1} parent=1 // pred_check_branch
      %87 = sbr.rel (0) target = $region41
    $region40: #{tpu_custom_call.1} parent=1 // pred_region
      %88 = dma.done [#allocation9], 512
    $region41: #{tpu_custom_call.1} parent=1 // pred_fallthru
      _
    // Predicated region
    $region42: #{tpu_custom_call.1} parent=1 // pred_check
      _
    $region43: #{tpu_custom_call.1} parent=1 // pred_check_branch
      %90 = sbr.rel (0) target = $region45
    $region44: #{tpu_custom_call.1} parent=1 // pred_region
      %91 = dma.done [#allocation9], 512
    $region45: #{tpu_custom_call.1} parent=1 // pred_fallthru
      _
    %v92 = vld [vmem:[#allocation2] sm:$0xff]
    %v93 = vld [vmem:[#allocation2 + $0x8] sm:$0xff]
    %v94 = vld [vmem:[#allocation5] sm:$0xff]
    %v95 = vld [vmem:[#allocation5 + $0x8] sm:$0xff]
    %v96 = vld [vmem:[#allocation5 + $0x10] sm:$0xff]
    %v97 = vld [vmem:[#allocation5 + $0x18] sm:$0xff]
    %vm98 = vcmask 261120
    %v100 = vsel %vm98, %v92, 0
    %v103 = vsel %vm98, %v93, 0
    %105 = vmatprep.subr.mxu0 0.0
    %106 = vmatpush1.msra.mxu0 %v94
    %107 = vmatprep.subr.mxu0 0.0
    %108 = vmatpush1.msra.mxu0 %v95
    %109 = vmatprep.subr.mxu0 0.0
    %110 = vmatpush1.msra.mxu0 %v96
    %111 = vmatprep.subr.mxu0 0.0
    %112 = vmatpush1.msra.mxu0 %v97
    %113 = vmatprep.subr.mxu0 0.0
    %114 = vmatpush1.msra.mxu0 0.0
    %115 = vmatprep.subr.mxu0 0.0
    %116 = vmatpush1.msra.mxu0 0.0
    %117 = vmatprep.subr.mxu0 0.0
    %118 = vmatpush1.msra.mxu0 0.0
    %119 = vmatprep.subr.mxu0 0.0
    %120 = vmatpush1.msra.mxu0 0.0
    %121 = vmatprep.subr.mxu0 0.0
    %122 = vmatpush1.msra.mxu0 0.0
    %123 = vmatprep.subr.mxu0 0.0
    %124 = vmatpush1.msra.mxu0 0.0
    %125 = vmatprep.subr.mxu0 0.0
    %126 = vmatpush1.msra.mxu0 0.0
    %127 = vmatprep.subr.mxu0 0.0
    %128 = vmatpush1.msra.mxu0 0.0
    %129 = vmatprep.subr.mxu0 0.0
    %130 = vmatpush1.msra.mxu0 0.0
    %131 = vmatprep.subr.mxu0 0.0
    %132 = vmatpush1.msra.mxu0 0.0
    %133 = vmatprep.subr.mxu0 0.0
    %134 = vmatpush1.msra.mxu0 0.0
    %135 = vmatprep.subr.mxu0 0.0
    %136 = vmatpush1.msra.mxu0 0.0
    %137 = vmatprep.subr.mxu0 0.0
    %138 = vmatpush1.msra.mxu0 0.0
    %139 = vmatprep.subr.mxu0 0.0
    %140 = vmatpush1.msra.mxu0 0.0
    %141 = vmatprep.subr.mxu0 0.0
    %142 = vmatpush1.msra.mxu0 0.0
    %143 = vmatprep.subr.mxu0 0.0
    %144 = vmatpush1.msra.mxu0 0.0
    %145 = vmatprep.subr.mxu0 0.0
    %146 = vmatpush1.msra.mxu0 0.0
    %147 = vmatprep.subr.mxu0 0.0
    %148 = vmatpush1.msra.mxu0 0.0
    %149 = vmatprep.subr.mxu0 0.0
    %150 = vmatpush1.msra.mxu0 0.0
    %151 = vmatprep.subr.mxu0 0.0
    %152 = vmatpush1.msra.mxu0 0.0
    %153 = vmatprep.subr.mxu0 0.0
    %154 = vmatpush1.msra.mxu0 0.0
    %155 = vmatprep.subr.mxu0 0.0
    %156 = vmatpush1.msra.mxu0 0.0
    %157 = vmatprep.subr.mxu0 0.0
    %158 = vmatpush1.msra.mxu0 0.0
    %159 = vmatprep.subr.mxu0 0.0
    %160 = vmatpush1.msra.mxu0 0.0
    %161 = vmatprep.subr.mxu0 0.0
    %162 = vmatpush1.msra.mxu0 0.0
    %163 = vmatprep.subr.mxu0 0.0
    %164 = vmatpush1.msra.mxu0 0.0
    %165 = vmatprep.subr.mxu0 0.0
    %166 = vmatpush1.msra.mxu0 0.0
    %167 = vmatprep.subr.mxu0 0.0
    %168 = vmatpush1.msra.mxu0 0.0
    %169 = vmatprep.mubr.f32.mxu0 0.0
    %170 = vmatmul.mubr.f32.gmra.mrb[0].mxu0 %v100
    %v171 = vpop.f32.mrb[0].mxu0
    %v172 = vadd.f32 0.0, %v171
    %v173 = vpop.f32.mrb[0].mxu0
    %174 = vmatprep.mubr.f32.mxu0 0.0
    %175 = vmatmul.mubr.f32.gmra.mrb[0].mxu0 %v103
    %v176 = vpop.f32.mrb[0].mxu0
    %v177 = vadd.f32 0.0, %v176
    %v178 = vpop.f32.mrb[0].mxu0
    %179 = vdwg.mxu0
    %v180 = vmul.f32 %v172, 0.5
    %v181 = vmul.f32 %v177, 0.5
    %v182 = vld [vmem:[#allocation7] sm:$0xff]
    %v183 = vld [vmem:[#allocation7 + $0x8] sm:$0xff]
    %v184 = vld [vmem:[#allocation7 + $0x10] sm:$0xff]
    %v185 = vld [vmem:[#allocation7 + $0x18] sm:$0xff]
    %186 = vmatprep.subr.mxu0 0.0
    %187 = vmatpush1.msra.mxu0 %v182
    %188 = vmatprep.subr.mxu0 0.0
    %189 = vmatpush1.msra.mxu0 %v183
    %190 = vmatprep.subr.mxu0 0.0
    %191 = vmatpush1.msra.mxu0 %v184
    %192 = vmatprep.subr.mxu0 0.0
    %193 = vmatpush1.msra.mxu0 %v185
    %194 = vmatprep.subr.mxu0 0.0
    %195 = vmatpush1.msra.mxu0 0.0
    %196 = vmatprep.subr.mxu0 0.0
    %197 = vmatpush1.msra.mxu0 0.0
    %198 = vmatprep.subr.mxu0 0.0
    %199 = vmatpush1.msra.mxu0 0.0
    %200 = vmatprep.subr.mxu0 0.0
    %201 = vmatpush1.msra.mxu0 0.0
    %202 = vmatprep.subr.mxu0 0.0
    %203 = vmatpush1.msra.mxu0 0.0
    %204 = vmatprep.subr.mxu0 0.0
    %205 = vmatpush1.msra.mxu0 0.0
    %206 = vmatprep.subr.mxu0 0.0
    %207 = vmatpush1.msra.mxu0 0.0
    %208 = vmatprep.subr.mxu0 0.0
    %209 = vmatpush1.msra.mxu0 0.0
    %210 = vmatprep.subr.mxu0 0.0
    %211 = vmatpush1.msra.mxu0 0.0
    %212 = vmatprep.subr.mxu0 0.0
    %213 = vmatpush1.msra.mxu0 0.0
    %214 = vmatprep.subr.mxu0 0.0
    %215 = vmatpush1.msra.mxu0 0.0
    %216 = vmatprep.subr.mxu0 0.0
    %217 = vmatpush1.msra.mxu0 0.0
    %218 = vmatprep.subr.mxu0 0.0
    %219 = vmatpush1.msra.mxu0 0.0
    %220 = vmatprep.subr.mxu0 0.0
    %221 = vmatpush1.msra.mxu0 0.0
    %222 = vmatprep.subr.mxu0 0.0
    %223 = vmatpush1.msra.mxu0 0.0
    %224 = vmatprep.subr.mxu0 0.0
    %225 = vmatpush1.msra.mxu0 0.0
    %226 = vmatprep.subr.mxu0 0.0
    %227 = vmatpush1.msra.mxu0 0.0
    %228 = vmatprep.subr.mxu0 0.0
    %229 = vmatpush1.msra.mxu0 0.0
    %230 = vmatprep.subr.mxu0 0.0
    %231 = vmatpush1.msra.mxu0 0.0
    %232 = vmatprep.subr.mxu0 0.0
    %233 = vmatpush1.msra.mxu0 0.0
    %234 = vmatprep.subr.mxu0 0.0
    %235 = vmatpush1.msra.mxu0 0.0
    %236 = vmatprep.subr.mxu0 0.0
    %237 = vmatpush1.msra.mxu0 0.0
    %238 = vmatprep.subr.mxu0 0.0
    %239 = vmatpush1.msra.mxu0 0.0
    %240 = vmatprep.subr.mxu0 0.0
    %241 = vmatpush1.msra.mxu0 0.0
    %242 = vmatprep.subr.mxu0 0.0
    %243 = vmatpush1.msra.mxu0 0.0
    %244 = vmatprep.subr.mxu0 0.0
    %245 = vmatpush1.msra.mxu0 0.0
    %246 = vmatprep.subr.mxu0 0.0
    %247 = vmatpush1.msra.mxu0 0.0
    %248 = vmatprep.subr.mxu0 0.0
    %249 = vmatpush1.msra.mxu0 0.0
    %250 = vmatprep.mubr.f32.mxu0 0.0
    %251 = vmatmul.mubr.f32.gmra.mrb[0].mxu0 %v100
    %v252 = vpop.f32.mrb[0].mxu0
    %v253 = vadd.f32 0.0, %v252
    %v254 = vpop.f32.mrb[0].mxu0
    %255 = vmatprep.mubr.f32.mxu0 0.0
    %256 = vmatmul.mubr.f32.gmra.mrb[0].mxu0 %v103
    %v257 = vpop.f32.mrb[0].mxu0
    %v258 = vadd.f32 0.0, %v257
    %v259 = vpop.f32.mrb[0].mxu0
    %260 = vdwg.mxu0
    %v261 = vld [vmem:[#allocation8] sm:$0xff]
    %v262 = vld [vmem:[#allocation8 + $0x8] sm:$0xff]
    %v263 = vld [vmem:[#allocation8 + $0x10] sm:$0xff]
    %v264 = vld [vmem:[#allocation8 + $0x18] sm:$0xff]
    %265 = vmatprep.subr.mxu0 0.0
    %266 = vmatpush1.msra.mxu0 %v261
    %267 = vmatprep.subr.mxu0 0.0
    %268 = vmatpush1.msra.mxu0 %v262
    %269 = vmatprep.subr.mxu0 0.0
    %270 = vmatpush1.msra.mxu0 %v263
    %271 = vmatprep.subr.mxu0 0.0
    %272 = vmatpush1.msra.mxu0 %v264
    %273 = vmatprep.subr.mxu0 0.0
    %274 = vmatpush1.msra.mxu0 0.0
    %275 = vmatprep.subr.mxu0 0.0
    %276 = vmatpush1.msra.mxu0 0.0
    %277 = vmatprep.subr.mxu0 0.0
    %278 = vmatpush1.msra.mxu0 0.0
    %279 = vmatprep.subr.mxu0 0.0
    %280 = vmatpush1.msra.mxu0 0.0
    %281 = vmatprep.subr.mxu0 0.0
    %282 = vmatpush1.msra.mxu0 0.0
    %283 = vmatprep.subr.mxu0 0.0
    %284 = vmatpush1.msra.mxu0 0.0
    %285 = vmatprep.subr.mxu0 0.0
    %286 = vmatpush1.msra.mxu0 0.0
    %287 = vmatprep.subr.mxu0 0.0
    %288 = vmatpush1.msra.mxu0 0.0
    %289 = vmatprep.subr.mxu0 0.0
    %290 = vmatpush1.msra.mxu0 0.0
    %291 = vmatprep.subr.mxu0 0.0
    %292 = vmatpush1.msra.mxu0 0.0
    %293 = vmatprep.subr.mxu0 0.0
    %294 = vmatpush1.msra.mxu0 0.0
    %295 = vmatprep.subr.mxu0 0.0
    %296 = vmatpush1.msra.mxu0 0.0
    %297 = vmatprep.subr.mxu0 0.0
    %298 = vmatpush1.msra.mxu0 0.0
    %299 = vmatprep.subr.mxu0 0.0
    %300 = vmatpush1.msra.mxu0 0.0
    %301 = vmatprep.subr.mxu0 0.0
    %302 = vmatpush1.msra.mxu0 0.0
    %303 = vmatprep.subr.mxu0 0.0
    %304 = vmatpush1.msra.mxu0 0.0
    %305 = vmatprep.subr.mxu0 0.0
    %306 = vmatpush1.msra.mxu0 0.0
    %307 = vmatprep.subr.mxu0 0.0
    %308 = vmatpush1.msra.mxu0 0.0
    %309 = vmatprep.subr.mxu0 0.0
    %310 = vmatpush1.msra.mxu0 0.0
    %311 = vmatprep.subr.mxu0 0.0
    %312 = vmatpush1.msra.mxu0 0.0
    %313 = vmatprep.subr.mxu0 0.0
    %314 = vmatpush1.msra.mxu0 0.0
    %315 = vmatprep.subr.mxu0 0.0
    %316 = vmatpush1.msra.mxu0 0.0
    %317 = vmatprep.subr.mxu0 0.0
    %318 = vmatpush1.msra.mxu0 0.0
    %319 = vmatprep.subr.mxu0 0.0
    %320 = vmatpush1.msra.mxu0 0.0
    %321 = vmatprep.subr.mxu0 0.0
    %322 = vmatpush1.msra.mxu0 0.0
    %323 = vmatprep.subr.mxu0 0.0
    %324 = vmatpush1.msra.mxu0 0.0
    %325 = vmatprep.subr.mxu0 0.0
    %326 = vmatpush1.msra.mxu0 0.0
    %327 = vmatprep.subr.mxu0 0.0
    %328 = vmatpush1.msra.mxu0 0.0
    %329 = vmatprep.mubr.f32.mxu0 0.0
    %330 = vmatmul.mubr.f32.gmra.mrb[0].mxu0 %v100
    %v331 = vpop.f32.mrb[0].mxu0
    %v332 = vadd.f32 0.0, %v331
    %v333 = vpop.f32.mrb[0].mxu0
    %334 = vmatprep.mubr.f32.mxu0 0.0
    %335 = vmatmul.mubr.f32.gmra.mrb[0].mxu0 %v103
    %v336 = vpop.f32.mrb[0].mxu0
    %v337 = vadd.f32 0.0, %v336
    %v338 = vpop.f32.mrb[0].mxu0
    %339 = vdwg.mxu0
    %342 = vrot.lane.b32.xlu0 %v180, 124
    %v343 = vpop.permute.xlu0 %342
    %344 = vrot.lane.b32.xlu0 %v181, 124
    %v345 = vpop.permute.xlu0 %344
    %346 = vrot.lane.b32.xlu0 %v180, 120
    %v347 = vpop.permute.xlu0 %346
    %348 = vrot.lane.b32.xlu0 %v181, 120
    %v349 = vpop.permute.xlu0 %348
    %350 = vrot.lane.b32.xlu0 %v180, 116
    %v351 = vpop.permute.xlu0 %350
    %352 = vrot.lane.b32.xlu0 %v181, 116
    %v353 = vpop.permute.xlu0 %352
    %354 = vrot.lane.b32.xlu0 %v180, 112
    %v355 = vpop.permute.xlu0 %354
    %356 = vrot.lane.b32.xlu0 %v181, 112
    %v357 = vpop.permute.xlu0 %356
    %358 = vrot.lane.b32.xlu0 %v180, 108
    %v359 = vpop.permute.xlu0 %358
    %360 = vrot.lane.b32.xlu0 %v181, 108
    %v361 = vpop.permute.xlu0 %360
    %362 = vrot.lane.b32.xlu0 %v180, 104
    %v363 = vpop.permute.xlu0 %362
    %364 = vrot.lane.b32.xlu0 %v181, 104
    %v365 = vpop.permute.xlu0 %364
    %366 = vrot.lane.b32.xlu0 %v180, 100
    %v367 = vpop.permute.xlu0 %366
    %368 = vrot.lane.b32.xlu0 %v181, 100
    %v369 = vpop.permute.xlu0 %368
    %372 = vrot.lane.b32.xlu0 %v253, 124
    %v373 = vpop.permute.xlu0 %372
    %374 = vrot.lane.b32.xlu0 %v258, 124
    %v375 = vpop.permute.xlu0 %374
    %376 = vrot.lane.b32.xlu0 %v253, 120
    %v377 = vpop.permute.xlu0 %376
    %378 = vrot.lane.b32.xlu0 %v258, 120
    %v379 = vpop.permute.xlu0 %378
    %380 = vrot.lane.b32.xlu0 %v253, 116
    %v381 = vpop.permute.xlu0 %380
    %382 = vrot.lane.b32.xlu0 %v258, 116
    %v383 = vpop.permute.xlu0 %382
    %384 = vrot.lane.b32.xlu0 %v253, 112
    %v385 = vpop.permute.xlu0 %384
    %386 = vrot.lane.b32.xlu0 %v258, 112
    %v387 = vpop.permute.xlu0 %386
    %388 = vrot.lane.b32.xlu0 %v253, 108
    %v389 = vpop.permute.xlu0 %388
    %390 = vrot.lane.b32.xlu0 %v258, 108
    %v391 = vpop.permute.xlu0 %390
    %392 = vrot.lane.b32.xlu0 %v253, 104
    %v393 = vpop.permute.xlu0 %392
    %394 = vrot.lane.b32.xlu0 %v258, 104
    %v395 = vpop.permute.xlu0 %394
    %396 = vrot.lane.b32.xlu0 %v253, 100
    %v397 = vpop.permute.xlu0 %396
    %398 = vrot.lane.b32.xlu0 %v258, 100
    %v399 = vpop.permute.xlu0 %398
    %402 = vrot.lane.b32.xlu0 %v332, 124
    %v403 = vpop.permute.xlu0 %402
    %404 = vrot.lane.b32.xlu0 %v337, 124
    %v405 = vpop.permute.xlu0 %404
    %408 = vrot.lane.b32.xlu0 %v332, 120
    %v409 = vpop.permute.xlu0 %408
    %410 = vrot.lane.b32.xlu0 %v337, 120
    %v411 = vpop.permute.xlu0 %410
    %414 = vrot.lane.b32.xlu0 %v332, 116
    %v415 = vpop.permute.xlu0 %414
    %416 = vrot.lane.b32.xlu0 %v337, 116
    %v417 = vpop.permute.xlu0 %416
    %420 = vrot.lane.b32.xlu0 %v332, 112
    %v421 = vpop.permute.xlu0 %420
    %422 = vrot.lane.b32.xlu0 %v337, 112
    %v423 = vpop.permute.xlu0 %422
    %426 = vrot.lane.b32.xlu0 %v332, 108
    %v427 = vpop.permute.xlu0 %426
    %428 = vrot.lane.b32.xlu0 %v337, 108
    %v429 = vpop.permute.xlu0 %428
    %432 = vrot.lane.b32.xlu0 %v332, 104
    %v433 = vpop.permute.xlu0 %432
    %434 = vrot.lane.b32.xlu0 %v337, 104
    %v435 = vpop.permute.xlu0 %434
    %438 = vrot.lane.b32.xlu0 %v332, 100
    %v439 = vpop.permute.xlu0 %438
    %440 = vrot.lane.b32.xlu0 %v337, 100
    %v441 = vpop.permute.xlu0 %440
    %vm444 = vcmask 31744
    %v445 = vsel %vm444, %v180, 0
    %v447 = vsel %vm444, %v253, 0
    %449 = vmatprep.subr.mxu0 0.0
    %450 = vmatpush1.xpose.msra.mxu0 %v447
    %451 = vmatprep.subr.mxu0 0.0
    %452 = vmatpush1.xpose.msra.mxu0 0.0
    %453 = vmatprep.subr.mxu0 0.0
    %454 = vmatpush1.xpose.msra.mxu0 0.0
    %455 = vmatprep.subr.mxu0 0.0
    %456 = vmatpush1.xpose.msra.mxu0 0.0
    %457 = vmatprep.subr.mxu0 0.0
    %458 = vmatpush1.xpose.msra.mxu0 0.0
    %459 = vmatprep.subr.mxu0 0.0
    %460 = vmatpush1.xpose.msra.mxu0 0.0
    %461 = vmatprep.subr.mxu0 0.0
    %462 = vmatpush1.xpose.msra.mxu0 0.0
    %463 = vmatprep.subr.mxu0 0.0
    %464 = vmatpush1.xpose.msra.mxu0 0.0
    %465 = vmatprep.subr.mxu0 0.0
    %466 = vmatpush1.xpose.msra.mxu0 0.0
    %467 = vmatprep.subr.mxu0 0.0
    %468 = vmatpush1.xpose.msra.mxu0 0.0
    %469 = vmatprep.subr.mxu0 0.0
    %470 = vmatpush1.xpose.msra.mxu0 0.0
    %471 = vmatprep.subr.mxu0 0.0
    %472 = vmatpush1.xpose.msra.mxu0 0.0
    %473 = vmatprep.subr.mxu0 0.0
    %474 = vmatpush1.xpose.msra.mxu0 0.0
    %475 = vmatprep.subr.mxu0 0.0
    %476 = vmatpush1.xpose.msra.mxu0 0.0
    %477 = vmatprep.subr.mxu0 0.0
    %478 = vmatpush1.xpose.msra.mxu0 0.0
    %479 = vmatprep.subr.mxu0 0.0
    %480 = vmatpush1.xpose.msra.mxu0 0.0
    %481 = vmatprep.subr.mxu0 0.0
    %482 = vmatpush1.xpose.msra.mxu0 0.0
    %483 = vmatprep.subr.mxu0 0.0
    %484 = vmatpush1.xpose.msra.mxu0 0.0
    %485 = vmatprep.subr.mxu0 0.0
    %486 = vmatpush1.xpose.msra.mxu0 0.0
    %487 = vmatprep.subr.mxu0 0.0
    %488 = vmatpush1.xpose.msra.mxu0 0.0
    %489 = vmatprep.subr.mxu0 0.0
    %490 = vmatpush1.xpose.msra.mxu0 0.0
    %491 = vmatprep.subr.mxu0 0.0
    %492 = vmatpush1.xpose.msra.mxu0 0.0
    %493 = vmatprep.subr.mxu0 0.0
    %494 = vmatpush1.xpose.msra.mxu0 0.0
    %495 = vmatprep.subr.mxu0 0.0
    %496 = vmatpush1.xpose.msra.mxu0 0.0
    %497 = vmatprep.subr.mxu0 0.0
    %498 = vmatpush1.xpose.msra.mxu0 0.0
    %499 = vmatprep.subr.mxu0 0.0
    %500 = vmatpush1.xpose.msra.mxu0 0.0
    %501 = vmatprep.subr.mxu0 0.0
    %502 = vmatpush1.xpose.msra.mxu0 0.0
    %503 = vmatprep.subr.mxu0 0.0
    %504 = vmatpush1.xpose.msra.mxu0 0.0
    %505 = vmatprep.subr.mxu0 0.0
    %506 = vmatpush1.xpose.msra.mxu0 0.0
    %507 = vmatprep.subr.mxu0 0.0
    %508 = vmatpush1.xpose.msra.mxu0 0.0
    %509 = vmatprep.subr.mxu0 0.0
    %510 = vmatpush1.xpose.msra.mxu0 0.0
    %511 = vmatprep.subr.mxu0 0.0
    %512 = vmatpush1.xpose.msra.mxu0 0.0
    %513 = vmatprep.mubr.f32.mxu0 0.0
    %514 = vmatmul.mubr.f32.gmra.mrb[0].mxu0 %v445
    %v515 = vpop.f32.mrb[0].mxu0
    %v516 = vadd.f32 0.0, %v515
    %v517 = vpop.f32.mrb[0].mxu0
    %518 = vdwg.mxu0
    %v519 = vsel %vm444, %v181, 0
    %v521 = vsel %vm444, %v258, 0
    %523 = vmatprep.subr.mxu0 0.0
    %524 = vmatpush1.xpose.msra.mxu0 %v521
    %525 = vmatprep.subr.mxu0 0.0
    %526 = vmatpush1.xpose.msra.mxu0 0.0
    %527 = vmatprep.subr.mxu0 0.0
    %528 = vmatpush1.xpose.msra.mxu0 0.0
    %529 = vmatprep.subr.mxu0 0.0
    %530 = vmatpush1.xpose.msra.mxu0 0.0
    %531 = vmatprep.subr.mxu0 0.0
    %532 = vmatpush1.xpose.msra.mxu0 0.0
    %533 = vmatprep.subr.mxu0 0.0
    %534 = vmatpush1.xpose.msra.mxu0 0.0
    %535 = vmatprep.subr.mxu0 0.0
    %536 = vmatpush1.xpose.msra.mxu0 0.0
    %537 = vmatprep.subr.mxu0 0.0
    %538 = vmatpush1.xpose.msra.mxu0 0.0
    %539 = vmatprep.subr.mxu0 0.0
    %540 = vmatpush1.xpose.msra.mxu0 0.0
    %541 = vmatprep.subr.mxu0 0.0
    %542 = vmatpush1.xpose.msra.mxu0 0.0
    %543 = vmatprep.subr.mxu0 0.0
    %544 = vmatpush1.xpose.msra.mxu0 0.0
    %545 = vmatprep.subr.mxu0 0.0
    %546 = vmatpush1.xpose.msra.mxu0 0.0
    %547 = vmatprep.subr.mxu0 0.0
    %548 = vmatpush1.xpose.msra.mxu0 0.0
    %549 = vmatprep.subr.mxu0 0.0
    %550 = vmatpush1.xpose.msra.mxu0 0.0
    %551 = vmatprep.subr.mxu0 0.0
    %552 = vmatpush1.xpose.msra.mxu0 0.0
    %553 = vmatprep.subr.mxu0 0.0
    %554 = vmatpush1.xpose.msra.mxu0 0.0
    %555 = vmatprep.subr.mxu0 0.0
    %556 = vmatpush1.xpose.msra.mxu0 0.0
    %557 = vmatprep.subr.mxu0 0.0
    %558 = vmatpush1.xpose.msra.mxu0 0.0
    %559 = vmatprep.subr.mxu0 0.0
    %560 = vmatpush1.xpose.msra.mxu0 0.0
    %561 = vmatprep.subr.mxu0 0.0
    %562 = vmatpush1.xpose.msra.mxu0 0.0
    %563 = vmatprep.subr.mxu0 0.0
    %564 = vmatpush1.xpose.msra.mxu0 0.0
    %565 = vmatprep.subr.mxu0 0.0
    %566 = vmatpush1.xpose.msra.mxu0 0.0
    %567 = vmatprep.subr.mxu0 0.0
    %568 = vmatpush1.xpose.msra.mxu0 0.0
    %569 = vmatprep.subr.mxu0 0.0
    %570 = vmatpush1.xpose.msra.mxu0 0.0
    %571 = vmatprep.subr.mxu0 0.0
    %572 = vmatpush1.xpose.msra.mxu0 0.0
    %573 = vmatprep.subr.mxu0 0.0
    %574 = vmatpush1.xpose.msra.mxu0 0.0
    %575 = vmatprep.subr.mxu0 0.0
    %576 = vmatpush1.xpose.msra.mxu0 0.0
    %577 = vmatprep.subr.mxu0 0.0
    %578 = vmatpush1.xpose.msra.mxu0 0.0
    %579 = vmatprep.subr.mxu0 0.0
    %580 = vmatpush1.xpose.msra.mxu0 0.0
    %581 = vmatprep.subr.mxu0 0.0
    %582 = vmatpush1.xpose.msra.mxu0 0.0
    %583 = vmatprep.subr.mxu0 0.0
    %584 = vmatpush1.xpose.msra.mxu0 0.0
    %585 = vmatprep.subr.mxu0 0.0
    %586 = vmatpush1.xpose.msra.mxu0 0.0
    %587 = vmatprep.mubr.f32.mxu0 0.0
    %588 = vmatmul.mubr.f32.gmra.mrb[0].mxu0 %v519
    %v589 = vpop.f32.mrb[0].mxu0
    %v590 = vadd.f32 0.0, %v589
    %v591 = vpop.f32.mrb[0].mxu0
    %592 = vdwg.mxu0
    %v593 = vsel %vm444, %v343, 0
    %v595 = vsel %vm444, %v373, 0
    %597 = vmatprep.subr.mxu0 0.0
    %598 = vmatpush1.xpose.msra.mxu0 %v595
    %599 = vmatprep.subr.mxu0 0.0
    %600 = vmatpush1.xpose.msra.mxu0 0.0
    %601 = vmatprep.subr.mxu0 0.0
    %602 = vmatpush1.xpose.msra.mxu0 0.0
    %603 = vmatprep.subr.mxu0 0.0
    %604 = vmatpush1.xpose.msra.mxu0 0.0
    %605 = vmatprep.subr.mxu0 0.0
    %606 = vmatpush1.xpose.msra.mxu0 0.0
    %607 = vmatprep.subr.mxu0 0.0
    %608 = vmatpush1.xpose.msra.mxu0 0.0
    %609 = vmatprep.subr.mxu0 0.0
    %610 = vmatpush1.xpose.msra.mxu0 0.0
    %611 = vmatprep.subr.mxu0 0.0
    %612 = vmatpush1.xpose.msra.mxu0 0.0
    %613 = vmatprep.subr.mxu0 0.0
    %614 = vmatpush1.xpose.msra.mxu0 0.0
    %615 = vmatprep.subr.mxu0 0.0
    %616 = vmatpush1.xpose.msra.mxu0 0.0
    %617 = vmatprep.subr.mxu0 0.0
    %618 = vmatpush1.xpose.msra.mxu0 0.0
    %619 = vmatprep.subr.mxu0 0.0
    %620 = vmatpush1.xpose.msra.mxu0 0.0
    %621 = vmatprep.subr.mxu0 0.0
    %622 = vmatpush1.xpose.msra.mxu0 0.0
    %623 = vmatprep.subr.mxu0 0.0
    %624 = vmatpush1.xpose.msra.mxu0 0.0
    %625 = vmatprep.subr.mxu0 0.0
    %626 = vmatpush1.xpose.msra.mxu0 0.0
    %627 = vmatprep.subr.mxu0 0.0
    %628 = vmatpush1.xpose.msra.mxu0 0.0
    %629 = vmatprep.subr.mxu0 0.0
    %630 = vmatpush1.xpose.msra.mxu0 0.0
    %631 = vmatprep.subr.mxu0 0.0
    %632 = vmatpush1.xpose.msra.mxu0 0.0
    %633 = vmatprep.subr.mxu0 0.0
    %634 = vmatpush1.xpose.msra.mxu0 0.0
    %635 = vmatprep.subr.mxu0 0.0
    %636 = vmatpush1.xpose.msra.mxu0 0.0
    %637 = vmatprep.subr.mxu0 0.0
    %638 = vmatpush1.xpose.msra.mxu0 0.0
    %639 = vmatprep.subr.mxu0 0.0
    %640 = vmatpush1.xpose.msra.mxu0 0.0
    %641 = vmatprep.subr.mxu0 0.0
    %642 = vmatpush1.xpose.msra.mxu0 0.0
    %643 = vmatprep.subr.mxu0 0.0
    %644 = vmatpush1.xpose.msra.mxu0 0.0
    %645 = vmatprep.subr.mxu0 0.0
    %646 = vmatpush1.xpose.msra.mxu0 0.0
    %647 = vmatprep.subr.mxu0 0.0
    %648 = vmatpush1.xpose.msra.mxu0 0.0
    %649 = vmatprep.subr.mxu0 0.0
    %650 = vmatpush1.xpose.msra.mxu0 0.0
    %651 = vmatprep.subr.mxu0 0.0
    %652 = vmatpush1.xpose.msra.mxu0 0.0
    %653 = vmatprep.subr.mxu0 0.0
    %654 = vmatpush1.xpose.msra.mxu0 0.0
    %655 = vmatprep.subr.mxu0 0.0
    %656 = vmatpush1.xpose.msra.mxu0 0.0
    %657 = vmatprep.subr.mxu0 0.0
    %658 = vmatpush1.xpose.msra.mxu0 0.0
    %659 = vmatprep.subr.mxu0 0.0
    %660 = vmatpush1.xpose.msra.mxu0 0.0
    %661 = vmatprep.mubr.f32.mxu0 0.0
    %662 = vmatmul.mubr.f32.gmra.mrb[0].mxu0 %v593
    %v663 = vpop.f32.mrb[0].mxu0
    %v664 = vadd.f32 0.0, %v663
    %v665 = vpop.f32.mrb[0].mxu0
    %666 = vdwg.mxu0
    %v667 = vsel %vm444, %v345, 0
    %v669 = vsel %vm444, %v375, 0
    %671 = vmatprep.subr.mxu0 0.0
    %672 = vmatpush1.xpose.msra.mxu0 %v669
    %673 = vmatprep.subr.mxu0 0.0
    %674 = vmatpush1.xpose.msra.mxu0 0.0
    %675 = vmatprep.subr.mxu0 0.0
    %676 = vmatpush1.xpose.msra.mxu0 0.0
    %677 = vmatprep.subr.mxu0 0.0
    %678 = vmatpush1.xpose.msra.mxu0 0.0
    %679 = vmatprep.subr.mxu0 0.0
    %680 = vmatpush1.xpose.msra.mxu0 0.0
    %681 = vmatprep.subr.mxu0 0.0
    %682 = vmatpush1.xpose.msra.mxu0 0.0
    %683 = vmatprep.subr.mxu0 0.0
    %684 = vmatpush1.xpose.msra.mxu0 0.0
    %685 = vmatprep.subr.mxu0 0.0
    %686 = vmatpush1.xpose.msra.mxu0 0.0
    %687 = vmatprep.subr.mxu0 0.0
    %688 = vmatpush1.xpose.msra.mxu0 0.0
    %689 = vmatprep.subr.mxu0 0.0
    %690 = vmatpush1.xpose.msra.mxu0 0.0
    %691 = vmatprep.subr.mxu0 0.0
    %692 = vmatpush1.xpose.msra.mxu0 0.0
    %693 = vmatprep.subr.mxu0 0.0
    %694 = vmatpush1.xpose.msra.mxu0 0.0
    %695 = vmatprep.subr.mxu0 0.0
    %696 = vmatpush1.xpose.msra.mxu0 0.0
    %697 = vmatprep.subr.mxu0 0.0
    %698 = vmatpush1.xpose.msra.mxu0 0.0
    %699 = vmatprep.subr.mxu0 0.0
    %700 = vmatpush1.xpose.msra.mxu0 0.0
    %701 = vmatprep.subr.mxu0 0.0
    %702 = vmatpush1.xpose.msra.mxu0 0.0
    %703 = vmatprep.subr.mxu0 0.0
    %704 = vmatpush1.xpose.msra.mxu0 0.0
    %705 = vmatprep.subr.mxu0 0.0
    %706 = vmatpush1.xpose.msra.mxu0 0.0
    %707 = vmatprep.subr.mxu0 0.0
    %708 = vmatpush1.xpose.msra.mxu0 0.0
    %709 = vmatprep.subr.mxu0 0.0
    %710 = vmatpush1.xpose.msra.mxu0 0.0
    %711 = vmatprep.subr.mxu0 0.0
    %712 = vmatpush1.xpose.msra.mxu0 0.0
    %713 = vmatprep.subr.mxu0 0.0
    %714 = vmatpush1.xpose.msra.mxu0 0.0
    %715 = vmatprep.subr.mxu0 0.0
    %716 = vmatpush1.xpose.msra.mxu0 0.0
    %717 = vmatprep.subr.mxu0 0.0
    %718 = vmatpush1.xpose.msra.mxu0 0.0
    %719 = vmatprep.subr.mxu0 0.0
    %720 = vmatpush1.xpose.msra.mxu0 0.0
    %721 = vmatprep.subr.mxu0 0.0
    %722 = vmatpush1.xpose.msra.mxu0 0.0
    %723 = vmatprep.subr.mxu0 0.0
    %724 = vmatpush1.xpose.msra.mxu0 0.0
    %725 = vmatprep.subr.mxu0 0.0
    %726 = vmatpush1.xpose.msra.mxu0 0.0
    %727 = vmatprep.subr.mxu0 0.0
    %728 = vmatpush1.xpose.msra.mxu0 0.0
    %729 = vmatprep.subr.mxu0 0.0
    %730 = vmatpush1.xpose.msra.mxu0 0.0
    %731 = vmatprep.subr.mxu0 0.0
    %732 = vmatpush1.xpose.msra.mxu0 0.0
    %733 = vmatprep.subr.mxu0 0.0
    %734 = vmatpush1.xpose.msra.mxu0 0.0
    %735 = vmatprep.mubr.f32.mxu0 0.0
    %736 = vmatmul.mubr.f32.gmra.mrb[0].mxu0 %v667
    %v737 = vpop.f32.mrb[0].mxu0
    %v738 = vadd.f32 0.0, %v737
    %v739 = vpop.f32.mrb[0].mxu0
    %740 = vdwg.mxu0
    %v741 = vsel %vm444, %v347, 0
    %v743 = vsel %vm444, %v377, 0
    %745 = vmatprep.subr.mxu0 0.0
    %746 = vmatpush1.xpose.msra.mxu0 %v743
    %747 = vmatprep.subr.mxu0 0.0
    %748 = vmatpush1.xpose.msra.mxu0 0.0
    %749 = vmatprep.subr.mxu0 0.0
    %750 = vmatpush1.xpose.msra.mxu0 0.0
    %751 = vmatprep.subr.mxu0 0.0
    %752 = vmatpush1.xpose.msra.mxu0 0.0
    %753 = vmatprep.subr.mxu0 0.0
    %754 = vmatpush1.xpose.msra.mxu0 0.0
    %755 = vmatprep.subr.mxu0 0.0
    %756 = vmatpush1.xpose.msra.mxu0 0.0
    %757 = vmatprep.subr.mxu0 0.0
    %758 = vmatpush1.xpose.msra.mxu0 0.0
    %759 = vmatprep.subr.mxu0 0.0
    %760 = vmatpush1.xpose.msra.mxu0 0.0
    %761 = vmatprep.subr.mxu0 0.0
    %762 = vmatpush1.xpose.msra.mxu0 0.0
    %763 = vmatprep.subr.mxu0 0.0
    %764 = vmatpush1.xpose.msra.mxu0 0.0
    %765 = vmatprep.subr.mxu0 0.0
    %766 = vmatpush1.xpose.msra.mxu0 0.0
    %767 = vmatprep.subr.mxu0 0.0
    %768 = vmatpush1.xpose.msra.mxu0 0.0
    %769 = vmatprep.subr.mxu0 0.0
    %770 = vmatpush1.xpose.msra.mxu0 0.0
    %771 = vmatprep.subr.mxu0 0.0
    %772 = vmatpush1.xpose.msra.mxu0 0.0
    %773 = vmatprep.subr.mxu0 0.0
    %774 = vmatpush1.xpose.msra.mxu0 0.0
    %775 = vmatprep.subr.mxu0 0.0
    %776 = vmatpush1.xpose.msra.mxu0 0.0
    %777 = vmatprep.subr.mxu0 0.0
    %778 = vmatpush1.xpose.msra.mxu0 0.0
    %779 = vmatprep.subr.mxu0 0.0
    %780 = vmatpush1.xpose.msra.mxu0 0.0
    %781 = vmatprep.subr.mxu0 0.0
    %782 = vmatpush1.xpose.msra.mxu0 0.0
    %783 = vmatprep.subr.mxu0 0.0
    %784 = vmatpush1.xpose.msra.mxu0 0.0
    %785 = vmatprep.subr.mxu0 0.0
    %786 = vmatpush1.xpose.msra.mxu0 0.0
    %787 = vmatprep.subr.mxu0 0.0
    %788 = vmatpush1.xpose.msra.mxu0 0.0
    %789 = vmatprep.subr.mxu0 0.0
    %790 = vmatpush1.xpose.msra.mxu0 0.0
    %791 = vmatprep.subr.mxu0 0.0
    %792 = vmatpush1.xpose.msra.mxu0 0.0
    %793 = vmatprep.subr.mxu0 0.0
    %794 = vmatpush1.xpose.msra.mxu0 0.0
    %795 = vmatprep.subr.mxu0 0.0
    %796 = vmatpush1.xpose.msra.mxu0 0.0
    %797 = vmatprep.subr.mxu0 0.0
    %798 = vmatpush1.xpose.msra.mxu0 0.0
    %799 = vmatprep.subr.mxu0 0.0
    %800 = vmatpush1.xpose.msra.mxu0 0.0
    %801 = vmatprep.subr.mxu0 0.0
    %802 = vmatpush1.xpose.msra.mxu0 0.0
    %803 = vmatprep.subr.mxu0 0.0
    %804 = vmatpush1.xpose.msra.mxu0 0.0
    %805 = vmatprep.subr.mxu0 0.0
    %806 = vmatpush1.xpose.msra.mxu0 0.0
    %807 = vmatprep.subr.mxu0 0.0
    %808 = vmatpush1.xpose.msra.mxu0 0.0
    %809 = vmatprep.mubr.f32.mxu0 0.0
    %810 = vmatmul.mubr.f32.gmra.mrb[0].mxu0 %v741
    %v811 = vpop.f32.mrb[0].mxu0
    %v812 = vadd.f32 0.0, %v811
    %v813 = vpop.f32.mrb[0].mxu0
    %814 = vdwg.mxu0
    %v815 = vsel %vm444, %v349, 0
    %v817 = vsel %vm444, %v379, 0
    %819 = vmatprep.subr.mxu0 0.0
    %820 = vmatpush1.xpose.msra.mxu0 %v817
    %821 = vmatprep.subr.mxu0 0.0
    %822 = vmatpush1.xpose.msra.mxu0 0.0
    %823 = vmatprep.subr.mxu0 0.0
    %824 = vmatpush1.xpose.msra.mxu0 0.0
    %825 = vmatprep.subr.mxu0 0.0
    %826 = vmatpush1.xpose.msra.mxu0 0.0
    %827 = vmatprep.subr.mxu0 0.0
    %828 = vmatpush1.xpose.msra.mxu0 0.0
    %829 = vmatprep.subr.mxu0 0.0
    %830 = vmatpush1.xpose.msra.mxu0 0.0
    %831 = vmatprep.subr.mxu0 0.0
    %832 = vmatpush1.xpose.msra.mxu0 0.0
    %833 = vmatprep.subr.mxu0 0.0
    %834 = vmatpush1.xpose.msra.mxu0 0.0
    %835 = vmatprep.subr.mxu0 0.0
    %836 = vmatpush1.xpose.msra.mxu0 0.0
    %837 = vmatprep.subr.mxu0 0.0
    %838 = vmatpush1.xpose.msra.mxu0 0.0
    %839 = vmatprep.subr.mxu0 0.0
    %840 = vmatpush1.xpose.msra.mxu0 0.0
    %841 = vmatprep.subr.mxu0 0.0
    %842 = vmatpush1.xpose.msra.mxu0 0.0
    %843 = vmatprep.subr.mxu0 0.0
    %844 = vmatpush1.xpose.msra.mxu0 0.0
    %845 = vmatprep.subr.mxu0 0.0
    %846 = vmatpush1.xpose.msra.mxu0 0.0
    %847 = vmatprep.subr.mxu0 0.0
    %848 = vmatpush1.xpose.msra.mxu0 0.0
    %849 = vmatprep.subr.mxu0 0.0
    %850 = vmatpush1.xpose.msra.mxu0 0.0
    %851 = vmatprep.subr.mxu0 0.0
    %852 = vmatpush1.xpose.msra.mxu0 0.0
    %853 = vmatprep.subr.mxu0 0.0
    %854 = vmatpush1.xpose.msra.mxu0 0.0
    %855 = vmatprep.subr.mxu0 0.0
    %856 = vmatpush1.xpose.msra.mxu0 0.0
    %857 = vmatprep.subr.mxu0 0.0
    %858 = vmatpush1.xpose.msra.mxu0 0.0
    %859 = vmatprep.subr.mxu0 0.0
    %860 = vmatpush1.xpose.msra.mxu0 0.0
    %861 = vmatprep.subr.mxu0 0.0
    %862 = vmatpush1.xpose.msra.mxu0 0.0
    %863 = vmatprep.subr.mxu0 0.0
    %864 = vmatpush1.xpose.msra.mxu0 0.0
    %865 = vmatprep.subr.mxu0 0.0
    %866 = vmatpush1.xpose.msra.mxu0 0.0
    %867 = vmatprep.subr.mxu0 0.0
    %868 = vmatpush1.xpose.msra.mxu0 0.0
    %869 = vmatprep.subr.mxu0 0.0
    %870 = vmatpush1.xpose.msra.mxu0 0.0
    %871 = vmatprep.subr.mxu0 0.0
    %872 = vmatpush1.xpose.msra.mxu0 0.0
    %873 = vmatprep.subr.mxu0 0.0
    %874 = vmatpush1.xpose.msra.mxu0 0.0
    %875 = vmatprep.subr.mxu0 0.0
    %876 = vmatpush1.xpose.msra.mxu0 0.0
    %877 = vmatprep.subr.mxu0 0.0
    %878 = vmatpush1.xpose.msra.mxu0 0.0
    %879 = vmatprep.subr.mxu0 0.0
    %880 = vmatpush1.xpose.msra.mxu0 0.0
    %881 = vmatprep.subr.mxu0 0.0
    %882 = vmatpush1.xpose.msra.mxu0 0.0
    %883 = vmatprep.mubr.f32.mxu0 0.0
    %884 = vmatmul.mubr.f32.gmra.mrb[0].mxu0 %v815
    %v885 = vpop.f32.mrb[0].mxu0
    %v886 = vadd.f32 0.0, %v885
    %v887 = vpop.f32.mrb[0].mxu0
    %888 = vdwg.mxu0
    %v889 = vsel %vm444, %v351, 0
    %v891 = vsel %vm444, %v381, 0
    %893 = vmatprep.subr.mxu0 0.0
    %894 = vmatpush1.xpose.msra.mxu0 %v891
    %895 = vmatprep.subr.mxu0 0.0
    %896 = vmatpush1.xpose.msra.mxu0 0.0
    %897 = vmatprep.subr.mxu0 0.0
    %898 = vmatpush1.xpose.msra.mxu0 0.0
    %899 = vmatprep.subr.mxu0 0.0
    %900 = vmatpush1.xpose.msra.mxu0 0.0
    %901 = vmatprep.subr.mxu0 0.0
    %902 = vmatpush1.xpose.msra.mxu0 0.0
    %903 = vmatprep.subr.mxu0 0.0
    %904 = vmatpush1.xpose.msra.mxu0 0.0
    %905 = vmatprep.subr.mxu0 0.0
    %906 = vmatpush1.xpose.msra.mxu0 0.0
    %907 = vmatprep.subr.mxu0 0.0
    %908 = vmatpush1.xpose.msra.mxu0 0.0
    %909 = vmatprep.subr.mxu0 0.0
    %910 = vmatpush1.xpose.msra.mxu0 0.0
    %911 = vmatprep.subr.mxu0 0.0
    %912 = vmatpush1.xpose.msra.mxu0 0.0
    %913 = vmatprep.subr.mxu0 0.0
    %914 = vmatpush1.xpose.msra.mxu0 0.0
    %915 = vmatprep.subr.mxu0 0.0
    %916 = vmatpush1.xpose.msra.mxu0 0.0
    %917 = vmatprep.subr.mxu0 0.0
    %918 = vmatpush1.xpose.msra.mxu0 0.0
    %919 = vmatprep.subr.mxu0 0.0
    %920 = vmatpush1.xpose.msra.mxu0 0.0
    %921 = vmatprep.subr.mxu0 0.0
    %922 = vmatpush1.xpose.msra.mxu0 0.0
    %923 = vmatprep.subr.mxu0 0.0
    %924 = vmatpush1.xpose.msra.mxu0 0.0
    %925 = vmatprep.subr.mxu0 0.0
    %926 = vmatpush1.xpose.msra.mxu0 0.0
    %927 = vmatprep.subr.mxu0 0.0
    %928 = vmatpush1.xpose.msra.mxu0 0.0
    %929 = vmatprep.subr.mxu0 0.0
    %930 = vmatpush1.xpose.msra.mxu0 0.0
    %931 = vmatprep.subr.mxu0 0.0
    %932 = vmatpush1.xpose.msra.mxu0 0.0
    %933 = vmatprep.subr.mxu0 0.0
    %934 = vmatpush1.xpose.msra.mxu0 0.0
    %935 = vmatprep.subr.mxu0 0.0
    %936 = vmatpush1.xpose.msra.mxu0 0.0
    %937 = vmatprep.subr.mxu0 0.0
    %938 = vmatpush1.xpose.msra.mxu0 0.0
    %939 = vmatprep.subr.mxu0 0.0
    %940 = vmatpush1.xpose.msra.mxu0 0.0
    %941 = vmatprep.subr.mxu0 0.0
    %942 = vmatpush1.xpose.msra.mxu0 0.0
    %943 = vmatprep.subr.mxu0 0.0
    %944 = vmatpush1.xpose.msra.mxu0 0.0
    %945 = vmatprep.subr.mxu0 0.0
    %946 = vmatpush1.xpose.msra.mxu0 0.0
    %947 = vmatprep.subr.mxu0 0.0
    %948 = vmatpush1.xpose.msra.mxu0 0.0
    %949 = vmatprep.subr.mxu0 0.0
    %950 = vmatpush1.xpose.msra.mxu0 0.0
    %951 = vmatprep.subr.mxu0 0.0
    %952 = vmatpush1.xpose.msra.mxu0 0.0
    %953 = vmatprep.subr.mxu0 0.0
    %954 = vmatpush1.xpose.msra.mxu0 0.0
    %955 = vmatprep.subr.mxu0 0.0
    %956 = vmatpush1.xpose.msra.mxu0 0.0
    %957 = vmatprep.mubr.f32.mxu0 0.0
    %958 = vmatmul.mubr.f32.gmra.mrb[0].mxu0 %v889
    %v959 = vpop.f32.mrb[0].mxu0
    %v960 = vadd.f32 0.0, %v959
    %v961 = vpop.f32.mrb[0].mxu0
    %962 = vdwg.mxu0
    %v963 = vsel %vm444, %v353, 0
    %v965 = vsel %vm444, %v383, 0
    %967 = vmatprep.subr.mxu0 0.0
    %968 = vmatpush1.xpose.msra.mxu0 %v965
    %969 = vmatprep.subr.mxu0 0.0
    %970 = vmatpush1.xpose.msra.mxu0 0.0
    %971 = vmatprep.subr.mxu0 0.0
    %972 = vmatpush1.xpose.msra.mxu0 0.0
    %973 = vmatprep.subr.mxu0 0.0
    %974 = vmatpush1.xpose.msra.mxu0 0.0
    %975 = vmatprep.subr.mxu0 0.0
    %976 = vmatpush1.xpose.msra.mxu0 0.0
    %977 = vmatprep.subr.mxu0 0.0
    %978 = vmatpush1.xpose.msra.mxu0 0.0
    %979 = vmatprep.subr.mxu0 0.0
    %980 = vmatpush1.xpose.msra.mxu0 0.0
    %981 = vmatprep.subr.mxu0 0.0
    %982 = vmatpush1.xpose.msra.mxu0 0.0
    %983 = vmatprep.subr.mxu0 0.0
    %984 = vmatpush1.xpose.msra.mxu0 0.0
    %985 = vmatprep.subr.mxu0 0.0
    %986 = vmatpush1.xpose.msra.mxu0 0.0
    %987 = vmatprep.subr.mxu0 0.0
    %988 = vmatpush1.xpose.msra.mxu0 0.0
    %989 = vmatprep.subr.mxu0 0.0
    %990 = vmatpush1.xpose.msra.mxu0 0.0
    %991 = vmatprep.subr.mxu0 0.0
    %992 = vmatpush1.xpose.msra.mxu0 0.0
    %993 = vmatprep.subr.mxu0 0.0
    %994 = vmatpush1.xpose.msra.mxu0 0.0
    %995 = vmatprep.subr.mxu0 0.0
    %996 = vmatpush1.xpose.msra.mxu0 0.0
    %997 = vmatprep.subr.mxu0 0.0
    %998 = vmatpush1.xpose.msra.mxu0 0.0
    %999 = vmatprep.subr.mxu0 0.0
    %1000 = vmatpush1.xpose.msra.mxu0 0.0
    %1001 = vmatprep.subr.mxu0 0.0
    %1002 = vmatpush1.xpose.msra.mxu0 0.0
    %1003 = vmatprep.subr.mxu0 0.0
    %1004 = vmatpush1.xpose.msra.mxu0 0.0
    %1005 = vmatprep.subr.mxu0 0.0
    %1006 = vmatpush1.xpose.msra.mxu0 0.0
    %1007 = vmatprep.subr.mxu0 0.0
    %1008 = vmatpush1.xpose.msra.mxu0 0.0
    %1009 = vmatprep.subr.mxu0 0.0
    %1010 = vmatpush1.xpose.msra.mxu0 0.0
    %1011 = vmatprep.subr.mxu0 0.0
    %1012 = vmatpush1.xpose.msra.mxu0 0.0
    %1013 = vmatprep.subr.mxu0 0.0
    %1014 = vmatpush1.xpose.msra.mxu0 0.0
    %1015 = vmatprep.subr.mxu0 0.0
    %1016 = vmatpush1.xpose.msra.mxu0 0.0
    %1017 = vmatprep.subr.mxu0 0.0
    %1018 = vmatpush1.xpose.msra.mxu0 0.0
    %1019 = vmatprep.subr.mxu0 0.0
    %1020 = vmatpush1.xpose.msra.mxu0 0.0
    %1021 = vmatprep.subr.mxu0 0.0
    %1022 = vmatpush1.xpose.msra.mxu0 0.0
    %1023 = vmatprep.subr.mxu0 0.0
    %1024 = vmatpush1.xpose.msra.mxu0 0.0
    %1025 = vmatprep.subr.mxu0 0.0
    %1026 = vmatpush1.xpose.msra.mxu0 0.0
    %1027 = vmatprep.subr.mxu0 0.0
    %1028 = vmatpush1.xpose.msra.mxu0 0.0
    %1029 = vmatprep.subr.mxu0 0.0
    %1030 = vmatpush1.xpose.msra.mxu0 0.0
    %1031 = vmatprep.mubr.f32.mxu0 0.0
    %1032 = vmatmul.mubr.f32.gmra.mrb[0].mxu0 %v963
    %v1033 = vpop.f32.mrb[0].mxu0
    %v1034 = vadd.f32 0.0, %v1033
    %v1035 = vpop.f32.mrb[0].mxu0
    %1036 = vdwg.mxu0
    %v1037 = vsel %vm444, %v355, 0
    %v1039 = vsel %vm444, %v385, 0
    %1041 = vmatprep.subr.mxu0 0.0
    %1042 = vmatpush1.xpose.msra.mxu0 %v1039
    %1043 = vmatprep.subr.mxu0 0.0
    %1044 = vmatpush1.xpose.msra.mxu0 0.0
    %1045 = vmatprep.subr.mxu0 0.0
    %1046 = vmatpush1.xpose.msra.mxu0 0.0
    %1047 = vmatprep.subr.mxu0 0.0
    %1048 = vmatpush1.xpose.msra.mxu0 0.0
    %1049 = vmatprep.subr.mxu0 0.0
    %1050 = vmatpush1.xpose.msra.mxu0 0.0
    %1051 = vmatprep.subr.mxu0 0.0
    %1052 = vmatpush1.xpose.msra.mxu0 0.0
    %1053 = vmatprep.subr.mxu0 0.0
    %1054 = vmatpush1.xpose.msra.mxu0 0.0
    %1055 = vmatprep.subr.mxu0 0.0
    %1056 = vmatpush1.xpose.msra.mxu0 0.0
    %1057 = vmatprep.subr.mxu0 0.0
    %1058 = vmatpush1.xpose.msra.mxu0 0.0
    %1059 = vmatprep.subr.mxu0 0.0
    %1060 = vmatpush1.xpose.msra.mxu0 0.0
    %1061 = vmatprep.subr.mxu0 0.0
    %1062 = vmatpush1.xpose.msra.mxu0 0.0
    %1063 = vmatprep.subr.mxu0 0.0
    %1064 = vmatpush1.xpose.msra.mxu0 0.0
    %1065 = vmatprep.subr.mxu0 0.0
    %1066 = vmatpush1.xpose.msra.mxu0 0.0
    %1067 = vmatprep.subr.mxu0 0.0
    %1068 = vmatpush1.xpose.msra.mxu0 0.0
    %1069 = vmatprep.subr.mxu0 0.0
    %1070 = vmatpush1.xpose.msra.mxu0 0.0
    %1071 = vmatprep.subr.mxu0 0.0
    %1072 = vmatpush1.xpose.msra.mxu0 0.0
    %1073 = vmatprep.subr.mxu0 0.0
    %1074 = vmatpush1.xpose.msra.mxu0 0.0
    %1075 = vmatprep.subr.mxu0 0.0
    %1076 = vmatpush1.xpose.msra.mxu0 0.0
    %1077 = vmatprep.subr.mxu0 0.0
    %1078 = vmatpush1.xpose.msra.mxu0 0.0
    %1079 = vmatprep.subr.mxu0 0.0
    %1080 = vmatpush1.xpose.msra.mxu0 0.0
    %1081 = vmatprep.subr.mxu0 0.0
    %1082 = vmatpush1.xpose.msra.mxu0 0.0
    %1083 = vmatprep.subr.mxu0 0.0
    %1084 = vmatpush1.xpose.msra.mxu0 0.0
    %1085 = vmatprep.subr.mxu0 0.0
    %1086 = vmatpush1.xpose.msra.mxu0 0.0
    %1087 = vmatprep.subr.mxu0 0.0
    %1088 = vmatpush1.xpose.msra.mxu0 0.0
    %1089 = vmatprep.subr.mxu0 0.0
    %1090 = vmatpush1.xpose.msra.mxu0 0.0
    %1091 = vmatprep.subr.mxu0 0.0
    %1092 = vmatpush1.xpose.msra.mxu0 0.0
    %1093 = vmatprep.subr.mxu0 0.0
    %1094 = vmatpush1.xpose.msra.mxu0 0.0
    %1095 = vmatprep.subr.mxu0 0.0
    %1096 = vmatpush1.xpose.msra.mxu0 0.0
    %1097 = vmatprep.subr.mxu0 0.0
    %1098 = vmatpush1.xpose.msra.mxu0 0.0
    %1099 = vmatprep.subr.mxu0 0.0
    %1100 = vmatpush1.xpose.msra.mxu0 0.0
    %1101 = vmatprep.subr.mxu0 0.0
    %1102 = vmatpush1.xpose.msra.mxu0 0.0
    %1103 = vmatprep.subr.mxu0 0.0
    %1104 = vmatpush1.xpose.msra.mxu0 0.0
    %1105 = vmatprep.mubr.f32.mxu0 0.0
    %1106 = vmatmul.mubr.f32.gmra.mrb[0].mxu0 %v1037
    %v1107 = vpop.f32.mrb[0].mxu0
    %v1108 = vadd.f32 0.0, %v1107
    %v1109 = vpop.f32.mrb[0].mxu0
    %1110 = vdwg.mxu0
    %v1111 = vsel %vm444, %v357, 0
    %v1113 = vsel %vm444, %v387, 0
    %1115 = vmatprep.subr.mxu0 0.0
    %1116 = vmatpush1.xpose.msra.mxu0 %v1113
    %1117 = vmatprep.subr.mxu0 0.0
    %1118 = vmatpush1.xpose.msra.mxu0 0.0
    %1119 = vmatprep.subr.mxu0 0.0
    %1120 = vmatpush1.xpose.msra.mxu0 0.0
    %1121 = vmatprep.subr.mxu0 0.0
    %1122 = vmatpush1.xpose.msra.mxu0 0.0
    %1123 = vmatprep.subr.mxu0 0.0
    %1124 = vmatpush1.xpose.msra.mxu0 0.0
    %1125 = vmatprep.subr.mxu0 0.0
    %1126 = vmatpush1.xpose.msra.mxu0 0.0
    %1127 = vmatprep.subr.mxu0 0.0
    %1128 = vmatpush1.xpose.msra.mxu0 0.0
    %1129 = vmatprep.subr.mxu0 0.0
    %1130 = vmatpush1.xpose.msra.mxu0 0.0
    %1131 = vmatprep.subr.mxu0 0.0
    %1132 = vmatpush1.xpose.msra.mxu0 0.0
    %1133 = vmatprep.subr.mxu0 0.0
    %1134 = vmatpush1.xpose.msra.mxu0 0.0
    %1135 = vmatprep.subr.mxu0 0.0
    %1136 = vmatpush1.xpose.msra.mxu0 0.0
    %1137 = vmatprep.subr.mxu0 0.0
    %1138 = vmatpush1.xpose.msra.mxu0 0.0
    %1139 = vmatprep.subr.mxu0 0.0
    %1140 = vmatpush1.xpose.msra.mxu0 0.0
    %1141 = vmatprep.subr.mxu0 0.0
    %1142 = vmatpush1.xpose.msra.mxu0 0.0
    %1143 = vmatprep.subr.mxu0 0.0
    %1144 = vmatpush1.xpose.msra.mxu0 0.0
    %1145 = vmatprep.subr.mxu0 0.0
    %1146 = vmatpush1.xpose.msra.mxu0 0.0
    %1147 = vmatprep.subr.mxu0 0.0
    %1148 = vmatpush1.xpose.msra.mxu0 0.0
    %1149 = vmatprep.subr.mxu0 0.0
    %1150 = vmatpush1.xpose.msra.mxu0 0.0
    %1151 = vmatprep.subr.mxu0 0.0
    %1152 = vmatpush1.xpose.msra.mxu0 0.0
    %1153 = vmatprep.subr.mxu0 0.0
    %1154 = vmatpush1.xpose.msra.mxu0 0.0
    %1155 = vmatprep.subr.mxu0 0.0
    %1156 = vmatpush1.xpose.msra.mxu0 0.0
    %1157 = vmatprep.subr.mxu0 0.0
    %1158 = vmatpush1.xpose.msra.mxu0 0.0
    %1159 = vmatprep.subr.mxu0 0.0
    %1160 = vmatpush1.xpose.msra.mxu0 0.0
    %1161 = vmatprep.subr.mxu0 0.0
    %1162 = vmatpush1.xpose.msra.mxu0 0.0
    %1163 = vmatprep.subr.mxu0 0.0
    %1164 = vmatpush1.xpose.msra.mxu0 0.0
    %1165 = vmatprep.subr.mxu0 0.0
    %1166 = vmatpush1.xpose.msra.mxu0 0.0
    %1167 = vmatprep.subr.mxu0 0.0
    %1168 = vmatpush1.xpose.msra.mxu0 0.0
    %1169 = vmatprep.subr.mxu0 0.0
    %1170 = vmatpush1.xpose.msra.mxu0 0.0
    %1171 = vmatprep.subr.mxu0 0.0
    %1172 = vmatpush1.xpose.msra.mxu0 0.0
    %1173 = vmatprep.subr.mxu0 0.0
    %1174 = vmatpush1.xpose.msra.mxu0 0.0
    %1175 = vmatprep.subr.mxu0 0.0
    %1176 = vmatpush1.xpose.msra.mxu0 0.0
    %1177 = vmatprep.subr.mxu0 0.0
    %1178 = vmatpush1.xpose.msra.mxu0 0.0
    %1179 = vmatprep.mubr.f32.mxu0 0.0
    %1180 = vmatmul.mubr.f32.gmra.mrb[0].mxu0 %v1111
    %v1181 = vpop.f32.mrb[0].mxu0
    %v1182 = vadd.f32 0.0, %v1181
    %v1183 = vpop.f32.mrb[0].mxu0
    %1184 = vdwg.mxu0
    %v1185 = vsel %vm444, %v359, 0
    %v1187 = vsel %vm444, %v389, 0
    %1189 = vmatprep.subr.mxu0 0.0
    %1190 = vmatpush1.xpose.msra.mxu0 %v1187
    %1191 = vmatprep.subr.mxu0 0.0
    %1192 = vmatpush1.xpose.msra.mxu0 0.0
    %1193 = vmatprep.subr.mxu0 0.0
    %1194 = vmatpush1.xpose.msra.mxu0 0.0
    %1195 = vmatprep.subr.mxu0 0.0
    %1196 = vmatpush1.xpose.msra.mxu0 0.0
    %1197 = vmatprep.subr.mxu0 0.0
    %1198 = vmatpush1.xpose.msra.mxu0 0.0
    %1199 = vmatprep.subr.mxu0 0.0
    %1200 = vmatpush1.xpose.msra.mxu0 0.0
    %1201 = vmatprep.subr.mxu0 0.0
    %1202 = vmatpush1.xpose.msra.mxu0 0.0
    %1203 = vmatprep.subr.mxu0 0.0
    %1204 = vmatpush1.xpose.msra.mxu0 0.0
    %1205 = vmatprep.subr.mxu0 0.0
    %1206 = vmatpush1.xpose.msra.mxu0 0.0
    %1207 = vmatprep.subr.mxu0 0.0
    %1208 = vmatpush1.xpose.msra.mxu0 0.0
    %1209 = vmatprep.subr.mxu0 0.0
    %1210 = vmatpush1.xpose.msra.mxu0 0.0
    %1211 = vmatprep.subr.mxu0 0.0
    %1212 = vmatpush1.xpose.msra.mxu0 0.0
    %1213 = vmatprep.subr.mxu0 0.0
    %1214 = vmatpush1.xpose.msra.mxu0 0.0
    %1215 = vmatprep.subr.mxu0 0.0
    %1216 = vmatpush1.xpose.msra.mxu0 0.0
    %1217 = vmatprep.subr.mxu0 0.0
    %1218 = vmatpush1.xpose.msra.mxu0 0.0
    %1219 = vmatprep.subr.mxu0 0.0
    %1220 = vmatpush1.xpose.msra.mxu0 0.0
    %1221 = vmatprep.subr.mxu0 0.0
    %1222 = vmatpush1.xpose.msra.mxu0 0.0
    %1223 = vmatprep.subr.mxu0 0.0
    %1224 = vmatpush1.xpose.msra.mxu0 0.0
    %1225 = vmatprep.subr.mxu0 0.0
    %1226 = vmatpush1.xpose.msra.mxu0 0.0
    %1227 = vmatprep.subr.mxu0 0.0
    %1228 = vmatpush1.xpose.msra.mxu0 0.0
    %1229 = vmatprep.subr.mxu0 0.0
    %1230 = vmatpush1.xpose.msra.mxu0 0.0
    %1231 = vmatprep.subr.mxu0 0.0
    %1232 = vmatpush1.xpose.msra.mxu0 0.0
    %1233 = vmatprep.subr.mxu0 0.0
    %1234 = vmatpush1.xpose.msra.mxu0 0.0
    %1235 = vmatprep.subr.mxu0 0.0
    %1236 = vmatpush1.xpose.msra.mxu0 0.0
    %1237 = vmatprep.subr.mxu0 0.0
    %1238 = vmatpush1.xpose.msra.mxu0 0.0
    %1239 = vmatprep.subr.mxu0 0.0
    %1240 = vmatpush1.xpose.msra.mxu0 0.0
    %1241 = vmatprep.subr.mxu0 0.0
    %1242 = vmatpush1.xpose.msra.mxu0 0.0
    %1243 = vmatprep.subr.mxu0 0.0
    %1244 = vmatpush1.xpose.msra.mxu0 0.0
    %1245 = vmatprep.subr.mxu0 0.0
    %1246 = vmatpush1.xpose.msra.mxu0 0.0
    %1247 = vmatprep.subr.mxu0 0.0
    %1248 = vmatpush1.xpose.msra.mxu0 0.0
    %1249 = vmatprep.subr.mxu0 0.0
    %1250 = vmatpush1.xpose.msra.mxu0 0.0
    %1251 = vmatprep.subr.mxu0 0.0
    %1252 = vmatpush1.xpose.msra.mxu0 0.0
    %1253 = vmatprep.mubr.f32.mxu0 0.0
    %1254 = vmatmul.mubr.f32.gmra.mrb[0].mxu0 %v1185
    %v1255 = vpop.f32.mrb[0].mxu0
    %v1256 = vadd.f32 0.0, %v1255
    %v1257 = vpop.f32.mrb[0].mxu0
    %1258 = vdwg.mxu0
    %v1259 = vsel %vm444, %v361, 0
    %v1261 = vsel %vm444, %v391, 0
    %1263 = vmatprep.subr.mxu0 0.0
    %1264 = vmatpush1.xpose.msra.mxu0 %v1261
    %1265 = vmatprep.subr.mxu0 0.0
    %1266 = vmatpush1.xpose.msra.mxu0 0.0
    %1267 = vmatprep.subr.mxu0 0.0
    %1268 = vmatpush1.xpose.msra.mxu0 0.0
    %1269 = vmatprep.subr.mxu0 0.0
    %1270 = vmatpush1.xpose.msra.mxu0 0.0
    %1271 = vmatprep.subr.mxu0 0.0
    %1272 = vmatpush1.xpose.msra.mxu0 0.0
    %1273 = vmatprep.subr.mxu0 0.0
    %1274 = vmatpush1.xpose.msra.mxu0 0.0
    %1275 = vmatprep.subr.mxu0 0.0
    %1276 = vmatpush1.xpose.msra.mxu0 0.0
    %1277 = vmatprep.subr.mxu0 0.0
    %1278 = vmatpush1.xpose.msra.mxu0 0.0
    %1279 = vmatprep.subr.mxu0 0.0
    %1280 = vmatpush1.xpose.msra.mxu0 0.0
    %1281 = vmatprep.subr.mxu0 0.0
    %1282 = vmatpush1.xpose.msra.mxu0 0.0
    %1283 = vmatprep.subr.mxu0 0.0
    %1284 = vmatpush1.xpose.msra.mxu0 0.0
    %1285 = vmatprep.subr.mxu0 0.0
    %1286 = vmatpush1.xpose.msra.mxu0 0.0
    %1287 = vmatprep.subr.mxu0 0.0
    %1288 = vmatpush1.xpose.msra.mxu0 0.0
    %1289 = vmatprep.subr.mxu0 0.0
    %1290 = vmatpush1.xpose.msra.mxu0 0.0
    %1291 = vmatprep.subr.mxu0 0.0
    %1292 = vmatpush1.xpose.msra.mxu0 0.0
    %1293 = vmatprep.subr.mxu0 0.0
    %1294 = vmatpush1.xpose.msra.mxu0 0.0
    %1295 = vmatprep.subr.mxu0 0.0
    %1296 = vmatpush1.xpose.msra.mxu0 0.0
    %1297 = vmatprep.subr.mxu0 0.0
    %1298 = vmatpush1.xpose.msra.mxu0 0.0
    %1299 = vmatprep.subr.mxu0 0.0
    %1300 = vmatpush1.xpose.msra.mxu0 0.0
    %1301 = vmatprep.subr.mxu0 0.0
    %1302 = vmatpush1.xpose.msra.mxu0 0.0
    %1303 = vmatprep.subr.mxu0 0.0
    %1304 = vmatpush1.xpose.msra.mxu0 0.0
    %1305 = vmatprep.subr.mxu0 0.0
    %1306 = vmatpush1.xpose.msra.mxu0 0.0
    %1307 = vmatprep.subr.mxu0 0.0
    %1308 = vmatpush1.xpose.msra.mxu0 0.0
    %1309 = vmatprep.subr.mxu0 0.0
    %1310 = vmatpush1.xpose.msra.mxu0 0.0
    %1311 = vmatprep.subr.mxu0 0.0
    %1312 = vmatpush1.xpose.msra.mxu0 0.0
    %1313 = vmatprep.subr.mxu0 0.0
    %1314 = vmatpush1.xpose.msra.mxu0 0.0
    %1315 = vmatprep.subr.mxu0 0.0
    %1316 = vmatpush1.xpose.msra.mxu0 0.0
    %1317 = vmatprep.subr.mxu0 0.0
    %1318 = vmatpush1.xpose.msra.mxu0 0.0
    %1319 = vmatprep.subr.mxu0 0.0
    %1320 = vmatpush1.xpose.msra.mxu0 0.0
    %1321 = vmatprep.subr.mxu0 0.0
    %1322 = vmatpush1.xpose.msra.mxu0 0.0
    %1323 = vmatprep.subr.mxu0 0.0
    %1324 = vmatpush1.xpose.msra.mxu0 0.0
    %1325 = vmatprep.subr.mxu0 0.0
    %1326 = vmatpush1.xpose.msra.mxu0 0.0
    %1327 = vmatprep.mubr.f32.mxu0 0.0
    %1328 = vmatmul.mubr.f32.gmra.mrb[0].mxu0 %v1259
    %v1329 = vpop.f32.mrb[0].mxu0
    %v1330 = vadd.f32 0.0, %v1329
    %v1331 = vpop.f32.mrb[0].mxu0
    %1332 = vdwg.mxu0
    %v1333 = vsel %vm444, %v363, 0
    %v1335 = vsel %vm444, %v393, 0
    %1337 = vmatprep.subr.mxu0 0.0
    %1338 = vmatpush1.xpose.msra.mxu0 %v1335
    %1339 = vmatprep.subr.mxu0 0.0
    %1340 = vmatpush1.xpose.msra.mxu0 0.0
    %1341 = vmatprep.subr.mxu0 0.0
    %1342 = vmatpush1.xpose.msra.mxu0 0.0
    %1343 = vmatprep.subr.mxu0 0.0
    %1344 = vmatpush1.xpose.msra.mxu0 0.0
    %1345 = vmatprep.subr.mxu0 0.0
    %1346 = vmatpush1.xpose.msra.mxu0 0.0
    %1347 = vmatprep.subr.mxu0 0.0
    %1348 = vmatpush1.xpose.msra.mxu0 0.0
    %1349 = vmatprep.subr.mxu0 0.0
    %1350 = vmatpush1.xpose.msra.mxu0 0.0
    %1351 = vmatprep.subr.mxu0 0.0
    %1352 = vmatpush1.xpose.msra.mxu0 0.0
    %1353 = vmatprep.subr.mxu0 0.0
    %1354 = vmatpush1.xpose.msra.mxu0 0.0
    %1355 = vmatprep.subr.mxu0 0.0
    %1356 = vmatpush1.xpose.msra.mxu0 0.0
    %1357 = vmatprep.subr.mxu0 0.0
    %1358 = vmatpush1.xpose.msra.mxu0 0.0
    %1359 = vmatprep.subr.mxu0 0.0
    %1360 = vmatpush1.xpose.msra.mxu0 0.0
    %1361 = vmatprep.subr.mxu0 0.0
    %1362 = vmatpush1.xpose.msra.mxu0 0.0
    %1363 = vmatprep.subr.mxu0 0.0
    %1364 = vmatpush1.xpose.msra.mxu0 0.0
    %1365 = vmatprep.subr.mxu0 0.0
    %1366 = vmatpush1.xpose.msra.mxu0 0.0
    %1367 = vmatprep.subr.mxu0 0.0
    %1368 = vmatpush1.xpose.msra.mxu0 0.0
    %1369 = vmatprep.subr.mxu0 0.0
    %1370 = vmatpush1.xpose.msra.mxu0 0.0
    %1371 = vmatprep.subr.mxu0 0.0
    %1372 = vmatpush1.xpose.msra.mxu0 0.0
    %1373 = vmatprep.subr.mxu0 0.0
    %1374 = vmatpush1.xpose.msra.mxu0 0.0
    %1375 = vmatprep.subr.mxu0 0.0
    %1376 = vmatpush1.xpose.msra.mxu0 0.0
    %1377 = vmatprep.subr.mxu0 0.0
    %1378 = vmatpush1.xpose.msra.mxu0 0.0
    %1379 = vmatprep.subr.mxu0 0.0
    %1380 = vmatpush1.xpose.msra.mxu0 0.0
    %1381 = vmatprep.subr.mxu0 0.0
    %1382 = vmatpush1.xpose.msra.mxu0 0.0
    %1383 = vmatprep.subr.mxu0 0.0
    %1384 = vmatpush1.xpose.msra.mxu0 0.0
    %1385 = vmatprep.subr.mxu0 0.0
    %1386 = vmatpush1.xpose.msra.mxu0 0.0
    %1387 = vmatprep.subr.mxu0 0.0
    %1388 = vmatpush1.xpose.msra.mxu0 0.0
    %1389 = vmatprep.subr.mxu0 0.0
    %1390 = vmatpush1.xpose.msra.mxu0 0.0
    %1391 = vmatprep.subr.mxu0 0.0
    %1392 = vmatpush1.xpose.msra.mxu0 0.0
    %1393 = vmatprep.subr.mxu0 0.0
    %1394 = vmatpush1.xpose.msra.mxu0 0.0
    %1395 = vmatprep.subr.mxu0 0.0
    %1396 = vmatpush1.xpose.msra.mxu0 0.0
    %1397 = vmatprep.subr.mxu0 0.0
    %1398 = vmatpush1.xpose.msra.mxu0 0.0
    %1399 = vmatprep.subr.mxu0 0.0
    %1400 = vmatpush1.xpose.msra.mxu0 0.0
    %1401 = vmatprep.mubr.f32.mxu0 0.0
    %1402 = vmatmul.mubr.f32.gmra.mrb[0].mxu0 %v1333
    %v1403 = vpop.f32.mrb[0].mxu0
    %v1404 = vadd.f32 0.0, %v1403
    %v1405 = vpop.f32.mrb[0].mxu0
    %1406 = vdwg.mxu0
    %v1407 = vsel %vm444, %v365, 0
    %v1409 = vsel %vm444, %v395, 0
    %1411 = vmatprep.subr.mxu0 0.0
    %1412 = vmatpush1.xpose.msra.mxu0 %v1409
    %1413 = vmatprep.subr.mxu0 0.0
    %1414 = vmatpush1.xpose.msra.mxu0 0.0
    %1415 = vmatprep.subr.mxu0 0.0
    %1416 = vmatpush1.xpose.msra.mxu0 0.0
    %1417 = vmatprep.subr.mxu0 0.0
    %1418 = vmatpush1.xpose.msra.mxu0 0.0
    %1419 = vmatprep.subr.mxu0 0.0
    %1420 = vmatpush1.xpose.msra.mxu0 0.0
    %1421 = vmatprep.subr.mxu0 0.0
    %1422 = vmatpush1.xpose.msra.mxu0 0.0
    %1423 = vmatprep.subr.mxu0 0.0
    %1424 = vmatpush1.xpose.msra.mxu0 0.0
    %1425 = vmatprep.subr.mxu0 0.0
    %1426 = vmatpush1.xpose.msra.mxu0 0.0
    %1427 = vmatprep.subr.mxu0 0.0
    %1428 = vmatpush1.xpose.msra.mxu0 0.0
    %1429 = vmatprep.subr.mxu0 0.0
    %1430 = vmatpush1.xpose.msra.mxu0 0.0
    %1431 = vmatprep.subr.mxu0 0.0
    %1432 = vmatpush1.xpose.msra.mxu0 0.0
    %1433 = vmatprep.subr.mxu0 0.0
    %1434 = vmatpush1.xpose.msra.mxu0 0.0
    %1435 = vmatprep.subr.mxu0 0.0
    %1436 = vmatpush1.xpose.msra.mxu0 0.0
    %1437 = vmatprep.subr.mxu0 0.0
    %1438 = vmatpush1.xpose.msra.mxu0 0.0
    %1439 = vmatprep.subr.mxu0 0.0
    %1440 = vmatpush1.xpose.msra.mxu0 0.0
    %1441 = vmatprep.subr.mxu0 0.0
    %1442 = vmatpush1.xpose.msra.mxu0 0.0
    %1443 = vmatprep.subr.mxu0 0.0
    %1444 = vmatpush1.xpose.msra.mxu0 0.0
    %1445 = vmatprep.subr.mxu0 0.0
    %1446 = vmatpush1.xpose.msra.mxu0 0.0
    %1447 = vmatprep.subr.mxu0 0.0
    %1448 = vmatpush1.xpose.msra.mxu0 0.0
    %1449 = vmatprep.subr.mxu0 0.0
    %1450 = vmatpush1.xpose.msra.mxu0 0.0
    %1451 = vmatprep.subr.mxu0 0.0
    %1452 = vmatpush1.xpose.msra.mxu0 0.0
    %1453 = vmatprep.subr.mxu0 0.0
    %1454 = vmatpush1.xpose.msra.mxu0 0.0
    %1455 = vmatprep.subr.mxu0 0.0
    %1456 = vmatpush1.xpose.msra.mxu0 0.0
    %1457 = vmatprep.subr.mxu0 0.0
    %1458 = vmatpush1.xpose.msra.mxu0 0.0
    %1459 = vmatprep.subr.mxu0 0.0
    %1460 = vmatpush1.xpose.msra.mxu0 0.0
    %1461 = vmatprep.subr.mxu0 0.0
    %1462 = vmatpush1.xpose.msra.mxu0 0.0
    %1463 = vmatprep.subr.mxu0 0.0
    %1464 = vmatpush1.xpose.msra.mxu0 0.0
    %1465 = vmatprep.subr.mxu0 0.0
    %1466 = vmatpush1.xpose.msra.mxu0 0.0
    %1467 = vmatprep.subr.mxu0 0.0
    %1468 = vmatpush1.xpose.msra.mxu0 0.0
    %1469 = vmatprep.subr.mxu0 0.0
    %1470 = vmatpush1.xpose.msra.mxu0 0.0
    %1471 = vmatprep.subr.mxu0 0.0
    %1472 = vmatpush1.xpose.msra.mxu0 0.0
    %1473 = vmatprep.subr.mxu0 0.0
    %1474 = vmatpush1.xpose.msra.mxu0 0.0
    %1475 = vmatprep.mubr.f32.mxu0 0.0
    %1476 = vmatmul.mubr.f32.gmra.mrb[0].mxu0 %v1407
    %v1477 = vpop.f32.mrb[0].mxu0
    %v1478 = vadd.f32 0.0, %v1477
    %v1479 = vpop.f32.mrb[0].mxu0
    %1480 = vdwg.mxu0
    %v1481 = vsel %vm444, %v367, 0
    %v1483 = vsel %vm444, %v397, 0
    %1485 = vmatprep.subr.mxu0 0.0
    %1486 = vmatpush1.xpose.msra.mxu0 %v1483
    %1487 = vmatprep.subr.mxu0 0.0
    %1488 = vmatpush1.xpose.msra.mxu0 0.0
    %1489 = vmatprep.subr.mxu0 0.0
    %1490 = vmatpush1.xpose.msra.mxu0 0.0
    %1491 = vmatprep.subr.mxu0 0.0
    %1492 = vmatpush1.xpose.msra.mxu0 0.0
    %1493 = vmatprep.subr.mxu0 0.0
    %1494 = vmatpush1.xpose.msra.mxu0 0.0
    %1495 = vmatprep.subr.mxu0 0.0
    %1496 = vmatpush1.xpose.msra.mxu0 0.0
    %1497 = vmatprep.subr.mxu0 0.0
    %1498 = vmatpush1.xpose.msra.mxu0 0.0
    %1499 = vmatprep.subr.mxu0 0.0
    %1500 = vmatpush1.xpose.msra.mxu0 0.0
    %1501 = vmatprep.subr.mxu0 0.0
    %1502 = vmatpush1.xpose.msra.mxu0 0.0
    %1503 = vmatprep.subr.mxu0 0.0
    %1504 = vmatpush1.xpose.msra.mxu0 0.0
    %1505 = vmatprep.subr.mxu0 0.0
    %1506 = vmatpush1.xpose.msra.mxu0 0.0
    %1507 = vmatprep.subr.mxu0 0.0
    %1508 = vmatpush1.xpose.msra.mxu0 0.0
    %1509 = vmatprep.subr.mxu0 0.0
    %1510 = vmatpush1.xpose.msra.mxu0 0.0
    %1511 = vmatprep.subr.mxu0 0.0
    %1512 = vmatpush1.xpose.msra.mxu0 0.0
    %1513 = vmatprep.subr.mxu0 0.0
    %1514 = vmatpush1.xpose.msra.mxu0 0.0
    %1515 = vmatprep.subr.mxu0 0.0
    %1516 = vmatpush1.xpose.msra.mxu0 0.0
    %1517 = vmatprep.subr.mxu0 0.0
    %1518 = vmatpush1.xpose.msra.mxu0 0.0
    %1519 = vmatprep.subr.mxu0 0.0
    %1520 = vmatpush1.xpose.msra.mxu0 0.0
    %1521 = vmatprep.subr.mxu0 0.0
    %1522 = vmatpush1.xpose.msra.mxu0 0.0
    %1523 = vmatprep.subr.mxu0 0.0
    %1524 = vmatpush1.xpose.msra.mxu0 0.0
    %1525 = vmatprep.subr.mxu0 0.0
    %1526 = vmatpush1.xpose.msra.mxu0 0.0
    %1527 = vmatprep.subr.mxu0 0.0
    %1528 = vmatpush1.xpose.msra.mxu0 0.0
    %1529 = vmatprep.subr.mxu0 0.0
    %1530 = vmatpush1.xpose.msra.mxu0 0.0
    %1531 = vmatprep.subr.mxu0 0.0
    %1532 = vmatpush1.xpose.msra.mxu0 0.0
    %1533 = vmatprep.subr.mxu0 0.0
    %1534 = vmatpush1.xpose.msra.mxu0 0.0
    %1535 = vmatprep.subr.mxu0 0.0
    %1536 = vmatpush1.xpose.msra.mxu0 0.0
    %1537 = vmatprep.subr.mxu0 0.0
    %1538 = vmatpush1.xpose.msra.mxu0 0.0
    %1539 = vmatprep.subr.mxu0 0.0
    %1540 = vmatpush1.xpose.msra.mxu0 0.0
    %1541 = vmatprep.subr.mxu0 0.0
    %1542 = vmatpush1.xpose.msra.mxu0 0.0
    %1543 = vmatprep.subr.mxu0 0.0
    %1544 = vmatpush1.xpose.msra.mxu0 0.0
    %1545 = vmatprep.subr.mxu0 0.0
    %1546 = vmatpush1.xpose.msra.mxu0 0.0
    %1547 = vmatprep.subr.mxu0 0.0
    %1548 = vmatpush1.xpose.msra.mxu0 0.0
    %1549 = vmatprep.mubr.f32.mxu0 0.0
    %1550 = vmatmul.mubr.f32.gmra.mrb[0].mxu0 %v1481
    %v1551 = vpop.f32.mrb[0].mxu0
    %v1552 = vadd.f32 0.0, %v1551
    %v1553 = vpop.f32.mrb[0].mxu0
    %1554 = vdwg.mxu0
    %v1555 = vsel %vm444, %v369, 0
    %v1557 = vsel %vm444, %v399, 0
    %1559 = vmatprep.subr.mxu0 0.0
    %1560 = vmatpush1.xpose.msra.mxu0 %v1557
    %1561 = vmatprep.subr.mxu0 0.0
    %1562 = vmatpush1.xpose.msra.mxu0 0.0
    %1563 = vmatprep.subr.mxu0 0.0
    %1564 = vmatpush1.xpose.msra.mxu0 0.0
    %1565 = vmatprep.subr.mxu0 0.0
    %1566 = vmatpush1.xpose.msra.mxu0 0.0
    %1567 = vmatprep.subr.mxu0 0.0
    %1568 = vmatpush1.xpose.msra.mxu0 0.0
    %1569 = vmatprep.subr.mxu0 0.0
    %1570 = vmatpush1.xpose.msra.mxu0 0.0
    %1571 = vmatprep.subr.mxu0 0.0
    %1572 = vmatpush1.xpose.msra.mxu0 0.0
    %1573 = vmatprep.subr.mxu0 0.0
    %1574 = vmatpush1.xpose.msra.mxu0 0.0
    %1575 = vmatprep.subr.mxu0 0.0
    %1576 = vmatpush1.xpose.msra.mxu0 0.0
    %1577 = vmatprep.subr.mxu0 0.0
    %1578 = vmatpush1.xpose.msra.mxu0 0.0
    %1579 = vmatprep.subr.mxu0 0.0
    %1580 = vmatpush1.xpose.msra.mxu0 0.0
    %1581 = vmatprep.subr.mxu0 0.0
    %1582 = vmatpush1.xpose.msra.mxu0 0.0
    %1583 = vmatprep.subr.mxu0 0.0
    %1584 = vmatpush1.xpose.msra.mxu0 0.0
    %1585 = vmatprep.subr.mxu0 0.0
    %1586 = vmatpush1.xpose.msra.mxu0 0.0
    %1587 = vmatprep.subr.mxu0 0.0
    %1588 = vmatpush1.xpose.msra.mxu0 0.0
    %1589 = vmatprep.subr.mxu0 0.0
    %1590 = vmatpush1.xpose.msra.mxu0 0.0
    %1591 = vmatprep.subr.mxu0 0.0
    %1592 = vmatpush1.xpose.msra.mxu0 0.0
    %1593 = vmatprep.subr.mxu0 0.0
    %1594 = vmatpush1.xpose.msra.mxu0 0.0
    %1595 = vmatprep.subr.mxu0 0.0
    %1596 = vmatpush1.xpose.msra.mxu0 0.0
    %1597 = vmatprep.subr.mxu0 0.0
    %1598 = vmatpush1.xpose.msra.mxu0 0.0
    %1599 = vmatprep.subr.mxu0 0.0
    %1600 = vmatpush1.xpose.msra.mxu0 0.0
    %1601 = vmatprep.subr.mxu0 0.0
    %1602 = vmatpush1.xpose.msra.mxu0 0.0
    %1603 = vmatprep.subr.mxu0 0.0
    %1604 = vmatpush1.xpose.msra.mxu0 0.0
    %1605 = vmatprep.subr.mxu0 0.0
    %1606 = vmatpush1.xpose.msra.mxu0 0.0
    %1607 = vmatprep.subr.mxu0 0.0
    %1608 = vmatpush1.xpose.msra.mxu0 0.0
    %1609 = vmatprep.subr.mxu0 0.0
    %1610 = vmatpush1.xpose.msra.mxu0 0.0
    %1611 = vmatprep.subr.mxu0 0.0
    %1612 = vmatpush1.xpose.msra.mxu0 0.0
    %1613 = vmatprep.subr.mxu0 0.0
    %1614 = vmatpush1.xpose.msra.mxu0 0.0
    %1615 = vmatprep.subr.mxu0 0.0
    %1616 = vmatpush1.xpose.msra.mxu0 0.0
    %1617 = vmatprep.subr.mxu0 0.0
    %1618 = vmatpush1.xpose.msra.mxu0 0.0
    %1619 = vmatprep.subr.mxu0 0.0
    %1620 = vmatpush1.xpose.msra.mxu0 0.0
    %1621 = vmatprep.subr.mxu0 0.0
    %1622 = vmatpush1.xpose.msra.mxu0 0.0
    %1623 = vmatprep.mubr.f32.mxu0 0.0
    %1624 = vmatmul.mubr.f32.gmra.mrb[0].mxu0 %v1555
    %v1625 = vpop.f32.mrb[0].mxu0
    %v1626 = vadd.f32 0.0, %v1625
    %v1627 = vpop.f32.mrb[0].mxu0
    %1628 = vdwg.mxu0
    %vm1629 = vcmask 64512
    %v1630 = vsel %vm1629, %v516, -inf
    %1631 = vmax.xlane.f32.xlu0 %v1630
    %v1632 = vpop.xlane.xlu0 %1631
    %v1633 = vsel %vm1629, %v590, -inf
    %1634 = vmax.xlane.f32.xlu0 %v1633
    %v1635 = vpop.xlane.xlu0 %1634
    %v1636 = vsel %vm1629, %v664, -inf
    %1637 = vmax.xlane.f32.xlu0 %v1636
    %v1638 = vpop.xlane.xlu0 %1637
    %v1639 = vsel %vm1629, %v738, -inf
    %1640 = vmax.xlane.f32.xlu0 %v1639
    %v1641 = vpop.xlane.xlu0 %1640
    %v1642 = vsel %vm1629, %v812, -inf
    %1643 = vmax.xlane.f32.xlu0 %v1642
    %v1644 = vpop.xlane.xlu0 %1643
    %v1645 = vsel %vm1629, %v886, -inf
    %1646 = vmax.xlane.f32.xlu0 %v1645
    %v1647 = vpop.xlane.xlu0 %1646
    %v1648 = vsel %vm1629, %v960, -inf
    %1649 = vmax.xlane.f32.xlu0 %v1648
    %v1650 = vpop.xlane.xlu0 %1649
    %v1651 = vsel %vm1629, %v1034, -inf
    %1652 = vmax.xlane.f32.xlu0 %v1651
    %v1653 = vpop.xlane.xlu0 %1652
    %v1654 = vsel %vm1629, %v1108, -inf
    %1655 = vmax.xlane.f32.xlu0 %v1654
    %v1656 = vpop.xlane.xlu0 %1655
    %v1657 = vsel %vm1629, %v1182, -inf
    %1658 = vmax.xlane.f32.xlu0 %v1657
    %v1659 = vpop.xlane.xlu0 %1658
    %v1660 = vsel %vm1629, %v1256, -inf
    %1661 = vmax.xlane.f32.xlu0 %v1660
    %v1662 = vpop.xlane.xlu0 %1661
    %v1663 = vsel %vm1629, %v1330, -inf
    %1664 = vmax.xlane.f32.xlu0 %v1663
    %v1665 = vpop.xlane.xlu0 %1664
    %v1666 = vsel %vm1629, %v1404, -inf
    %1667 = vmax.xlane.f32.xlu0 %v1666
    %v1668 = vpop.xlane.xlu0 %1667
    %v1669 = vsel %vm1629, %v1478, -inf
    %1670 = vmax.xlane.f32.xlu0 %v1669
    %v1671 = vpop.xlane.xlu0 %1670
    %v1672 = vsel %vm1629, %v1552, -inf
    %1673 = vmax.xlane.f32.xlu0 %v1672
    %v1674 = vpop.xlane.xlu0 %1673
    %v1675 = vsel %vm1629, %v1626, -inf
    %1676 = vmax.xlane.f32.xlu0 %v1675
    %v1677 = vpop.xlane.xlu0 %1676
    %v1678 = vsub.f32 %v516, %v1632
    %v1679 = vsub.f32 %v590, %v1635
    %v1680 = vsub.f32 %v664, %v1638
    %v1681 = vsub.f32 %v738, %v1641
    %v1682 = vsub.f32 %v812, %v1644
    %v1683 = vsub.f32 %v886, %v1647
    %v1684 = vsub.f32 %v960, %v1650
    %v1685 = vsub.f32 %v1034, %v1653
    %v1686 = vsub.f32 %v1108, %v1656
    %v1687 = vsub.f32 %v1182, %v1659
    %v1688 = vsub.f32 %v1256, %v1662
    %v1689 = vsub.f32 %v1330, %v1665
    %v1690 = vsub.f32 %v1404, %v1668
    %v1691 = vsub.f32 %v1478, %v1671
    %v1692 = vsub.f32 %v1552, %v1674
    %v1693 = vsub.f32 %v1626, %v1677
    %v1694 = vmul.f32 %v1678, 1.442695
    %v1695 = vpow.pop %v1694
    %v1696 = vmul.f32 %v1679, 1.442695
    %v1697 = vpow.pop %v1696
    %v1698 = vmul.f32 %v1680, 1.442695
    %v1699 = vpow.pop %v1698
    %v1700 = vmul.f32 %v1681, 1.442695
    %v1701 = vpow.pop %v1700
    %v1702 = vmul.f32 %v1682, 1.442695
    %v1703 = vpow.pop %v1702
    %v1704 = vmul.f32 %v1683, 1.442695
    %v1705 = vpow.pop %v1704
    %v1706 = vmul.f32 %v1684, 1.442695
    %v1707 = vpow.pop %v1706
    %v1708 = vmul.f32 %v1685, 1.442695
    %v1709 = vpow.pop %v1708
    %v1710 = vmul.f32 %v1686, 1.442695
    %v1711 = vpow.pop %v1710
    %v1712 = vmul.f32 %v1687, 1.442695
    %v1713 = vpow.pop %v1712
    %v1714 = vmul.f32 %v1688, 1.442695
    %v1715 = vpow.pop %v1714
    %v1716 = vmul.f32 %v1689, 1.442695
    %v1717 = vpow.pop %v1716
    %v1718 = vmul.f32 %v1690, 1.442695
    %v1719 = vpow.pop %v1718
    %v1720 = vmul.f32 %v1691, 1.442695
    %v1721 = vpow.pop %v1720
    %v1722 = vmul.f32 %v1692, 1.442695
    %v1723 = vpow.pop %v1722
    %v1724 = vmul.f32 %v1693, 1.442695
    %v1725 = vpow.pop %v1724
    %v1726 = vsel %vm1629, %v1695, 0.0
    %1727 = vadd.xlane.f32.xlu0 %v1726
    %v1728 = vpop.xlane.xlu0 %1727
    %v1729 = vsel %vm1629, %v1697, 0.0
    %1730 = vadd.xlane.f32.xlu0 %v1729
    %v1731 = vpop.xlane.xlu0 %1730
    %v1732 = vsel %vm1629, %v1699, 0.0
    %1733 = vadd.xlane.f32.xlu0 %v1732
    %v1734 = vpop.xlane.xlu0 %1733
    %v1735 = vsel %vm1629, %v1701, 0.0
    %1736 = vadd.xlane.f32.xlu0 %v1735
    %v1737 = vpop.xlane.xlu0 %1736
    %v1738 = vsel %vm1629, %v1703, 0.0
    %1739 = vadd.xlane.f32.xlu0 %v1738
    %v1740 = vpop.xlane.xlu0 %1739
    %v1741 = vsel %vm1629, %v1705, 0.0
    %1742 = vadd.xlane.f32.xlu0 %v1741
    %v1743 = vpop.xlane.xlu0 %1742
    %v1744 = vsel %vm1629, %v1707, 0.0
    %1745 = vadd.xlane.f32.xlu0 %v1744
    %v1746 = vpop.xlane.xlu0 %1745
    %v1747 = vsel %vm1629, %v1709, 0.0
    %1748 = vadd.xlane.f32.xlu0 %v1747
    %v1749 = vpop.xlane.xlu0 %1748
    %v1750 = vsel %vm1629, %v1711, 0.0
    %1751 = vadd.xlane.f32.xlu0 %v1750
    %v1752 = vpop.xlane.xlu0 %1751
    %v1753 = vsel %vm1629, %v1713, 0.0
    %1754 = vadd.xlane.f32.xlu0 %v1753
    %v1755 = vpop.xlane.xlu0 %1754
    %v1756 = vsel %vm1629, %v1715, 0.0
    %1757 = vadd.xlane.f32.xlu0 %v1756
    %v1758 = vpop.xlane.xlu0 %1757
    %v1759 = vsel %vm1629, %v1717, 0.0
    %1760 = vadd.xlane.f32.xlu0 %v1759
    %v1761 = vpop.xlane.xlu0 %1760
    %v1762 = vsel %vm1629, %v1719, 0.0
    %1763 = vadd.xlane.f32.xlu0 %v1762
    %v1764 = vpop.xlane.xlu0 %1763
    %v1765 = vsel %vm1629, %v1721, 0.0
    %1766 = vadd.xlane.f32.xlu0 %v1765
    %v1767 = vpop.xlane.xlu0 %1766
    %v1768 = vsel %vm1629, %v1723, 0.0
    %1769 = vadd.xlane.f32.xlu0 %v1768
    %v1770 = vpop.xlane.xlu0 %1769
    %v1771 = vsel %vm1629, %v1725, 0.0
    %1772 = vadd.xlane.f32.xlu0 %v1771
    %v1773 = vpop.xlane.xlu0 %1772
    %v1774 = vrcp.pop %v1728
    %v1775 = vrcp.pop %v1731
    %v1776 = vrcp.pop %v1734
    %v1777 = vrcp.pop %v1737
    %v1778 = vrcp.pop %v1740
    %v1779 = vrcp.pop %v1743
    %v1780 = vrcp.pop %v1746
    %v1781 = vrcp.pop %v1749
    %v1782 = vrcp.pop %v1752
    %v1783 = vrcp.pop %v1755
    %v1784 = vrcp.pop %v1758
    %v1785 = vrcp.pop %v1761
    %v1786 = vrcp.pop %v1764
    %v1787 = vrcp.pop %v1767
    %v1788 = vrcp.pop %v1770
    %v1789 = vrcp.pop %v1773
    %v1790 = vmul.f32 %v1695, %v1774
    %v1791 = vmul.f32 %v1697, %v1775
    %v1792 = vmul.f32 %v1699, %v1776
    %v1793 = vmul.f32 %v1701, %v1777
    %v1794 = vmul.f32 %v1703, %v1778
    %v1795 = vmul.f32 %v1705, %v1779
    %v1796 = vmul.f32 %v1707, %v1780
    %v1797 = vmul.f32 %v1709, %v1781
    %v1798 = vmul.f32 %v1711, %v1782
    %v1799 = vmul.f32 %v1713, %v1783
    %v1800 = vmul.f32 %v1715, %v1784
    %v1801 = vmul.f32 %v1717, %v1785
    %v1802 = vmul.f32 %v1719, %v1786
    %v1803 = vmul.f32 %v1721, %v1787
    %v1804 = vmul.f32 %v1723, %v1788
    %v1805 = vmul.f32 %v1725, %v1789
    %v1807 = vsel %vm1629, %v1790, 0
    %1809 = vmatprep.subr.mxu0 0.0
    %1810 = vmatpush1.msra.mxu0 %v332
    %1811 = vmatprep.subr.mxu0 0.0
    %1812 = vmatpush1.msra.mxu0 0.0
    %1813 = vmatprep.subr.mxu0 0.0
    %1814 = vmatpush1.msra.mxu0 0.0
    %1815 = vmatprep.subr.mxu0 0.0
    %1816 = vmatpush1.msra.mxu0 0.0
    %1817 = vmatprep.subr.mxu0 0.0
    %1818 = vmatpush1.msra.mxu0 0.0
    %1819 = vmatprep.subr.mxu0 0.0
    %1820 = vmatpush1.msra.mxu0 0.0
    %1821 = vmatprep.subr.mxu0 0.0
    %1822 = vmatpush1.msra.mxu0 0.0
    %1823 = vmatprep.subr.mxu0 0.0
    %1824 = vmatpush1.msra.mxu0 0.0
    %1825 = vmatprep.subr.mxu0 0.0
    %1826 = vmatpush1.msra.mxu0 0.0
    %1827 = vmatprep.subr.mxu0 0.0
    %1828 = vmatpush1.msra.mxu0 0.0
    %1829 = vmatprep.subr.mxu0 0.0
    %1830 = vmatpush1.msra.mxu0 0.0
    %1831 = vmatprep.subr.mxu0 0.0
    %1832 = vmatpush1.msra.mxu0 0.0
    %1833 = vmatprep.subr.mxu0 0.0
    %1834 = vmatpush1.msra.mxu0 0.0
    %1835 = vmatprep.subr.mxu0 0.0
    %1836 = vmatpush1.msra.mxu0 0.0
    %1837 = vmatprep.subr.mxu0 0.0
    %1838 = vmatpush1.msra.mxu0 0.0
    %1839 = vmatprep.subr.mxu0 0.0
    %1840 = vmatpush1.msra.mxu0 0.0
    %1841 = vmatprep.subr.mxu0 0.0
    %1842 = vmatpush1.msra.mxu0 0.0
    %1843 = vmatprep.subr.mxu0 0.0
    %1844 = vmatpush1.msra.mxu0 0.0
    %1845 = vmatprep.subr.mxu0 0.0
    %1846 = vmatpush1.msra.mxu0 0.0
    %1847 = vmatprep.subr.mxu0 0.0
    %1848 = vmatpush1.msra.mxu0 0.0
    %1849 = vmatprep.subr.mxu0 0.0
    %1850 = vmatpush1.msra.mxu0 0.0
    %1851 = vmatprep.subr.mxu0 0.0
    %1852 = vmatpush1.msra.mxu0 0.0
    %1853 = vmatprep.subr.mxu0 0.0
    %1854 = vmatpush1.msra.mxu0 0.0
    %1855 = vmatprep.subr.mxu0 0.0
    %1856 = vmatpush1.msra.mxu0 0.0
    %1857 = vmatprep.subr.mxu0 0.0
    %1858 = vmatpush1.msra.mxu0 0.0
    %1859 = vmatprep.subr.mxu0 0.0
    %1860 = vmatpush1.msra.mxu0 0.0
    %1861 = vmatprep.subr.mxu0 0.0
    %1862 = vmatpush1.msra.mxu0 0.0
    %1863 = vmatprep.subr.mxu0 0.0
    %1864 = vmatpush1.msra.mxu0 0.0
    %1865 = vmatprep.subr.mxu0 0.0
    %1866 = vmatpush1.msra.mxu0 0.0
    %1867 = vmatprep.subr.mxu0 0.0
    %1868 = vmatpush1.msra.mxu0 0.0
    %1869 = vmatprep.subr.mxu0 0.0
    %1870 = vmatpush1.msra.mxu0 0.0
    %1871 = vmatprep.subr.mxu0 0.0
    %1872 = vmatpush1.msra.mxu0 0.0
    %1873 = vmatprep.mubr.f32.mxu0 0.0
    %1874 = vmatmul.mubr.f32.gmra.mrb[0].mxu0 %v1807
    %v1875 = vpop.f32.mrb[0].mxu0
    %v1876 = vadd.f32 0.0, %v1875
    %v1877 = vpop.f32.mrb[0].mxu0
    %1878 = vdwg.mxu0
    %v1880 = vsel %vm1629, %v1791, 0
    %1882 = vmatprep.subr.mxu0 0.0
    %1883 = vmatpush1.msra.mxu0 %v337
    %1884 = vmatprep.subr.mxu0 0.0
    %1885 = vmatpush1.msra.mxu0 0.0
    %1886 = vmatprep.subr.mxu0 0.0
    %1887 = vmatpush1.msra.mxu0 0.0
    %1888 = vmatprep.subr.mxu0 0.0
    %1889 = vmatpush1.msra.mxu0 0.0
    %1890 = vmatprep.subr.mxu0 0.0
    %1891 = vmatpush1.msra.mxu0 0.0
    %1892 = vmatprep.subr.mxu0 0.0
    %1893 = vmatpush1.msra.mxu0 0.0
    %1894 = vmatprep.subr.mxu0 0.0
    %1895 = vmatpush1.msra.mxu0 0.0
    %1896 = vmatprep.subr.mxu0 0.0
    %1897 = vmatpush1.msra.mxu0 0.0
    %1898 = vmatprep.subr.mxu0 0.0
    %1899 = vmatpush1.msra.mxu0 0.0
    %1900 = vmatprep.subr.mxu0 0.0
    %1901 = vmatpush1.msra.mxu0 0.0
    %1902 = vmatprep.subr.mxu0 0.0
    %1903 = vmatpush1.msra.mxu0 0.0
    %1904 = vmatprep.subr.mxu0 0.0
    %1905 = vmatpush1.msra.mxu0 0.0
    %1906 = vmatprep.subr.mxu0 0.0
    %1907 = vmatpush1.msra.mxu0 0.0
    %1908 = vmatprep.subr.mxu0 0.0
    %1909 = vmatpush1.msra.mxu0 0.0
    %1910 = vmatprep.subr.mxu0 0.0
    %1911 = vmatpush1.msra.mxu0 0.0
    %1912 = vmatprep.subr.mxu0 0.0
    %1913 = vmatpush1.msra.mxu0 0.0
    %1914 = vmatprep.subr.mxu0 0.0
    %1915 = vmatpush1.msra.mxu0 0.0
    %1916 = vmatprep.subr.mxu0 0.0
    %1917 = vmatpush1.msra.mxu0 0.0
    %1918 = vmatprep.subr.mxu0 0.0
    %1919 = vmatpush1.msra.mxu0 0.0
    %1920 = vmatprep.subr.mxu0 0.0
    %1921 = vmatpush1.msra.mxu0 0.0
    %1922 = vmatprep.subr.mxu0 0.0
    %1923 = vmatpush1.msra.mxu0 0.0
    %1924 = vmatprep.subr.mxu0 0.0
    %1925 = vmatpush1.msra.mxu0 0.0
    %1926 = vmatprep.subr.mxu0 0.0
    %1927 = vmatpush1.msra.mxu0 0.0
    %1928 = vmatprep.subr.mxu0 0.0
    %1929 = vmatpush1.msra.mxu0 0.0
    %1930 = vmatprep.subr.mxu0 0.0
    %1931 = vmatpush1.msra.mxu0 0.0
    %1932 = vmatprep.subr.mxu0 0.0
    %1933 = vmatpush1.msra.mxu0 0.0
    %1934 = vmatprep.subr.mxu0 0.0
    %1935 = vmatpush1.msra.mxu0 0.0
    %1936 = vmatprep.subr.mxu0 0.0
    %1937 = vmatpush1.msra.mxu0 0.0
    %1938 = vmatprep.subr.mxu0 0.0
    %1939 = vmatpush1.msra.mxu0 0.0
    %1940 = vmatprep.subr.mxu0 0.0
    %1941 = vmatpush1.msra.mxu0 0.0
    %1942 = vmatprep.subr.mxu0 0.0
    %1943 = vmatpush1.msra.mxu0 0.0
    %1944 = vmatprep.subr.mxu0 0.0
    %1945 = vmatpush1.msra.mxu0 0.0
    %1946 = vmatprep.mubr.f32.mxu0 0.0
    %1947 = vmatmul.mubr.f32.gmra.mrb[0].mxu0 %v1880
    %v1948 = vpop.f32.mrb[0].mxu0
    %v1949 = vadd.f32 0.0, %v1948
    %v1950 = vpop.f32.mrb[0].mxu0
    %1951 = vdwg.mxu0
    %v1953 = vsel %vm1629, %v1792, 0
    %1955 = vmatprep.subr.mxu0 0.0
    %1956 = vmatpush1.msra.mxu0 %v403
    %1957 = vmatprep.subr.mxu0 0.0
    %1958 = vmatpush1.msra.mxu0 0.0
    %1959 = vmatprep.subr.mxu0 0.0
    %1960 = vmatpush1.msra.mxu0 0.0
    %1961 = vmatprep.subr.mxu0 0.0
    %1962 = vmatpush1.msra.mxu0 0.0
    %1963 = vmatprep.subr.mxu0 0.0
    %1964 = vmatpush1.msra.mxu0 0.0
    %1965 = vmatprep.subr.mxu0 0.0
    %1966 = vmatpush1.msra.mxu0 0.0
    %1967 = vmatprep.subr.mxu0 0.0
    %1968 = vmatpush1.msra.mxu0 0.0
    %1969 = vmatprep.subr.mxu0 0.0
    %1970 = vmatpush1.msra.mxu0 0.0
    %1971 = vmatprep.subr.mxu0 0.0
    %1972 = vmatpush1.msra.mxu0 0.0
    %1973 = vmatprep.subr.mxu0 0.0
    %1974 = vmatpush1.msra.mxu0 0.0
    %1975 = vmatprep.subr.mxu0 0.0
    %1976 = vmatpush1.msra.mxu0 0.0
    %1977 = vmatprep.subr.mxu0 0.0
    %1978 = vmatpush1.msra.mxu0 0.0
    %1979 = vmatprep.subr.mxu0 0.0
    %1980 = vmatpush1.msra.mxu0 0.0
    %1981 = vmatprep.subr.mxu0 0.0
    %1982 = vmatpush1.msra.mxu0 0.0
    %1983 = vmatprep.subr.mxu0 0.0
    %1984 = vmatpush1.msra.mxu0 0.0
    %1985 = vmatprep.subr.mxu0 0.0
    %1986 = vmatpush1.msra.mxu0 0.0
    %1987 = vmatprep.subr.mxu0 0.0
    %1988 = vmatpush1.msra.mxu0 0.0
    %1989 = vmatprep.subr.mxu0 0.0
    %1990 = vmatpush1.msra.mxu0 0.0
    %1991 = vmatprep.subr.mxu0 0.0
    %1992 = vmatpush1.msra.mxu0 0.0
    %1993 = vmatprep.subr.mxu0 0.0
    %1994 = vmatpush1.msra.mxu0 0.0
    %1995 = vmatprep.subr.mxu0 0.0
    %1996 = vmatpush1.msra.mxu0 0.0
    %1997 = vmatprep.subr.mxu0 0.0
    %1998 = vmatpush1.msra.mxu0 0.0
    %1999 = vmatprep.subr.mxu0 0.0
    %2000 = vmatpush1.msra.mxu0 0.0
    %2001 = vmatprep.subr.mxu0 0.0
    %2002 = vmatpush1.msra.mxu0 0.0
    %2003 = vmatprep.subr.mxu0 0.0
    %2004 = vmatpush1.msra.mxu0 0.0
    %2005 = vmatprep.subr.mxu0 0.0
    %2006 = vmatpush1.msra.mxu0 0.0
    %2007 = vmatprep.subr.mxu0 0.0
    %2008 = vmatpush1.msra.mxu0 0.0
    %2009 = vmatprep.subr.mxu0 0.0
    %2010 = vmatpush1.msra.mxu0 0.0
    %2011 = vmatprep.subr.mxu0 0.0
    %2012 = vmatpush1.msra.mxu0 0.0
    %2013 = vmatprep.subr.mxu0 0.0
    %2014 = vmatpush1.msra.mxu0 0.0
    %2015 = vmatprep.subr.mxu0 0.0
    %2016 = vmatpush1.msra.mxu0 0.0
    %2017 = vmatprep.subr.mxu0 0.0
    %2018 = vmatpush1.msra.mxu0 0.0
    %2019 = vmatprep.mubr.f32.mxu0 0.0
    %2020 = vmatmul.mubr.f32.gmra.mrb[0].mxu0 %v1953
    %v2021 = vpop.f32.mrb[0].mxu0
    %v2022 = vadd.f32 0.0, %v2021
    %v2023 = vpop.f32.mrb[0].mxu0
    %2024 = vdwg.mxu0
    %v2026 = vsel %vm1629, %v1793, 0
    %2028 = vmatprep.subr.mxu0 0.0
    %2029 = vmatpush1.msra.mxu0 %v405
    %2030 = vmatprep.subr.mxu0 0.0
    %2031 = vmatpush1.msra.mxu0 0.0
    %2032 = vmatprep.subr.mxu0 0.0
    %2033 = vmatpush1.msra.mxu0 0.0
    %2034 = vmatprep.subr.mxu0 0.0
    %2035 = vmatpush1.msra.mxu0 0.0
    %2036 = vmatprep.subr.mxu0 0.0
    %2037 = vmatpush1.msra.mxu0 0.0
    %2038 = vmatprep.subr.mxu0 0.0
    %2039 = vmatpush1.msra.mxu0 0.0
    %2040 = vmatprep.subr.mxu0 0.0
    %2041 = vmatpush1.msra.mxu0 0.0
    %2042 = vmatprep.subr.mxu0 0.0
    %2043 = vmatpush1.msra.mxu0 0.0
    %2044 = vmatprep.subr.mxu0 0.0
    %2045 = vmatpush1.msra.mxu0 0.0
    %2046 = vmatprep.subr.mxu0 0.0
    %2047 = vmatpush1.msra.mxu0 0.0
    %2048 = vmatprep.subr.mxu0 0.0
    %2049 = vmatpush1.msra.mxu0 0.0
    %2050 = vmatprep.subr.mxu0 0.0
    %2051 = vmatpush1.msra.mxu0 0.0
    %2052 = vmatprep.subr.mxu0 0.0
    %2053 = vmatpush1.msra.mxu0 0.0
    %2054 = vmatprep.subr.mxu0 0.0
    %2055 = vmatpush1.msra.mxu0 0.0
    %2056 = vmatprep.subr.mxu0 0.0
    %2057 = vmatpush1.msra.mxu0 0.0
    %2058 = vmatprep.subr.mxu0 0.0
    %2059 = vmatpush1.msra.mxu0 0.0
    %2060 = vmatprep.subr.mxu0 0.0
    %2061 = vmatpush1.msra.mxu0 0.0
    %2062 = vmatprep.subr.mxu0 0.0
    %2063 = vmatpush1.msra.mxu0 0.0
    %2064 = vmatprep.subr.mxu0 0.0
    %2065 = vmatpush1.msra.mxu0 0.0
    %2066 = vmatprep.subr.mxu0 0.0
    %2067 = vmatpush1.msra.mxu0 0.0
    %2068 = vmatprep.subr.mxu0 0.0
    %2069 = vmatpush1.msra.mxu0 0.0
    %2070 = vmatprep.subr.mxu0 0.0
    %2071 = vmatpush1.msra.mxu0 0.0
    %2072 = vmatprep.subr.mxu0 0.0
    %2073 = vmatpush1.msra.mxu0 0.0
    %2074 = vmatprep.subr.mxu0 0.0
    %2075 = vmatpush1.msra.mxu0 0.0
    %2076 = vmatprep.subr.mxu0 0.0
    %2077 = vmatpush1.msra.mxu0 0.0
    %2078 = vmatprep.subr.mxu0 0.0
    %2079 = vmatpush1.msra.mxu0 0.0
    %2080 = vmatprep.subr.mxu0 0.0
    %2081 = vmatpush1.msra.mxu0 0.0
    %2082 = vmatprep.subr.mxu0 0.0
    %2083 = vmatpush1.msra.mxu0 0.0
    %2084 = vmatprep.subr.mxu0 0.0
    %2085 = vmatpush1.msra.mxu0 0.0
    %2086 = vmatprep.subr.mxu0 0.0
    %2087 = vmatpush1.msra.mxu0 0.0
    %2088 = vmatprep.subr.mxu0 0.0
    %2089 = vmatpush1.msra.mxu0 0.0
    %2090 = vmatprep.subr.mxu0 0.0
    %2091 = vmatpush1.msra.mxu0 0.0
    %2092 = vmatprep.mubr.f32.mxu0 0.0
    %2093 = vmatmul.mubr.f32.gmra.mrb[0].mxu0 %v2026
    %v2094 = vpop.f32.mrb[0].mxu0
    %v2095 = vadd.f32 0.0, %v2094
    %v2096 = vpop.f32.mrb[0].mxu0
    %2097 = vdwg.mxu0
    %v2099 = vsel %vm1629, %v1794, 0
    %2101 = vmatprep.subr.mxu0 0.0
    %2102 = vmatpush1.msra.mxu0 %v409
    %2103 = vmatprep.subr.mxu0 0.0
    %2104 = vmatpush1.msra.mxu0 0.0
    %2105 = vmatprep.subr.mxu0 0.0
    %2106 = vmatpush1.msra.mxu0 0.0
    %2107 = vmatprep.subr.mxu0 0.0
    %2108 = vmatpush1.msra.mxu0 0.0
    %2109 = vmatprep.subr.mxu0 0.0
    %2110 = vmatpush1.msra.mxu0 0.0
    %2111 = vmatprep.subr.mxu0 0.0
    %2112 = vmatpush1.msra.mxu0 0.0
    %2113 = vmatprep.subr.mxu0 0.0
    %2114 = vmatpush1.msra.mxu0 0.0
    %2115 = vmatprep.subr.mxu0 0.0
    %2116 = vmatpush1.msra.mxu0 0.0
    %2117 = vmatprep.subr.mxu0 0.0
    %2118 = vmatpush1.msra.mxu0 0.0
    %2119 = vmatprep.subr.mxu0 0.0
    %2120 = vmatpush1.msra.mxu0 0.0
    %2121 = vmatprep.subr.mxu0 0.0
    %2122 = vmatpush1.msra.mxu0 0.0
    %2123 = vmatprep.subr.mxu0 0.0
    %2124 = vmatpush1.msra.mxu0 0.0
    %2125 = vmatprep.subr.mxu0 0.0
    %2126 = vmatpush1.msra.mxu0 0.0
    %2127 = vmatprep.subr.mxu0 0.0
    %2128 = vmatpush1.msra.mxu0 0.0
    %2129 = vmatprep.subr.mxu0 0.0
    %2130 = vmatpush1.msra.mxu0 0.0
    %2131 = vmatprep.subr.mxu0 0.0
    %2132 = vmatpush1.msra.mxu0 0.0
    %2133 = vmatprep.subr.mxu0 0.0
    %2134 = vmatpush1.msra.mxu0 0.0
    %2135 = vmatprep.subr.mxu0 0.0
    %2136 = vmatpush1.msra.mxu0 0.0
    %2137 = vmatprep.subr.mxu0 0.0
    %2138 = vmatpush1.msra.mxu0 0.0
    %2139 = vmatprep.subr.mxu0 0.0
    %2140 = vmatpush1.msra.mxu0 0.0
    %2141 = vmatprep.subr.mxu0 0.0
    %2142 = vmatpush1.msra.mxu0 0.0
    %2143 = vmatprep.subr.mxu0 0.0
    %2144 = vmatpush1.msra.mxu0 0.0
    %2145 = vmatprep.subr.mxu0 0.0
    %2146 = vmatpush1.msra.mxu0 0.0
    %2147 = vmatprep.subr.mxu0 0.0
    %2148 = vmatpush1.msra.mxu0 0.0
    %2149 = vmatprep.subr.mxu0 0.0
    %2150 = vmatpush1.msra.mxu0 0.0
    %2151 = vmatprep.subr.mxu0 0.0
    %2152 = vmatpush1.msra.mxu0 0.0
    %2153 = vmatprep.subr.mxu0 0.0
    %2154 = vmatpush1.msra.mxu0 0.0
    %2155 = vmatprep.subr.mxu0 0.0
    %2156 = vmatpush1.msra.mxu0 0.0
    %2157 = vmatprep.subr.mxu0 0.0
    %2158 = vmatpush1.msra.mxu0 0.0
    %2159 = vmatprep.subr.mxu0 0.0
    %2160 = vmatpush1.msra.mxu0 0.0
    %2161 = vmatprep.subr.mxu0 0.0
    %2162 = vmatpush1.msra.mxu0 0.0
    %2163 = vmatprep.subr.mxu0 0.0
    %2164 = vmatpush1.msra.mxu0 0.0
    %2165 = vmatprep.mubr.f32.mxu0 0.0
    %2166 = vmatmul.mubr.f32.gmra.mrb[0].mxu0 %v2099
    %v2167 = vpop.f32.mrb[0].mxu0
    %v2168 = vadd.f32 0.0, %v2167
    %v2169 = vpop.f32.mrb[0].mxu0
    %2170 = vdwg.mxu0
    %v2172 = vsel %vm1629, %v1795, 0
    %2174 = vmatprep.subr.mxu0 0.0
    %2175 = vmatpush1.msra.mxu0 %v411
    %2176 = vmatprep.subr.mxu0 0.0
    %2177 = vmatpush1.msra.mxu0 0.0
    %2178 = vmatprep.subr.mxu0 0.0
    %2179 = vmatpush1.msra.mxu0 0.0
    %2180 = vmatprep.subr.mxu0 0.0
    %2181 = vmatpush1.msra.mxu0 0.0
    %2182 = vmatprep.subr.mxu0 0.0
    %2183 = vmatpush1.msra.mxu0 0.0
    %2184 = vmatprep.subr.mxu0 0.0
    %2185 = vmatpush1.msra.mxu0 0.0
    %2186 = vmatprep.subr.mxu0 0.0
    %2187 = vmatpush1.msra.mxu0 0.0
    %2188 = vmatprep.subr.mxu0 0.0
    %2189 = vmatpush1.msra.mxu0 0.0
    %2190 = vmatprep.subr.mxu0 0.0
    %2191 = vmatpush1.msra.mxu0 0.0
    %2192 = vmatprep.subr.mxu0 0.0
    %2193 = vmatpush1.msra.mxu0 0.0
    %2194 = vmatprep.subr.mxu0 0.0
    %2195 = vmatpush1.msra.mxu0 0.0
    %2196 = vmatprep.subr.mxu0 0.0
    %2197 = vmatpush1.msra.mxu0 0.0
    %2198 = vmatprep.subr.mxu0 0.0
    %2199 = vmatpush1.msra.mxu0 0.0
    %2200 = vmatprep.subr.mxu0 0.0
    %2201 = vmatpush1.msra.mxu0 0.0
    %2202 = vmatprep.subr.mxu0 0.0
    %2203 = vmatpush1.msra.mxu0 0.0
    %2204 = vmatprep.subr.mxu0 0.0
    %2205 = vmatpush1.msra.mxu0 0.0
    %2206 = vmatprep.subr.mxu0 0.0
    %2207 = vmatpush1.msra.mxu0 0.0
    %2208 = vmatprep.subr.mxu0 0.0
    %2209 = vmatpush1.msra.mxu0 0.0
    %2210 = vmatprep.subr.mxu0 0.0
    %2211 = vmatpush1.msra.mxu0 0.0
    %2212 = vmatprep.subr.mxu0 0.0
    %2213 = vmatpush1.msra.mxu0 0.0
    %2214 = vmatprep.subr.mxu0 0.0
    %2215 = vmatpush1.msra.mxu0 0.0
    %2216 = vmatprep.subr.mxu0 0.0
    %2217 = vmatpush1.msra.mxu0 0.0
    %2218 = vmatprep.subr.mxu0 0.0
    %2219 = vmatpush1.msra.mxu0 0.0
    %2220 = vmatprep.subr.mxu0 0.0
    %2221 = vmatpush1.msra.mxu0 0.0
    %2222 = vmatprep.subr.mxu0 0.0
    %2223 = vmatpush1.msra.mxu0 0.0
    %2224 = vmatprep.subr.mxu0 0.0
    %2225 = vmatpush1.msra.mxu0 0.0
    %2226 = vmatprep.subr.mxu0 0.0
    %2227 = vmatpush1.msra.mxu0 0.0
    %2228 = vmatprep.subr.mxu0 0.0
    %2229 = vmatpush1.msra.mxu0 0.0
    %2230 = vmatprep.subr.mxu0 0.0
    %2231 = vmatpush1.msra.mxu0 0.0
    %2232 = vmatprep.subr.mxu0 0.0
    %2233 = vmatpush1.msra.mxu0 0.0
    %2234 = vmatprep.subr.mxu0 0.0
    %2235 = vmatpush1.msra.mxu0 0.0
    %2236 = vmatprep.subr.mxu0 0.0
    %2237 = vmatpush1.msra.mxu0 0.0
    %2238 = vmatprep.mubr.f32.mxu0 0.0
    %2239 = vmatmul.mubr.f32.gmra.mrb[0].mxu0 %v2172
    %v2240 = vpop.f32.mrb[0].mxu0
    %v2241 = vadd.f32 0.0, %v2240
    %v2242 = vpop.f32.mrb[0].mxu0
    %2243 = vdwg.mxu0
    %v2245 = vsel %vm1629, %v1796, 0
    %2247 = vmatprep.subr.mxu0 0.0
    %2248 = vmatpush1.msra.mxu0 %v415
    %2249 = vmatprep.subr.mxu0 0.0
    %2250 = vmatpush1.msra.mxu0 0.0
    %2251 = vmatprep.subr.mxu0 0.0
    %2252 = vmatpush1.msra.mxu0 0.0
    %2253 = vmatprep.subr.mxu0 0.0
    %2254 = vmatpush1.msra.mxu0 0.0
    %2255 = vmatprep.subr.mxu0 0.0
    %2256 = vmatpush1.msra.mxu0 0.0
    %2257 = vmatprep.subr.mxu0 0.0
    %2258 = vmatpush1.msra.mxu0 0.0
    %2259 = vmatprep.subr.mxu0 0.0
    %2260 = vmatpush1.msra.mxu0 0.0
    %2261 = vmatprep.subr.mxu0 0.0
    %2262 = vmatpush1.msra.mxu0 0.0
    %2263 = vmatprep.subr.mxu0 0.0
    %2264 = vmatpush1.msra.mxu0 0.0
    %2265 = vmatprep.subr.mxu0 0.0
    %2266 = vmatpush1.msra.mxu0 0.0
    %2267 = vmatprep.subr.mxu0 0.0
    %2268 = vmatpush1.msra.mxu0 0.0
    %2269 = vmatprep.subr.mxu0 0.0
    %2270 = vmatpush1.msra.mxu0 0.0
    %2271 = vmatprep.subr.mxu0 0.0
    %2272 = vmatpush1.msra.mxu0 0.0
    %2273 = vmatprep.subr.mxu0 0.0
    %2274 = vmatpush1.msra.mxu0 0.0
    %2275 = vmatprep.subr.mxu0 0.0
    %2276 = vmatpush1.msra.mxu0 0.0
    %2277 = vmatprep.subr.mxu0 0.0
    %2278 = vmatpush1.msra.mxu0 0.0
    %2279 = vmatprep.subr.mxu0 0.0
    %2280 = vmatpush1.msra.mxu0 0.0
    %2281 = vmatprep.subr.mxu0 0.0
    %2282 = vmatpush1.msra.mxu0 0.0
    %2283 = vmatprep.subr.mxu0 0.0
    %2284 = vmatpush1.msra.mxu0 0.0
    %2285 = vmatprep.subr.mxu0 0.0
    %2286 = vmatpush1.msra.mxu0 0.0
    %2287 = vmatprep.subr.mxu0 0.0
    %2288 = vmatpush1.msra.mxu0 0.0
    %2289 = vmatprep.subr.mxu0 0.0
    %2290 = vmatpush1.msra.mxu0 0.0
    %2291 = vmatprep.subr.mxu0 0.0
    %2292 = vmatpush1.msra.mxu0 0.0
    %2293 = vmatprep.subr.mxu0 0.0
    %2294 = vmatpush1.msra.mxu0 0.0
    %2295 = vmatprep.subr.mxu0 0.0
    %2296 = vmatpush1.msra.mxu0 0.0
    %2297 = vmatprep.subr.mxu0 0.0
    %2298 = vmatpush1.msra.mxu0 0.0
    %2299 = vmatprep.subr.mxu0 0.0
    %2300 = vmatpush1.msra.mxu0 0.0
    %2301 = vmatprep.subr.mxu0 0.0
    %2302 = vmatpush1.msra.mxu0 0.0
    %2303 = vmatprep.subr.mxu0 0.0
    %2304 = vmatpush1.msra.mxu0 0.0
    %2305 = vmatprep.subr.mxu0 0.0
    %2306 = vmatpush1.msra.mxu0 0.0
    %2307 = vmatprep.subr.mxu0 0.0
    %2308 = vmatpush1.msra.mxu0 0.0
    %2309 = vmatprep.subr.mxu0 0.0
    %2310 = vmatpush1.msra.mxu0 0.0
    %2311 = vmatprep.mubr.f32.mxu0 0.0
    %2312 = vmatmul.mubr.f32.gmra.mrb[0].mxu0 %v2245
    %v2313 = vpop.f32.mrb[0].mxu0
    %v2314 = vadd.f32 0.0, %v2313
    %v2315 = vpop.f32.mrb[0].mxu0
    %2316 = vdwg.mxu0
    %v2318 = vsel %vm1629, %v1797, 0
    %2320 = vmatprep.subr.mxu0 0.0
    %2321 = vmatpush1.msra.mxu0 %v417
    %2322 = vmatprep.subr.mxu0 0.0
    %2323 = vmatpush1.msra.mxu0 0.0
    %2324 = vmatprep.subr.mxu0 0.0
    %2325 = vmatpush1.msra.mxu0 0.0
    %2326 = vmatprep.subr.mxu0 0.0
    %2327 = vmatpush1.msra.mxu0 0.0
    %2328 = vmatprep.subr.mxu0 0.0
    %2329 = vmatpush1.msra.mxu0 0.0
    %2330 = vmatprep.subr.mxu0 0.0
    %2331 = vmatpush1.msra.mxu0 0.0
    %2332 = vmatprep.subr.mxu0 0.0
    %2333 = vmatpush1.msra.mxu0 0.0
    %2334 = vmatprep.subr.mxu0 0.0
    %2335 = vmatpush1.msra.mxu0 0.0
    %2336 = vmatprep.subr.mxu0 0.0
    %2337 = vmatpush1.msra.mxu0 0.0
    %2338 = vmatprep.subr.mxu0 0.0
    %2339 = vmatpush1.msra.mxu0 0.0
    %2340 = vmatprep.subr.mxu0 0.0
    %2341 = vmatpush1.msra.mxu0 0.0
    %2342 = vmatprep.subr.mxu0 0.0
    %2343 = vmatpush1.msra.mxu0 0.0
    %2344 = vmatprep.subr.mxu0 0.0
    %2345 = vmatpush1.msra.mxu0 0.0
    %2346 = vmatprep.subr.mxu0 0.0
    %2347 = vmatpush1.msra.mxu0 0.0
    %2348 = vmatprep.subr.mxu0 0.0
    %2349 = vmatpush1.msra.mxu0 0.0
    %2350 = vmatprep.subr.mxu0 0.0
    %2351 = vmatpush1.msra.mxu0 0.0
    %2352 = vmatprep.subr.mxu0 0.0
    %2353 = vmatpush1.msra.mxu0 0.0
    %2354 = vmatprep.subr.mxu0 0.0
    %2355 = vmatpush1.msra.mxu0 0.0
    %2356 = vmatprep.subr.mxu0 0.0
    %2357 = vmatpush1.msra.mxu0 0.0
    %2358 = vmatprep.subr.mxu0 0.0
    %2359 = vmatpush1.msra.mxu0 0.0
    %2360 = vmatprep.subr.mxu0 0.0
    %2361 = vmatpush1.msra.mxu0 0.0
    %2362 = vmatprep.subr.mxu0 0.0
    %2363 = vmatpush1.msra.mxu0 0.0
    %2364 = vmatprep.subr.mxu0 0.0
    %2365 = vmatpush1.msra.mxu0 0.0
    %2366 = vmatprep.subr.mxu0 0.0
    %2367 = vmatpush1.msra.mxu0 0.0
    %2368 = vmatprep.subr.mxu0 0.0
    %2369 = vmatpush1.msra.mxu0 0.0
    %2370 = vmatprep.subr.mxu0 0.0
    %2371 = vmatpush1.msra.mxu0 0.0
    %2372 = vmatprep.subr.mxu0 0.0
    %2373 = vmatpush1.msra.mxu0 0.0
    %2374 = vmatprep.subr.mxu0 0.0
    %2375 = vmatpush1.msra.mxu0 0.0
    %2376 = vmatprep.subr.mxu0 0.0
    %2377 = vmatpush1.msra.mxu0 0.0
    %2378 = vmatprep.subr.mxu0 0.0
    %2379 = vmatpush1.msra.mxu0 0.0
    %2380 = vmatprep.subr.mxu0 0.0
    %2381 = vmatpush1.msra.mxu0 0.0
    %2382 = vmatprep.subr.mxu0 0.0
    %2383 = vmatpush1.msra.mxu0 0.0
    %2384 = vmatprep.mubr.f32.mxu0 0.0
    %2385 = vmatmul.mubr.f32.gmra.mrb[0].mxu0 %v2318
    %v2386 = vpop.f32.mrb[0].mxu0
    %v2387 = vadd.f32 0.0, %v2386
    %v2388 = vpop.f32.mrb[0].mxu0
    %2389 = vdwg.mxu0
    %v2391 = vsel %vm1629, %v1798, 0
    %2393 = vmatprep.subr.mxu0 0.0
    %2394 = vmatpush1.msra.mxu0 %v421
    %2395 = vmatprep.subr.mxu0 0.0
    %2396 = vmatpush1.msra.mxu0 0.0
    %2397 = vmatprep.subr.mxu0 0.0
    %2398 = vmatpush1.msra.mxu0 0.0
    %2399 = vmatprep.subr.mxu0 0.0
    %2400 = vmatpush1.msra.mxu0 0.0
    %2401 = vmatprep.subr.mxu0 0.0
    %2402 = vmatpush1.msra.mxu0 0.0
    %2403 = vmatprep.subr.mxu0 0.0
    %2404 = vmatpush1.msra.mxu0 0.0
    %2405 = vmatprep.subr.mxu0 0.0
    %2406 = vmatpush1.msra.mxu0 0.0
    %2407 = vmatprep.subr.mxu0 0.0
    %2408 = vmatpush1.msra.mxu0 0.0
    %2409 = vmatprep.subr.mxu0 0.0
    %2410 = vmatpush1.msra.mxu0 0.0
    %2411 = vmatprep.subr.mxu0 0.0
    %2412 = vmatpush1.msra.mxu0 0.0
    %2413 = vmatprep.subr.mxu0 0.0
    %2414 = vmatpush1.msra.mxu0 0.0
    %2415 = vmatprep.subr.mxu0 0.0
    %2416 = vmatpush1.msra.mxu0 0.0
    %2417 = vmatprep.subr.mxu0 0.0
    %2418 = vmatpush1.msra.mxu0 0.0
    %2419 = vmatprep.subr.mxu0 0.0
    %2420 = vmatpush1.msra.mxu0 0.0
    %2421 = vmatprep.subr.mxu0 0.0
    %2422 = vmatpush1.msra.mxu0 0.0
    %2423 = vmatprep.subr.mxu0 0.0
    %2424 = vmatpush1.msra.mxu0 0.0
    %2425 = vmatprep.subr.mxu0 0.0
    %2426 = vmatpush1.msra.mxu0 0.0
    %2427 = vmatprep.subr.mxu0 0.0
    %2428 = vmatpush1.msra.mxu0 0.0
    %2429 = vmatprep.subr.mxu0 0.0
    %2430 = vmatpush1.msra.mxu0 0.0
    %2431 = vmatprep.subr.mxu0 0.0
    %2432 = vmatpush1.msra.mxu0 0.0
    %2433 = vmatprep.subr.mxu0 0.0
    %2434 = vmatpush1.msra.mxu0 0.0
    %2435 = vmatprep.subr.mxu0 0.0
    %2436 = vmatpush1.msra.mxu0 0.0
    %2437 = vmatprep.subr.mxu0 0.0
    %2438 = vmatpush1.msra.mxu0 0.0
    %2439 = vmatprep.subr.mxu0 0.0
    %2440 = vmatpush1.msra.mxu0 0.0
    %2441 = vmatprep.subr.mxu0 0.0
    %2442 = vmatpush1.msra.mxu0 0.0
    %2443 = vmatprep.subr.mxu0 0.0
    %2444 = vmatpush1.msra.mxu0 0.0
    %2445 = vmatprep.subr.mxu0 0.0
    %2446 = vmatpush1.msra.mxu0 0.0
    %2447 = vmatprep.subr.mxu0 0.0
    %2448 = vmatpush1.msra.mxu0 0.0
    %2449 = vmatprep.subr.mxu0 0.0
    %2450 = vmatpush1.msra.mxu0 0.0
    %2451 = vmatprep.subr.mxu0 0.0
    %2452 = vmatpush1.msra.mxu0 0.0
    %2453 = vmatprep.subr.mxu0 0.0
    %2454 = vmatpush1.msra.mxu0 0.0
    %2455 = vmatprep.subr.mxu0 0.0
    %2456 = vmatpush1.msra.mxu0 0.0
    %2457 = vmatprep.mubr.f32.mxu0 0.0
    %2458 = vmatmul.mubr.f32.gmra.mrb[0].mxu0 %v2391
    %v2459 = vpop.f32.mrb[0].mxu0
    %v2460 = vadd.f32 0.0, %v2459
    %v2461 = vpop.f32.mrb[0].mxu0
    %2462 = vdwg.mxu0
    %v2464 = vsel %vm1629, %v1799, 0
    %2466 = vmatprep.subr.mxu0 0.0
    %2467 = vmatpush1.msra.mxu0 %v423
    %2468 = vmatprep.subr.mxu0 0.0
    %2469 = vmatpush1.msra.mxu0 0.0
    %2470 = vmatprep.subr.mxu0 0.0
    %2471 = vmatpush1.msra.mxu0 0.0
    %2472 = vmatprep.subr.mxu0 0.0
    %2473 = vmatpush1.msra.mxu0 0.0
    %2474 = vmatprep.subr.mxu0 0.0
    %2475 = vmatpush1.msra.mxu0 0.0
    %2476 = vmatprep.subr.mxu0 0.0
    %2477 = vmatpush1.msra.mxu0 0.0
    %2478 = vmatprep.subr.mxu0 0.0
    %2479 = vmatpush1.msra.mxu0 0.0
    %2480 = vmatprep.subr.mxu0 0.0
    %2481 = vmatpush1.msra.mxu0 0.0
    %2482 = vmatprep.subr.mxu0 0.0
    %2483 = vmatpush1.msra.mxu0 0.0
    %2484 = vmatprep.subr.mxu0 0.0
    %2485 = vmatpush1.msra.mxu0 0.0
    %2486 = vmatprep.subr.mxu0 0.0
    %2487 = vmatpush1.msra.mxu0 0.0
    %2488 = vmatprep.subr.mxu0 0.0
    %2489 = vmatpush1.msra.mxu0 0.0
    %2490 = vmatprep.subr.mxu0 0.0
    %2491 = vmatpush1.msra.mxu0 0.0
    %2492 = vmatprep.subr.mxu0 0.0
    %2493 = vmatpush1.msra.mxu0 0.0
    %2494 = vmatprep.subr.mxu0 0.0
    %2495 = vmatpush1.msra.mxu0 0.0
    %2496 = vmatprep.subr.mxu0 0.0
    %2497 = vmatpush1.msra.mxu0 0.0
    %2498 = vmatprep.subr.mxu0 0.0
    %2499 = vmatpush1.msra.mxu0 0.0
    %2500 = vmatprep.subr.mxu0 0.0
    %2501 = vmatpush1.msra.mxu0 0.0
    %2502 = vmatprep.subr.mxu0 0.0
    %2503 = vmatpush1.msra.mxu0 0.0
    %2504 = vmatprep.subr.mxu0 0.0
    %2505 = vmatpush1.msra.mxu0 0.0
    %2506 = vmatprep.subr.mxu0 0.0
    %2507 = vmatpush1.msra.mxu0 0.0
    %2508 = vmatprep.subr.mxu0 0.0
    %2509 = vmatpush1.msra.mxu0 0.0
    %2510 = vmatprep.subr.mxu0 0.0
    %2511 = vmatpush1.msra.mxu0 0.0
    %2512 = vmatprep.subr.mxu0 0.0
    %2513 = vmatpush1.msra.mxu0 0.0
    %2514 = vmatprep.subr.mxu0 0.0
    %2515 = vmatpush1.msra.mxu0 0.0
    %2516 = vmatprep.subr.mxu0 0.0
    %2517 = vmatpush1.msra.mxu0 0.0
    %2518 = vmatprep.subr.mxu0 0.0
    %2519 = vmatpush1.msra.mxu0 0.0
    %2520 = vmatprep.subr.mxu0 0.0
    %2521 = vmatpush1.msra.mxu0 0.0
    %2522 = vmatprep.subr.mxu0 0.0
    %2523 = vmatpush1.msra.mxu0 0.0
    %2524 = vmatprep.subr.mxu0 0.0
    %2525 = vmatpush1.msra.mxu0 0.0
    %2526 = vmatprep.subr.mxu0 0.0
    %2527 = vmatpush1.msra.mxu0 0.0
    %2528 = vmatprep.subr.mxu0 0.0
    %2529 = vmatpush1.msra.mxu0 0.0
    %2530 = vmatprep.mubr.f32.mxu0 0.0
    %2531 = vmatmul.mubr.f32.gmra.mrb[0].mxu0 %v2464
    %v2532 = vpop.f32.mrb[0].mxu0
    %v2533 = vadd.f32 0.0, %v2532
    %v2534 = vpop.f32.mrb[0].mxu0
    %2535 = vdwg.mxu0
    %v2537 = vsel %vm1629, %v1800, 0
    %2539 = vmatprep.subr.mxu0 0.0
    %2540 = vmatpush1.msra.mxu0 %v427
    %2541 = vmatprep.subr.mxu0 0.0
    %2542 = vmatpush1.msra.mxu0 0.0
    %2543 = vmatprep.subr.mxu0 0.0
    %2544 = vmatpush1.msra.mxu0 0.0
    %2545 = vmatprep.subr.mxu0 0.0
    %2546 = vmatpush1.msra.mxu0 0.0
    %2547 = vmatprep.subr.mxu0 0.0
    %2548 = vmatpush1.msra.mxu0 0.0
    %2549 = vmatprep.subr.mxu0 0.0
    %2550 = vmatpush1.msra.mxu0 0.0
    %2551 = vmatprep.subr.mxu0 0.0
    %2552 = vmatpush1.msra.mxu0 0.0
    %2553 = vmatprep.subr.mxu0 0.0
    %2554 = vmatpush1.msra.mxu0 0.0
    %2555 = vmatprep.subr.mxu0 0.0
    %2556 = vmatpush1.msra.mxu0 0.0
    %2557 = vmatprep.subr.mxu0 0.0
    %2558 = vmatpush1.msra.mxu0 0.0
    %2559 = vmatprep.subr.mxu0 0.0
    %2560 = vmatpush1.msra.mxu0 0.0
    %2561 = vmatprep.subr.mxu0 0.0
    %2562 = vmatpush1.msra.mxu0 0.0
    %2563 = vmatprep.subr.mxu0 0.0
    %2564 = vmatpush1.msra.mxu0 0.0
    %2565 = vmatprep.subr.mxu0 0.0
    %2566 = vmatpush1.msra.mxu0 0.0
    %2567 = vmatprep.subr.mxu0 0.0
    %2568 = vmatpush1.msra.mxu0 0.0
    %2569 = vmatprep.subr.mxu0 0.0
    %2570 = vmatpush1.msra.mxu0 0.0
    %2571 = vmatprep.subr.mxu0 0.0
    %2572 = vmatpush1.msra.mxu0 0.0
    %2573 = vmatprep.subr.mxu0 0.0
    %2574 = vmatpush1.msra.mxu0 0.0
    %2575 = vmatprep.subr.mxu0 0.0
    %2576 = vmatpush1.msra.mxu0 0.0
    %2577 = vmatprep.subr.mxu0 0.0
    %2578 = vmatpush1.msra.mxu0 0.0
    %2579 = vmatprep.subr.mxu0 0.0
    %2580 = vmatpush1.msra.mxu0 0.0
    %2581 = vmatprep.subr.mxu0 0.0
    %2582 = vmatpush1.msra.mxu0 0.0
    %2583 = vmatprep.subr.mxu0 0.0
    %2584 = vmatpush1.msra.mxu0 0.0
    %2585 = vmatprep.subr.mxu0 0.0
    %2586 = vmatpush1.msra.mxu0 0.0
    %2587 = vmatprep.subr.mxu0 0.0
    %2588 = vmatpush1.msra.mxu0 0.0
    %2589 = vmatprep.subr.mxu0 0.0
    %2590 = vmatpush1.msra.mxu0 0.0
    %2591 = vmatprep.subr.mxu0 0.0
    %2592 = vmatpush1.msra.mxu0 0.0
    %2593 = vmatprep.subr.mxu0 0.0
    %2594 = vmatpush1.msra.mxu0 0.0
    %2595 = vmatprep.subr.mxu0 0.0
    %2596 = vmatpush1.msra.mxu0 0.0
    %2597 = vmatprep.subr.mxu0 0.0
    %2598 = vmatpush1.msra.mxu0 0.0
    %2599 = vmatprep.subr.mxu0 0.0
    %2600 = vmatpush1.msra.mxu0 0.0
    %2601 = vmatprep.subr.mxu0 0.0
    %2602 = vmatpush1.msra.mxu0 0.0
    %2603 = vmatprep.mubr.f32.mxu0 0.0
    %2604 = vmatmul.mubr.f32.gmra.mrb[0].mxu0 %v2537
    %v2605 = vpop.f32.mrb[0].mxu0
    %v2606 = vadd.f32 0.0, %v2605
    %v2607 = vpop.f32.mrb[0].mxu0
    %2608 = vdwg.mxu0
    %v2610 = vsel %vm1629, %v1801, 0
    %2612 = vmatprep.subr.mxu0 0.0
    %2613 = vmatpush1.msra.mxu0 %v429
    %2614 = vmatprep.subr.mxu0 0.0
    %2615 = vmatpush1.msra.mxu0 0.0
    %2616 = vmatprep.subr.mxu0 0.0
    %2617 = vmatpush1.msra.mxu0 0.0
    %2618 = vmatprep.subr.mxu0 0.0
    %2619 = vmatpush1.msra.mxu0 0.0
    %2620 = vmatprep.subr.mxu0 0.0
    %2621 = vmatpush1.msra.mxu0 0.0
    %2622 = vmatprep.subr.mxu0 0.0
    %2623 = vmatpush1.msra.mxu0 0.0
    %2624 = vmatprep.subr.mxu0 0.0
    %2625 = vmatpush1.msra.mxu0 0.0
    %2626 = vmatprep.subr.mxu0 0.0
    %2627 = vmatpush1.msra.mxu0 0.0
    %2628 = vmatprep.subr.mxu0 0.0
    %2629 = vmatpush1.msra.mxu0 0.0
    %2630 = vmatprep.subr.mxu0 0.0
    %2631 = vmatpush1.msra.mxu0 0.0
    %2632 = vmatprep.subr.mxu0 0.0
    %2633 = vmatpush1.msra.mxu0 0.0
    %2634 = vmatprep.subr.mxu0 0.0
    %2635 = vmatpush1.msra.mxu0 0.0
    %2636 = vmatprep.subr.mxu0 0.0
    %2637 = vmatpush1.msra.mxu0 0.0
    %2638 = vmatprep.subr.mxu0 0.0
    %2639 = vmatpush1.msra.mxu0 0.0
    %2640 = vmatprep.subr.mxu0 0.0
    %2641 = vmatpush1.msra.mxu0 0.0
    %2642 = vmatprep.subr.mxu0 0.0
    %2643 = vmatpush1.msra.mxu0 0.0
    %2644 = vmatprep.subr.mxu0 0.0
    %2645 = vmatpush1.msra.mxu0 0.0
    %2646 = vmatprep.subr.mxu0 0.0
    %2647 = vmatpush1.msra.mxu0 0.0
    %2648 = vmatprep.subr.mxu0 0.0
    %2649 = vmatpush1.msra.mxu0 0.0
    %2650 = vmatprep.subr.mxu0 0.0
    %2651 = vmatpush1.msra.mxu0 0.0
    %2652 = vmatprep.subr.mxu0 0.0
    %2653 = vmatpush1.msra.mxu0 0.0
    %2654 = vmatprep.subr.mxu0 0.0
    %2655 = vmatpush1.msra.mxu0 0.0
    %2656 = vmatprep.subr.mxu0 0.0
    %2657 = vmatpush1.msra.mxu0 0.0
    %2658 = vmatprep.subr.mxu0 0.0
    %2659 = vmatpush1.msra.mxu0 0.0
    %2660 = vmatprep.subr.mxu0 0.0
    %2661 = vmatpush1.msra.mxu0 0.0
    %2662 = vmatprep.subr.mxu0 0.0
    %2663 = vmatpush1.msra.mxu0 0.0
    %2664 = vmatprep.subr.mxu0 0.0
    %2665 = vmatpush1.msra.mxu0 0.0
    %2666 = vmatprep.subr.mxu0 0.0
    %2667 = vmatpush1.msra.mxu0 0.0
    %2668 = vmatprep.subr.mxu0 0.0
    %2669 = vmatpush1.msra.mxu0 0.0
    %2670 = vmatprep.subr.mxu0 0.0
    %2671 = vmatpush1.msra.mxu0 0.0
    %2672 = vmatprep.subr.mxu0 0.0
    %2673 = vmatpush1.msra.mxu0 0.0
    %2674 = vmatprep.subr.mxu0 0.0
    %2675 = vmatpush1.msra.mxu0 0.0
    %2676 = vmatprep.mubr.f32.mxu0 0.0
    %2677 = vmatmul.mubr.f32.gmra.mrb[0].mxu0 %v2610
    %v2678 = vpop.f32.mrb[0].mxu0
    %v2679 = vadd.f32 0.0, %v2678
    %v2680 = vpop.f32.mrb[0].mxu0
    %2681 = vdwg.mxu0
    %v2683 = vsel %vm1629, %v1802, 0
    %2685 = vmatprep.subr.mxu0 0.0
    %2686 = vmatpush1.msra.mxu0 %v433
    %2687 = vmatprep.subr.mxu0 0.0
    %2688 = vmatpush1.msra.mxu0 0.0
    %2689 = vmatprep.subr.mxu0 0.0
    %2690 = vmatpush1.msra.mxu0 0.0
    %2691 = vmatprep.subr.mxu0 0.0
    %2692 = vmatpush1.msra.mxu0 0.0
    %2693 = vmatprep.subr.mxu0 0.0
    %2694 = vmatpush1.msra.mxu0 0.0
    %2695 = vmatprep.subr.mxu0 0.0
    %2696 = vmatpush1.msra.mxu0 0.0
    %2697 = vmatprep.subr.mxu0 0.0
    %2698 = vmatpush1.msra.mxu0 0.0
    %2699 = vmatprep.subr.mxu0 0.0
    %2700 = vmatpush1.msra.mxu0 0.0
    %2701 = vmatprep.subr.mxu0 0.0
    %2702 = vmatpush1.msra.mxu0 0.0
    %2703 = vmatprep.subr.mxu0 0.0
    %2704 = vmatpush1.msra.mxu0 0.0
    %2705 = vmatprep.subr.mxu0 0.0
    %2706 = vmatpush1.msra.mxu0 0.0
    %2707 = vmatprep.subr.mxu0 0.0
    %2708 = vmatpush1.msra.mxu0 0.0
    %2709 = vmatprep.subr.mxu0 0.0
    %2710 = vmatpush1.msra.mxu0 0.0
    %2711 = vmatprep.subr.mxu0 0.0
    %2712 = vmatpush1.msra.mxu0 0.0
    %2713 = vmatprep.subr.mxu0 0.0
    %2714 = vmatpush1.msra.mxu0 0.0
    %2715 = vmatprep.subr.mxu0 0.0
    %2716 = vmatpush1.msra.mxu0 0.0
    %2717 = vmatprep.subr.mxu0 0.0
    %2718 = vmatpush1.msra.mxu0 0.0
    %2719 = vmatprep.subr.mxu0 0.0
    %2720 = vmatpush1.msra.mxu0 0.0
    %2721 = vmatprep.subr.mxu0 0.0
    %2722 = vmatpush1.msra.mxu0 0.0
    %2723 = vmatprep.subr.mxu0 0.0
    %2724 = vmatpush1.msra.mxu0 0.0
    %2725 = vmatprep.subr.mxu0 0.0
    %2726 = vmatpush1.msra.mxu0 0.0
    %2727 = vmatprep.subr.mxu0 0.0
    %2728 = vmatpush1.msra.mxu0 0.0
    %2729 = vmatprep.subr.mxu0 0.0
    %2730 = vmatpush1.msra.mxu0 0.0
    %2731 = vmatprep.subr.mxu0 0.0
    %2732 = vmatpush1.msra.mxu0 0.0
    %2733 = vmatprep.subr.mxu0 0.0
    %2734 = vmatpush1.msra.mxu0 0.0
    %2735 = vmatprep.subr.mxu0 0.0
    %2736 = vmatpush1.msra.mxu0 0.0
    %2737 = vmatprep.subr.mxu0 0.0
    %2738 = vmatpush1.msra.mxu0 0.0
    %2739 = vmatprep.subr.mxu0 0.0
    %2740 = vmatpush1.msra.mxu0 0.0
    %2741 = vmatprep.subr.mxu0 0.0
    %2742 = vmatpush1.msra.mxu0 0.0
    %2743 = vmatprep.subr.mxu0 0.0
    %2744 = vmatpush1.msra.mxu0 0.0
    %2745 = vmatprep.subr.mxu0 0.0
    %2746 = vmatpush1.msra.mxu0 0.0
    %2747 = vmatprep.subr.mxu0 0.0
    %2748 = vmatpush1.msra.mxu0 0.0
    %2749 = vmatprep.mubr.f32.mxu0 0.0
    %2750 = vmatmul.mubr.f32.gmra.mrb[0].mxu0 %v2683
    %v2751 = vpop.f32.mrb[0].mxu0
    %v2752 = vadd.f32 0.0, %v2751
    %v2753 = vpop.f32.mrb[0].mxu0
    %2754 = vdwg.mxu0
    %v2756 = vsel %vm1629, %v1803, 0
    %2758 = vmatprep.subr.mxu0 0.0
    %2759 = vmatpush1.msra.mxu0 %v435
    %2760 = vmatprep.subr.mxu0 0.0
    %2761 = vmatpush1.msra.mxu0 0.0
    %2762 = vmatprep.subr.mxu0 0.0
    %2763 = vmatpush1.msra.mxu0 0.0
    %2764 = vmatprep.subr.mxu0 0.0
    %2765 = vmatpush1.msra.mxu0 0.0
    %2766 = vmatprep.subr.mxu0 0.0
    %2767 = vmatpush1.msra.mxu0 0.0
    %2768 = vmatprep.subr.mxu0 0.0
    %2769 = vmatpush1.msra.mxu0 0.0
    %2770 = vmatprep.subr.mxu0 0.0
    %2771 = vmatpush1.msra.mxu0 0.0
    %2772 = vmatprep.subr.mxu0 0.0
    %2773 = vmatpush1.msra.mxu0 0.0
    %2774 = vmatprep.subr.mxu0 0.0
    %2775 = vmatpush1.msra.mxu0 0.0
    %2776 = vmatprep.subr.mxu0 0.0
    %2777 = vmatpush1.msra.mxu0 0.0
    %2778 = vmatprep.subr.mxu0 0.0
    %2779 = vmatpush1.msra.mxu0 0.0
    %2780 = vmatprep.subr.mxu0 0.0
    %2781 = vmatpush1.msra.mxu0 0.0
    %2782 = vmatprep.subr.mxu0 0.0
    %2783 = vmatpush1.msra.mxu0 0.0
    %2784 = vmatprep.subr.mxu0 0.0
    %2785 = vmatpush1.msra.mxu0 0.0
    %2786 = vmatprep.subr.mxu0 0.0
    %2787 = vmatpush1.msra.mxu0 0.0
    %2788 = vmatprep.subr.mxu0 0.0
    %2789 = vmatpush1.msra.mxu0 0.0
    %2790 = vmatprep.subr.mxu0 0.0
    %2791 = vmatpush1.msra.mxu0 0.0
    %2792 = vmatprep.subr.mxu0 0.0
    %2793 = vmatpush1.msra.mxu0 0.0
    %2794 = vmatprep.subr.mxu0 0.0
    %2795 = vmatpush1.msra.mxu0 0.0
    %2796 = vmatprep.subr.mxu0 0.0
    %2797 = vmatpush1.msra.mxu0 0.0
    %2798 = vmatprep.subr.mxu0 0.0
    %2799 = vmatpush1.msra.mxu0 0.0
    %2800 = vmatprep.subr.mxu0 0.0
    %2801 = vmatpush1.msra.mxu0 0.0
    %2802 = vmatprep.subr.mxu0 0.0
    %2803 = vmatpush1.msra.mxu0 0.0
    %2804 = vmatprep.subr.mxu0 0.0
    %2805 = vmatpush1.msra.mxu0 0.0
    %2806 = vmatprep.subr.mxu0 0.0
    %2807 = vmatpush1.msra.mxu0 0.0
    %2808 = vmatprep.subr.mxu0 0.0
    %2809 = vmatpush1.msra.mxu0 0.0
    %2810 = vmatprep.subr.mxu0 0.0
    %2811 = vmatpush1.msra.mxu0 0.0
    %2812 = vmatprep.subr.mxu0 0.0
    %2813 = vmatpush1.msra.mxu0 0.0
    %2814 = vmatprep.subr.mxu0 0.0
    %2815 = vmatpush1.msra.mxu0 0.0
    %2816 = vmatprep.subr.mxu0 0.0
    %2817 = vmatpush1.msra.mxu0 0.0
    %2818 = vmatprep.subr.mxu0 0.0
    %2819 = vmatpush1.msra.mxu0 0.0
    %2820 = vmatprep.subr.mxu0 0.0
    %2821 = vmatpush1.msra.mxu0 0.0
    %2822 = vmatprep.mubr.f32.mxu0 0.0
    %2823 = vmatmul.mubr.f32.gmra.mrb[0].mxu0 %v2756
    %v2824 = vpop.f32.mrb[0].mxu0
    %v2825 = vadd.f32 0.0, %v2824
    %v2826 = vpop.f32.mrb[0].mxu0
    %2827 = vdwg.mxu0
    %v2829 = vsel %vm1629, %v1804, 0
    %2831 = vmatprep.subr.mxu0 0.0
    %2832 = vmatpush1.msra.mxu0 %v439
    %2833 = vmatprep.subr.mxu0 0.0
    %2834 = vmatpush1.msra.mxu0 0.0
    %2835 = vmatprep.subr.mxu0 0.0
    %2836 = vmatpush1.msra.mxu0 0.0
    %2837 = vmatprep.subr.mxu0 0.0
    %2838 = vmatpush1.msra.mxu0 0.0
    %2839 = vmatprep.subr.mxu0 0.0
    %2840 = vmatpush1.msra.mxu0 0.0
    %2841 = vmatprep.subr.mxu0 0.0
    %2842 = vmatpush1.msra.mxu0 0.0
    %2843 = vmatprep.subr.mxu0 0.0
    %2844 = vmatpush1.msra.mxu0 0.0
    %2845 = vmatprep.subr.mxu0 0.0
    %2846 = vmatpush1.msra.mxu0 0.0
    %2847 = vmatprep.subr.mxu0 0.0
    %2848 = vmatpush1.msra.mxu0 0.0
    %2849 = vmatprep.subr.mxu0 0.0
    %2850 = vmatpush1.msra.mxu0 0.0
    %2851 = vmatprep.subr.mxu0 0.0
    %2852 = vmatpush1.msra.mxu0 0.0
    %2853 = vmatprep.subr.mxu0 0.0
    %2854 = vmatpush1.msra.mxu0 0.0
    %2855 = vmatprep.subr.mxu0 0.0
    %2856 = vmatpush1.msra.mxu0 0.0
    %2857 = vmatprep.subr.mxu0 0.0
    %2858 = vmatpush1.msra.mxu0 0.0
    %2859 = vmatprep.subr.mxu0 0.0
    %2860 = vmatpush1.msra.mxu0 0.0
    %2861 = vmatprep.subr.mxu0 0.0
    %2862 = vmatpush1.msra.mxu0 0.0
    %2863 = vmatprep.subr.mxu0 0.0
    %2864 = vmatpush1.msra.mxu0 0.0
    %2865 = vmatprep.subr.mxu0 0.0
    %2866 = vmatpush1.msra.mxu0 0.0
    %2867 = vmatprep.subr.mxu0 0.0
    %2868 = vmatpush1.msra.mxu0 0.0
    %2869 = vmatprep.subr.mxu0 0.0
    %2870 = vmatpush1.msra.mxu0 0.0
    %2871 = vmatprep.subr.mxu0 0.0
    %2872 = vmatpush1.msra.mxu0 0.0
    %2873 = vmatprep.subr.mxu0 0.0
    %2874 = vmatpush1.msra.mxu0 0.0
    %2875 = vmatprep.subr.mxu0 0.0
    %2876 = vmatpush1.msra.mxu0 0.0
    %2877 = vmatprep.subr.mxu0 0.0
    %2878 = vmatpush1.msra.mxu0 0.0
    %2879 = vmatprep.subr.mxu0 0.0
    %2880 = vmatpush1.msra.mxu0 0.0
    %2881 = vmatprep.subr.mxu0 0.0
    %2882 = vmatpush1.msra.mxu0 0.0
    %2883 = vmatprep.subr.mxu0 0.0
    %2884 = vmatpush1.msra.mxu0 0.0
    %2885 = vmatprep.subr.mxu0 0.0
    %2886 = vmatpush1.msra.mxu0 0.0
    %2887 = vmatprep.subr.mxu0 0.0
    %2888 = vmatpush1.msra.mxu0 0.0
    %2889 = vmatprep.subr.mxu0 0.0
    %2890 = vmatpush1.msra.mxu0 0.0
    %2891 = vmatprep.subr.mxu0 0.0
    %2892 = vmatpush1.msra.mxu0 0.0
    %2893 = vmatprep.subr.mxu0 0.0
    %2894 = vmatpush1.msra.mxu0 0.0
    %2895 = vmatprep.mubr.f32.mxu0 0.0
    %2896 = vmatmul.mubr.f32.gmra.mrb[0].mxu0 %v2829
    %v2897 = vpop.f32.mrb[0].mxu0
    %v2898 = vadd.f32 0.0, %v2897
    %v2899 = vpop.f32.mrb[0].mxu0
    %2900 = vdwg.mxu0
    %v2902 = vsel %vm1629, %v1805, 0
    %2904 = vmatprep.subr.mxu0 0.0
    %2905 = vmatpush1.msra.mxu0 %v441
    %2906 = vmatprep.subr.mxu0 0.0
    %2907 = vmatpush1.msra.mxu0 0.0
    %2908 = vmatprep.subr.mxu0 0.0
    %2909 = vmatpush1.msra.mxu0 0.0
    %2910 = vmatprep.subr.mxu0 0.0
    %2911 = vmatpush1.msra.mxu0 0.0
    %2912 = vmatprep.subr.mxu0 0.0
    %2913 = vmatpush1.msra.mxu0 0.0
    %2914 = vmatprep.subr.mxu0 0.0
    %2915 = vmatpush1.msra.mxu0 0.0
    %2916 = vmatprep.subr.mxu0 0.0
    %2917 = vmatpush1.msra.mxu0 0.0
    %2918 = vmatprep.subr.mxu0 0.0
    %2919 = vmatpush1.msra.mxu0 0.0
    %2920 = vmatprep.subr.mxu0 0.0
    %2921 = vmatpush1.msra.mxu0 0.0
    %2922 = vmatprep.subr.mxu0 0.0
    %2923 = vmatpush1.msra.mxu0 0.0
    %2924 = vmatprep.subr.mxu0 0.0
    %2925 = vmatpush1.msra.mxu0 0.0
    %2926 = vmatprep.subr.mxu0 0.0
    %2927 = vmatpush1.msra.mxu0 0.0
    %2928 = vmatprep.subr.mxu0 0.0
    %2929 = vmatpush1.msra.mxu0 0.0
    %2930 = vmatprep.subr.mxu0 0.0
    %2931 = vmatpush1.msra.mxu0 0.0
    %2932 = vmatprep.subr.mxu0 0.0
    %2933 = vmatpush1.msra.mxu0 0.0
    %2934 = vmatprep.subr.mxu0 0.0
    %2935 = vmatpush1.msra.mxu0 0.0
    %2936 = vmatprep.subr.mxu0 0.0
    %2937 = vmatpush1.msra.mxu0 0.0
    %2938 = vmatprep.subr.mxu0 0.0
    %2939 = vmatpush1.msra.mxu0 0.0
    %2940 = vmatprep.subr.mxu0 0.0
    %2941 = vmatpush1.msra.mxu0 0.0
    %2942 = vmatprep.subr.mxu0 0.0
    %2943 = vmatpush1.msra.mxu0 0.0
    %2944 = vmatprep.subr.mxu0 0.0
    %2945 = vmatpush1.msra.mxu0 0.0
    %2946 = vmatprep.subr.mxu0 0.0
    %2947 = vmatpush1.msra.mxu0 0.0
    %2948 = vmatprep.subr.mxu0 0.0
    %2949 = vmatpush1.msra.mxu0 0.0
    %2950 = vmatprep.subr.mxu0 0.0
    %2951 = vmatpush1.msra.mxu0 0.0
    %2952 = vmatprep.subr.mxu0 0.0
    %2953 = vmatpush1.msra.mxu0 0.0
    %2954 = vmatprep.subr.mxu0 0.0
    %2955 = vmatpush1.msra.mxu0 0.0
    %2956 = vmatprep.subr.mxu0 0.0
    %2957 = vmatpush1.msra.mxu0 0.0
    %2958 = vmatprep.subr.mxu0 0.0
    %2959 = vmatpush1.msra.mxu0 0.0
    %2960 = vmatprep.subr.mxu0 0.0
    %2961 = vmatpush1.msra.mxu0 0.0
    %2962 = vmatprep.subr.mxu0 0.0
    %2963 = vmatpush1.msra.mxu0 0.0
    %2964 = vmatprep.subr.mxu0 0.0
    %2965 = vmatpush1.msra.mxu0 0.0
    %2966 = vmatprep.subr.mxu0 0.0
    %2967 = vmatpush1.msra.mxu0 0.0
    %2968 = vmatprep.mubr.f32.mxu0 0.0
    %2969 = vmatmul.mubr.f32.gmra.mrb[0].mxu0 %v2902
    %v2970 = vpop.f32.mrb[0].mxu0
    %v2971 = vadd.f32 0.0, %v2970
    %v2972 = vpop.f32.mrb[0].mxu0
    %2973 = vdwg.mxu0
    %2976 = vrot.lane.b32.xlu0 %v2022, 4
    %v2977 = vpop.permute.xlu0 %2976
    %2978 = vrot.lane.b32.xlu0 %v2095, 4
    %v2979 = vpop.permute.xlu0 %2978
    %2984 = vrot.lane.b32.xlu0 %v2168, 8
    %v2985 = vpop.permute.xlu0 %2984
    %2986 = vrot.lane.b32.xlu0 %v2241, 8
    %v2987 = vpop.permute.xlu0 %2986
    %2992 = vrot.lane.b32.xlu0 %v2314, 12
    %v2993 = vpop.permute.xlu0 %2992
    %2994 = vrot.lane.b32.xlu0 %v2387, 12
    %v2995 = vpop.permute.xlu0 %2994
    %3000 = vrot.lane.b32.xlu0 %v2460, 16
    %v3001 = vpop.permute.xlu0 %3000
    %3002 = vrot.lane.b32.xlu0 %v2533, 16
    %v3003 = vpop.permute.xlu0 %3002
    %3008 = vrot.lane.b32.xlu0 %v2606, 20
    %v3009 = vpop.permute.xlu0 %3008
    %3010 = vrot.lane.b32.xlu0 %v2679, 20
    %v3011 = vpop.permute.xlu0 %3010
    %3016 = vrot.lane.b32.xlu0 %v2752, 24
    %v3017 = vpop.permute.xlu0 %3016
    %3018 = vrot.lane.b32.xlu0 %v2825, 24
    %v3019 = vpop.permute.xlu0 %3018
    %3024 = vrot.lane.b32.xlu0 %v2898, 28
    %v3025 = vpop.permute.xlu0 %3024
    %3026 = vrot.lane.b32.xlu0 %v2971, 28
    %v3027 = vpop.permute.xlu0 %3026
    %v3030 = vsel %vm444, %v1876, %v2977
    %v3031 = vsel %vm444, %v1949, %v2979
    %v3032 = vsel %vm1629, %v3030, %v2985
    %v3033 = vsel %vm1629, %v3031, %v2987
    %vm3034 = vcmask 97280
    %v3035 = vsel %vm3034, %v3032, %v2993
    %v3036 = vsel %vm3034, %v3033, %v2995
    %vm3037 = vcmask 130048
    %v3038 = vsel %vm3037, %v3035, %v3001
    %v3039 = vsel %vm3037, %v3036, %v3003
    %vm3040 = vcmask 162816
    %v3041 = vsel %vm3040, %v3038, %v3009
    %v3042 = vsel %vm3040, %v3039, %v3011
    %vm3043 = vcmask 195584
    %v3044 = vsel %vm3043, %v3041, %v3017
    %v3045 = vsel %vm3043, %v3042, %v3019
    %vm3046 = vcmask 228352
    %v3047 = vsel %vm3046, %v3044, %v3025
    %v3048 = vsel %vm3046, %v3045, %v3027
    %v3049 = vld [vmem:[#allocation10] sm:$0xff]
    %v3050 = vld [vmem:[#allocation10 + $0x8] sm:$0xff]
    %v3051 = vld [vmem:[#allocation10 + $0x10] sm:$0xff]
    %v3052 = vld [vmem:[#allocation10 + $0x18] sm:$0xff]
    %v3053 = vld [vmem:[%s5] sm:$0x1]
    %v3055 = vlaneseq
    %v3056 = vshrl.u32 %v3055, 7
    %v3057 = vsub.s32 0, %v3056
    %v3058 = vrot.slane %v3053, %v3057
    %v3061 = vsel %vm98, %v3047, 0
    %v3064 = vsel %vm98, %v3048, 0
    %3066 = vmatprep.subr.mxu0 0.0
    %3067 = vmatpush1.msra.mxu0 %v3049
    %3068 = vmatprep.subr.mxu0 0.0
    %3069 = vmatpush1.msra.mxu0 %v3050
    %3070 = vmatprep.subr.mxu0 0.0
    %3071 = vmatpush1.msra.mxu0 %v3051
    %3072 = vmatprep.subr.mxu0 0.0
    %3073 = vmatpush1.msra.mxu0 %v3052
    %3074 = vmatprep.subr.mxu0 0.0
    %3075 = vmatpush1.msra.mxu0 0.0
    %3076 = vmatprep.subr.mxu0 0.0
    %3077 = vmatpush1.msra.mxu0 0.0
    %3078 = vmatprep.subr.mxu0 0.0
    %3079 = vmatpush1.msra.mxu0 0.0
    %3080 = vmatprep.subr.mxu0 0.0
    %3081 = vmatpush1.msra.mxu0 0.0
    %3082 = vmatprep.subr.mxu0 0.0
    %3083 = vmatpush1.msra.mxu0 0.0
    %3084 = vmatprep.subr.mxu0 0.0
    %3085 = vmatpush1.msra.mxu0 0.0
    %3086 = vmatprep.subr.mxu0 0.0
    %3087 = vmatpush1.msra.mxu0 0.0
    %3088 = vmatprep.subr.mxu0 0.0
    %3089 = vmatpush1.msra.mxu0 0.0
    %3090 = vmatprep.subr.mxu0 0.0
    %3091 = vmatpush1.msra.mxu0 0.0
    %3092 = vmatprep.subr.mxu0 0.0
    %3093 = vmatpush1.msra.mxu0 0.0
    %3094 = vmatprep.subr.mxu0 0.0
    %3095 = vmatpush1.msra.mxu0 0.0
    %3096 = vmatprep.subr.mxu0 0.0
    %3097 = vmatpush1.msra.mxu0 0.0
    %3098 = vmatprep.subr.mxu0 0.0
    %3099 = vmatpush1.msra.mxu0 0.0
    %3100 = vmatprep.subr.mxu0 0.0
    %3101 = vmatpush1.msra.mxu0 0.0
    %3102 = vmatprep.subr.mxu0 0.0
    %3103 = vmatpush1.msra.mxu0 0.0
    %3104 = vmatprep.subr.mxu0 0.0
    %3105 = vmatpush1.msra.mxu0 0.0
    %3106 = vmatprep.subr.mxu0 0.0
    %3107 = vmatpush1.msra.mxu0 0.0
    %3108 = vmatprep.subr.mxu0 0.0
    %3109 = vmatpush1.msra.mxu0 0.0
    %3110 = vmatprep.subr.mxu0 0.0
    %3111 = vmatpush1.msra.mxu0 0.0
    %3112 = vmatprep.subr.mxu0 0.0
    %3113 = vmatpush1.msra.mxu0 0.0
    %3114 = vmatprep.subr.mxu0 0.0
    %3115 = vmatpush1.msra.mxu0 0.0
    %3116 = vmatprep.subr.mxu0 0.0
    %3117 = vmatpush1.msra.mxu0 0.0
    %3118 = vmatprep.subr.mxu0 0.0
    %3119 = vmatpush1.msra.mxu0 0.0
    %3120 = vmatprep.subr.mxu0 0.0
    %3121 = vmatpush1.msra.mxu0 0.0
    %3122 = vmatprep.subr.mxu0 0.0
    %3123 = vmatpush1.msra.mxu0 0.0
    %3124 = vmatprep.subr.mxu0 0.0
    %3125 = vmatpush1.msra.mxu0 0.0
    %3126 = vmatprep.subr.mxu0 0.0
    %3127 = vmatpush1.msra.mxu0 0.0
    %3128 = vmatprep.subr.mxu0 0.0
    %3129 = vmatpush1.msra.mxu0 0.0
    %3130 = vmatprep.mubr.f32.mxu0 0.0
    %3131 = vmatmul.mubr.f32.gmra.mrb[0].mxu0 %v3061
    %v3132 = vpop.f32.mrb[0].mxu0
    %v3133 = vadd.f32 %v3058, %v3132
    %v3134 = vpop.f32.mrb[0].mxu0
    %3135 = vmatprep.mubr.f32.mxu0 0.0
    %3136 = vmatmul.mubr.f32.gmra.mrb[0].mxu0 %v3064
    %v3137 = vpop.f32.mrb[0].mxu0
    %v3138 = vadd.f32 %v3058, %v3137
    %v3139 = vpop.f32.mrb[0].mxu0
    %3140 = vdwg.mxu0
    %3141 = vst.msk [vmem:[#allocation11] sm:$0xff] %vm98, %v3133
    %3142 = vst.msk [vmem:[#allocation11 + $0x8] sm:$0xff] %vm98, %v3138
    // Predicated region
    $region46: #{tpu_custom_call.1} parent=1 // pred_check
      _
    $region47: #{tpu_custom_call.1} parent=1 // pred_check_branch
      %3144 = sbr.rel (0) target = $region49
    $region48: #{tpu_custom_call.1} parent=1 // pred_region
      %s3146 = ssub.s32 256, 256
      %3147 = vsyncadd [#allocation4], %s3146
      %s3148 = sshll.u32 [#allocation11], 4
      %s3149 = int_to_ptr.vmem [resolvable:$true] %s3148
      %3154 = dma.vmem_to_hbm [thread:$0]  %s3149, 256, %s6, [#allocation4], 128, 128, 8
    $region49: #{tpu_custom_call.1} parent=1 // pred_fallthru
      _
    // Predicated region
    $region50: #{tpu_custom_call.1} parent=1 // pred_check
      _
    $region51: #{tpu_custom_call.1} parent=1 // pred_check_branch
      %3156 = sbr.rel (0) target = $region53
    $region52: #{tpu_custom_call.1} parent=1 // pred_region
      %3157 = dma.done [#allocation4], 256
    $region53: #{tpu_custom_call.1} parent=1 // pred_fallthru
      _
    %3158 = vsyncpa [#allocation3], 1
    %3159 = vsyncpa [#allocation6], 1
    %3160 = vsyncpa [#allocation9], 1
    %3161 = vsyncpa [#allocation4], 1

</llo_original>
